<compile_context>
chip_gen: v6e
topology: v6e:2x2x1
jax: 0.10.0
libtpu: 0.0.40
codegen_flags: <defaults>
</compile_context>

<pallas_src>
import jax
import jax.numpy as jnp
from jax import lax
from jax.experimental import pallas as pl
from jax.experimental.pallas import tpu as pltpu

# Small, module-consistent sizes: batch=2, C=3 (RGB weights in cal_l1), 16x16.
B, C, H, W = 2, 3, 16, 16
HW = H * W
NDIR = 4                                  # views_x, views_y, views_45, views_135
NON_CENTER = (0, 1, 2, 3, 5, 6, 7, 8)     # view 4 (light-field idx 40) = identity
NV = len(NON_CENTER)                      # 8

IDX = [[36 + j for j in range(9)],
       [4 + 9 * j for j in range(9)],
       [10 * j for j in range(9)],
       [8 * (j + 1) for j in range(9)]]

# Lossv9 masks (spatially constant 0/1 per view), order = mask_1 .. mask_9.
MASK_W = [
    [1, 1, 1, 1, 1, 1, 1, 1, 1],
    [0, 1, 1, 1, 1, 1, 1, 1, 1],
    [0, 0, 1, 1, 1, 1, 1, 1, 1],
    [0, 0, 0, 1, 1, 1, 1, 1, 1],
    [0, 0, 0, 0, 1, 1, 1, 1, 1],
    [1, 1, 1, 1, 1, 1, 1, 1, 0],
    [1, 1, 1, 1, 1, 1, 1, 0, 0],
    [1, 1, 1, 1, 1, 1, 0, 0, 0],
    [1, 1, 1, 1, 1, 0, 0, 0, 0],
]


def _loss_kernel(shifts_ref, disp_ref, views_ref, centers_ref, o_ref):
    # shifts_ref:  SMEM (NDIR*NV*2,) int32   -- (u-4, v-4) per direction/view
    # disp_ref:    VMEM (1, 1, HW) f32       -- disparity of batch b
    # views_ref:   VMEM (1, 1, C*H, NV*W) f32 -- 8 non-center views, lane-packed
    # centers_ref: VMEM (1, 1, C, HW) f32    -- identity-warp (center) view
    # o_ref:       VMEM (1, 1, 1, 1) f32     -- sum(final) / (B*HW) for (d, b)
    d = pl.program_id(0)

    disp = disp_ref[0]                        # (1, HW)
    img_all = views_ref[0, 0]                 # (C*H, NV*W) = (48, 128), lane dense
    center = centers_ref[0, 0]                # (C, HW)
    c0 = center[0:1, :]
    c1 = center[1:2, :]
    c2 = center[2:3, :]

    # Output-pixel (row, col) per flattened position p (exact for HW = 256).
    p_iota = lax.broadcasted_iota(jnp.int32, (1, HW), 1).astype(jnp.float32)
    iif = jnp.floor((p_iota + 0.5) / W)       # output row index
    jjf = p_iota - iif * W                    # output col index
    # Input row / col coordinates for the separable bilinear weights.
    rowf = lax.broadcasted_iota(jnp.int32, (H, HW), 0).astype(jnp.float32)
    colf = lax.broadcasted_iota(jnp.int32, (W, HW), 0).astype(jnp.float32)

    grays = []                                # 8 x (1, HW) gray L1 maps
    for kk in range(NV):
        base = (d * NV + kk) * 2
        du = shifts_ref[base].astype(jnp.float32)        # u - 4
        dv = shifts_ref[base + 1].astype(jnp.float32)    # v - 4

        # Clipped sample coordinates (torch clips the grid before sampling,
        # align_corners=True, so samples are always in range).
        x = jnp.clip(jjf - disp * dv, 0.0, W - 1.0)      # (1, HW)
        y = jnp.clip(iif - disp * du, 0.0, H - 1.0)

        # Separable bilinear weights via the tent identity relu(1 - |x - c|):
        # identical to the (1-frac)/frac one-hot pair, no floor / int casts.
        wx_mat = jnp.maximum(1.0 - jnp.abs(x - colf), 0.0)   # (W, HW)
        wy_mat = jnp.maximum(1.0 - jnp.abs(y - rowf), 0.0)   # (H, HW)

        # Column interpolation on the MXU: (C*H, W) @ (W, HW) -> (C*H, HW).
        img = img_all[:, kk * W:(kk + 1) * W]                # (C*H, W)
        tmp = jnp.dot(img, wx_mat, preferred_element_type=jnp.float32)

        # Row interpolation: multiply by Wy and reduce over the H sublanes.
        w0 = jnp.sum(tmp[0 * H:1 * H, :] * wy_mat, axis=0, keepdims=True)
        w1 = jnp.sum(tmp[1 * H:2 * H, :] * wy_mat, axis=0, keepdims=True)
        w2 = jnp.sum(tmp[2 * H:3 * H, :] * wy_mat, axis=0, keepdims=True)

        # Grayscale L1 map vs. the (identity-warped) center view.
        grays.append(0.299 * jnp.abs(w0 - c0)
                     + 0.587 * jnp.abs(w1 - c1)
                     + 0.114 * jnp.abs(w2 - c2))             # (1, HW)

    # Mask means via shared prefix/suffix partial sums.
    # grays[0..3] <-> light-field views k=0..3, grays[4..7] <-> k=5..8;
    # k=4 (center) contributes exactly 0 to every mask.
    g = grays
    s5 = g[4] + g[5] + g[6] + g[7]            # sum over k = 5..8
    s4 = s5                                   # + k=4 (== 0)
    s3 = s4 + g[3]
    s2 = s3 + g[2]
    s1 = s2 + g[1]
    s0 = s1 + g[0]
    p0 = g[0]
    p1 = p0 + g[1]
    p2 = p1 + g[2]
    p3 = p2 + g[3]
    p4 = p3                                   # + k=4 (== 0)
    p5 = p4 + g[4]
    p6 = p5 + g[5]
    p7 = p6 + g[6]

    dists = [s0 * (1.0 / 9.0),   # mask_1: views 0..8
             s1 * (1.0 / 8.0),   # mask_2: views 1..8
             s2 * (1.0 / 7.0),   # mask_3: views 2..8
             s3 * (1.0 / 6.0),   # mask_4: views 3..8
             s4 * (1.0 / 5.0),   # mask_5: views 4..8
             p7 * (1.0 / 8.0),   # mask_6: views 0..7
             p6 * (1.0 / 7.0),   # mask_7: views 0..6
             p5 * (1.0 / 6.0),   # mask_8: views 0..5
             p4 * (1.0 / 5.0)]   # mask_9: views 0..4

    diff = jnp.where(jnp.abs(dists[8] - dists[4]) < 0.01, 1.0, 0.0)
    dmin = dists[0]
    for m in range(1, 9):
        dmin = jnp.minimum(dmin, dists[m])
    final = dmin * (1.0 - diff) + dists[0] * diff            # (1, HW)

    o_ref[...] = jnp.full((1, 1, 1, 1),
                          jnp.sum(final) * (1.0 / (B * HW)), jnp.float32)


def _pack_direction(v):
    """(9, B, C, H, W) -> lane-dense (B, C*H, NV*W) of the 8 non-center views."""
    v = v.astype(jnp.float32)
    nc = jnp.concatenate([v[:4], v[5:]], axis=0)        # (8, B, C, H, W)
    nc = jnp.moveaxis(nc, 0, 3)                          # (B, C, H, 8, W)
    return nc.reshape(B, C * H, NV * W)                  # (B, 48, 128)


@jax.jit
def lossv9_pallas(pred_disp, views_x, views_y, views_45, views_135):
    """pred_disp: (B,1,H,W); each views_*: (9,B,C,H,W). Returns scalar loss."""
    # TODO(synk): the `isinstance(pred_disp, list)` branch of Lossv9.forward
    # (cal_l1 on an already-warped view list, no warping) is not implemented;
    # only the tensor-disparity path is.  pad == 0 is assumed (the torch
    # module's mask shapes imply it).
    views_list = (views_x, views_y, views_45, views_135)

    disp = pred_disp.reshape(B, 1, HW).astype(jnp.float32)
    packed = jnp.stack([_pack_direction(v) for v in views_list], 0)   # (4,B,48,128)
    centers = jnp.stack([v[4].astype(jnp.float32).reshape(B, C, HW)
                         for v in views_list], 0)                     # (4,B,3,256)

    shift_list = []
    for dd in range(NDIR):
        for k in NON_CENTER:
            u, v = divmod(IDX[dd][k], 9)
            shift_list += [u - 4, v - 4]
    shifts = jnp.array(shift_list, dtype=jnp.int32)                   # (64,) -> SMEM

    per_db = pl.pallas_call(
        _loss_kernel,
        out_shape=jax.ShapeDtypeStruct((NDIR, B, 1, 1), jnp.float32),
        grid_spec=pltpu.PrefetchScalarGridSpec(
            num_scalar_prefetch=1,
            grid=(NDIR, B),
            in_specs=[
                pl.BlockSpec((1, 1, HW), lambda d, b, s: (b, 0, 0)),
                pl.BlockSpec((1, 1, C * H, NV * W), lambda d, b, s: (d, b, 0, 0)),
                pl.BlockSpec((1, 1, C, HW), lambda d, b, s: (d, b, 0, 0)),
            ],
            out_specs=pl.BlockSpec((1, 1, 1, 1), lambda d, b, s: (d, b, 0, 0)),
        ),
        compiler_params=pltpu.CompilerParams(
            dimension_semantics=("parallel", "parallel")),
    )(shifts, disp, packed, centers)

    # total_loss = sum over the 4 directions of the per-direction means.
    return jnp.sum(per_db)


def _reference_loss(pred_disp, views_all):
    """Pure-JAX reference replicating the torch Lossv9 forward exactly."""
    disp = pred_disp[:, 0].astype(jnp.float32)              # (B, H, W)
    ii, jj = jnp.meshgrid(jnp.arange(H, dtype=jnp.float32),
                          jnp.arange(W, dtype=jnp.float32), indexing="ij")
    total = jnp.float32(0.0)
    for d in range(NDIR):
        warped = []
        for k in range(9):
            u, v = divmod(IDX[d][k], 9)
            x = jnp.clip(jj[None] - disp * (v - 4), 0.0, W - 1.0)
            y = jnp.clip(ii[None] - disp * (u - 4), 0.0, H - 1.0)
            x0 = jnp.floor(x); y0 = jnp.floor(y)
            wx1 = x - x0; wy1 = y - y0
            x0i = x0.astype(jnp.int32); y0i = y0.astype(jnp.int32)
            x1i = jnp.minimum(x0i + 1, W - 1)
            y1i = jnp.minimum(y0i + 1, H - 1)
            img = views_all[d, k].astype(jnp.float32)       # (B, C, H, W)
            flat = img.reshape(B, C, HW)

            def gather(yi, xi, flat=flat):
                idx = (yi * W + xi).reshape(B, 1, HW)
                idx = jnp.broadcast_to(idx, (B, C, HW))
                return jnp.take_along_axis(flat, idx, axis=2).reshape(B, C, H, W)

            wk = (gather(y0i, x0i) * ((1 - wy1) * (1 - wx1))[:, None]
                  + gather(y0i, x1i) * ((1 - wy1) * wx1)[:, None]
                  + gather(y1i, x0i) * (wy1 * (1 - wx1))[:, None]
                  + gather(y1i, x1i) * (wy1 * wx1)[:, None])
            warped.append(wk)
        center = warped[4]
        grays = []
        for k in range(9):
            ad = jnp.abs(warped[k] - center)
            grays.append(0.299 * ad[:, 0] + 0.587 * ad[:, 1] + 0.114 * ad[:, 2])
        dists = []
        for wts in MASK_W:
            acc = None
            for k in range(9):
                if wts[k]:
                    acc = grays[k] if acc is None else acc + grays[k]
            dists.append(acc / float(sum(wts)))
        diff = jnp.where(jnp.abs(dists[8] - dists[4]) < 0.01, 1.0, 0.0)
        dmin = dists[0]
        for m in range(1, 9):
            dmin = jnp.minimum(dmin, dists[m])
        final = dmin * (1.0 - diff) + dists[0] * diff
        total = total + jnp.mean(final)
    return total


if __name__ == "__main__":
    key = jax.random.PRNGKey(0)
    k_disp, k_views = jax.random.split(key)
    pred_disp = jax.random.uniform(k_disp, (B, 1, H, W), jnp.float32,
                                   minval=-2.0, maxval=2.0)
    vkeys = jax.random.split(k_views, NDIR)
    views_lists = [jax.random.uniform(vkeys[i], (9, B, C, H, W), jnp.float32)
                   for i in range(NDIR)]

    loss = lossv9_pallas(pred_disp, *views_lists)
    loss = jax.block_until_ready(loss)

    ref = _reference_loss(pred_disp, jnp.stack(views_lists, 0))
    # Tolerance allows for single-pass bf16 rounding of the MXU operands at
    # DEFAULT matmul precision (per-sample error up to ~4e-3, which mostly
    # averages out in the mean but can flip a few |d9-d5|<0.01 thresholds).
    assert jnp.allclose(loss, ref, atol=3e-3, rtol=1e-3), (float(loss), float(ref))
    print("KERNEL_OK")
</pallas_src>

<mosaic_0001>
module attributes {stable_mosaic.version = 11 : i64} {
  func.func @_loss_kernel(%arg0: i32, %arg1: i32, %arg2: memref<64xi32, #tpu.memory_space<smem>>, %arg3: memref<1x1x256xf32, #tpu.memory_space<vmem>>, %arg4: memref<1x1x48x128xf32, #tpu.memory_space<vmem>>, %arg5: memref<1x1x3x256xf32, #tpu.memory_space<vmem>>, %arg6: memref<1x1x1x1xf32, #tpu.memory_space<vmem>>) attributes {dimension_semantics = [#tpu.dimension_semantics<parallel>, #tpu.dimension_semantics<parallel>], iteration_bounds = array<i64: 4, 2>, scalar_prefetch = 1 : i64, scratch_operands = 0 : i64, tpu.core_type = #tpu.core_type<tc>, window_params = [{transform_indices = @transform_0, window_bounds = array<i64: 1, 1, 256>}, {transform_indices = @transform_1, window_bounds = array<i64: 1, 1, 48, 128>}, {transform_indices = @transform_2, window_bounds = array<i64: 1, 1, 3, 256>}, {transform_indices = @transform_3, window_bounds = array<i64: 1, 1, 1, 1>}]} {
    %c0 = arith.constant 0 : index
    %c0_0 = arith.constant 0 : index
    %c0_1 = arith.constant 0 : index
    %0 = vector.load %arg3[%c0, %c0_0, %c0_1] : memref<1x1x256xf32, #tpu.memory_space<vmem>>, vector<1x1x256xf32>
    %1 = vector.shape_cast %0 : vector<1x1x256xf32> to vector<1x256xf32>
    %c0_2 = arith.constant 0 : index
    %c0_3 = arith.constant 0 : index
    %c0_4 = arith.constant 0 : index
    %c0_5 = arith.constant 0 : index
    %2 = vector.load %arg4[%c0_2, %c0_3, %c0_4, %c0_5] : memref<1x1x48x128xf32, #tpu.memory_space<vmem>>, vector<1x1x48x128xf32>
    %3 = vector.shape_cast %2 : vector<1x1x48x128xf32> to vector<48x128xf32>
    %c0_6 = arith.constant 0 : index
    %c0_7 = arith.constant 0 : index
    %c0_8 = arith.constant 0 : index
    %c0_9 = arith.constant 0 : index
    %4 = vector.load %arg5[%c0_6, %c0_7, %c0_8, %c0_9] : memref<1x1x3x256xf32, #tpu.memory_space<vmem>>, vector<1x1x3x256xf32>
    %5 = vector.shape_cast %4 : vector<1x1x3x256xf32> to vector<3x256xf32>
    %6 = vector.extract_strided_slice %5 {offsets = [0, 0], sizes = [1, 256], strides = [1, 1]} : vector<3x256xf32> to vector<1x256xf32>
    %7 = vector.extract_strided_slice %5 {offsets = [1, 0], sizes = [1, 256], strides = [1, 1]} : vector<3x256xf32> to vector<1x256xf32>
    %8 = vector.extract_strided_slice %5 {offsets = [2, 0], sizes = [1, 256], strides = [1, 1]} : vector<3x256xf32> to vector<1x256xf32>
    %9 = tpu.iota {dimensions = array<i32: 1>} : vector<1x256xi32>
    %10 = arith.sitofp %9 : vector<1x256xi32> to vector<1x256xf32>
    %cst = arith.constant 5.000000e-01 : f32
    %11 = vector.broadcast %cst : f32 to vector<1x256xf32>
    %12 = arith.addf %10, %11 : vector<1x256xf32>
    %cst_10 = arith.constant 1.600000e+01 : f32
    %13 = vector.broadcast %cst_10 : f32 to vector<1x256xf32>
    %14 = arith.divf %12, %13 : vector<1x256xf32>
    %15 = math.floor %14 : vector<1x256xf32>
    %cst_11 = arith.constant 1.600000e+01 : f32
    %16 = vector.broadcast %cst_11 : f32 to vector<1x256xf32>
    %17 = arith.mulf %15, %16 : vector<1x256xf32>
    %18 = arith.subf %10, %17 : vector<1x256xf32>
    %19 = tpu.iota {dimensions = array<i32: 0>} : vector<16x256xi32>
    %20 = arith.sitofp %19 : vector<16x256xi32> to vector<16x256xf32>
    %21 = tpu.iota {dimensions = array<i32: 0>} : vector<16x256xi32>
    %22 = arith.sitofp %21 : vector<16x256xi32> to vector<16x256xf32>
    %c8_i32 = arith.constant 8 : i32
    %23 = arith.muli %arg0, %c8_i32 : i32
    %c0_i32 = arith.constant 0 : i32
    %24 = arith.addi %23, %c0_i32 : i32
    %c2_i32 = arith.constant 2 : i32
    %25 = arith.muli %24, %c2_i32 : i32
    %26 = arith.index_cast %25 : i32 to index
    %27 = memref.load %arg2[%26] : memref<64xi32, #tpu.memory_space<smem>>
    %28 = arith.sitofp %27 : i32 to f32
    %c1_i32 = arith.constant 1 : i32
    %29 = arith.addi %25, %c1_i32 : i32
    %30 = arith.index_cast %29 : i32 to index
    %31 = memref.load %arg2[%30] : memref<64xi32, #tpu.memory_space<smem>>
    %32 = arith.sitofp %31 : i32 to f32
    %33 = vector.broadcast %32 : f32 to vector<1x256xf32>
    %34 = arith.mulf %1, %33 : vector<1x256xf32>
    %35 = arith.subf %18, %34 : vector<1x256xf32>
    %cst_12 = arith.constant 0.000000e+00 : f32
    %cst_13 = arith.constant 1.500000e+01 : f32
    %36 = vector.broadcast %cst_12 : f32 to vector<1x256xf32>
    %37 = arith.maximumf %36, %35 : vector<1x256xf32>
    %38 = vector.broadcast %cst_13 : f32 to vector<1x256xf32>
    %39 = arith.minimumf %38, %37 : vector<1x256xf32>
    %40 = vector.broadcast %28 : f32 to vector<1x256xf32>
    %41 = arith.mulf %1, %40 : vector<1x256xf32>
    %42 = arith.subf %15, %41 : vector<1x256xf32>
    %cst_14 = arith.constant 0.000000e+00 : f32
    %cst_15 = arith.constant 1.500000e+01 : f32
    %43 = vector.broadcast %cst_14 : f32 to vector<1x256xf32>
    %44 = arith.maximumf %43, %42 : vector<1x256xf32>
    %45 = vector.broadcast %cst_15 : f32 to vector<1x256xf32>
    %46 = arith.minimumf %45, %44 : vector<1x256xf32>
    %47 = vector.broadcast %39 : vector<1x256xf32> to vector<16x256xf32>
    %48 = arith.subf %47, %22 : vector<16x256xf32>
    %49 = math.absf %48 : vector<16x256xf32>
    %cst_16 = arith.constant 1.000000e+00 : f32
    %50 = vector.broadcast %cst_16 : f32 to vector<16x256xf32>
    %51 = arith.subf %50, %49 : vector<16x256xf32>
    %cst_17 = arith.constant 0.000000e+00 : f32
    %52 = vector.broadcast %cst_17 : f32 to vector<16x256xf32>
    %53 = arith.maximumf %51, %52 : vector<16x256xf32>
    %54 = vector.broadcast %46 : vector<1x256xf32> to vector<16x256xf32>
    %55 = arith.subf %54, %20 : vector<16x256xf32>
    %56 = math.absf %55 : vector<16x256xf32>
    %cst_18 = arith.constant 1.000000e+00 : f32
    %57 = vector.broadcast %cst_18 : f32 to vector<16x256xf32>
    %58 = arith.subf %57, %56 : vector<16x256xf32>
    %cst_19 = arith.constant 0.000000e+00 : f32
    %59 = vector.broadcast %cst_19 : f32 to vector<16x256xf32>
    %60 = arith.maximumf %58, %59 : vector<16x256xf32>
    %61 = vector.extract_strided_slice %3 {offsets = [0, 0], sizes = [48, 16], strides = [1, 1]} : vector<48x128xf32> to vector<48x16xf32>
    %cst_20 = arith.constant dense<0.000000e+00> : vector<48x256xf32>
    %62 = tpu.matmul %61, %53, %cst_20 {dimension_numbers = #tpu.dot_dimension_numbers<[1], [0], [0], [1], [0, 0, 1, 1], [], []>} : vector<48x16xf32>, vector<16x256xf32>, vector<48x256xf32> -> vector<48x256xf32>
    %63 = vector.extract_strided_slice %62 {offsets = [0, 0], sizes = [16, 256], strides = [1, 1]} : vector<48x256xf32> to vector<16x256xf32>
    %64 = arith.mulf %63, %60 : vector<16x256xf32>
    %cst_21 = arith.constant dense<0.000000e+00> : vector<256xf32>
    %65 = vector.multi_reduction <add>, %64, %cst_21 [0] : vector<16x256xf32> to vector<256xf32>
    %66 = vector.shape_cast %65 : vector<256xf32> to vector<1x256xf32>
    %67 = vector.extract_strided_slice %62 {offsets = [16, 0], sizes = [16, 256], strides = [1, 1]} : vector<48x256xf32> to vector<16x256xf32>
    %68 = arith.mulf %67, %60 : vector<16x256xf32>
    %cst_22 = arith.constant dense<0.000000e+00> : vector<256xf32>
    %69 = vector.multi_reduction <add>, %68, %cst_22 [0] : vector<16x256xf32> to vector<256xf32>
    %70 = vector.shape_cast %69 : vector<256xf32> to vector<1x256xf32>
    %71 = vector.extract_strided_slice %62 {offsets = [32, 0], sizes = [16, 256], strides = [1, 1]} : vector<48x256xf32> to vector<16x256xf32>
    %72 = arith.mulf %71, %60 : vector<16x256xf32>
    %cst_23 = arith.constant dense<0.000000e+00> : vector<256xf32>
    %73 = vector.multi_reduction <add>, %72, %cst_23 [0] : vector<16x256xf32> to vector<256xf32>
    %74 = vector.shape_cast %73 : vector<256xf32> to vector<1x256xf32>
    %75 = arith.subf %66, %6 : vector<1x256xf32>
    %76 = math.absf %75 : vector<1x256xf32>
    %cst_24 = arith.constant 2.990000e-01 : f32
    %77 = vector.broadcast %cst_24 : f32 to vector<1x256xf32>
    %78 = arith.mulf %77, %76 : vector<1x256xf32>
    %79 = arith.subf %70, %7 : vector<1x256xf32>
    %80 = math.absf %79 : vector<1x256xf32>
    %cst_25 = arith.constant 5.870000e-01 : f32
    %81 = vector.broadcast %cst_25 : f32 to vector<1x256xf32>
    %82 = arith.mulf %81, %80 : vector<1x256xf32>
    %83 = arith.addf %78, %82 : vector<1x256xf32>
    %84 = arith.subf %74, %8 : vector<1x256xf32>
    %85 = math.absf %84 : vector<1x256xf32>
    %cst_26 = arith.constant 1.140000e-01 : f32
    %86 = vector.broadcast %cst_26 : f32 to vector<1x256xf32>
    %87 = arith.mulf %86, %85 : vector<1x256xf32>
    %88 = arith.addf %83, %87 : vector<1x256xf32>
    %c8_i32_27 = arith.constant 8 : i32
    %89 = arith.muli %arg0, %c8_i32_27 : i32
    %c1_i32_28 = arith.constant 1 : i32
    %90 = arith.addi %89, %c1_i32_28 : i32
    %c2_i32_29 = arith.constant 2 : i32
    %91 = arith.muli %90, %c2_i32_29 : i32
    %92 = arith.index_cast %91 : i32 to index
    %93 = memref.load %arg2[%92] : memref<64xi32, #tpu.memory_space<smem>>
    %94 = arith.sitofp %93 : i32 to f32
    %c1_i32_30 = arith.constant 1 : i32
    %95 = arith.addi %91, %c1_i32_30 : i32
    %96 = arith.index_cast %95 : i32 to index
    %97 = memref.load %arg2[%96] : memref<64xi32, #tpu.memory_space<smem>>
    %98 = arith.sitofp %97 : i32 to f32
    %99 = vector.broadcast %98 : f32 to vector<1x256xf32>
    %100 = arith.mulf %1, %99 : vector<1x256xf32>
    %101 = arith.subf %18, %100 : vector<1x256xf32>
    %cst_31 = arith.constant 0.000000e+00 : f32
    %cst_32 = arith.constant 1.500000e+01 : f32
    %102 = vector.broadcast %cst_31 : f32 to vector<1x256xf32>
    %103 = arith.maximumf %102, %101 : vector<1x256xf32>
    %104 = vector.broadcast %cst_32 : f32 to vector<1x256xf32>
    %105 = arith.minimumf %104, %103 : vector<1x256xf32>
    %106 = vector.broadcast %94 : f32 to vector<1x256xf32>
    %107 = arith.mulf %1, %106 : vector<1x256xf32>
    %108 = arith.subf %15, %107 : vector<1x256xf32>
    %cst_33 = arith.constant 0.000000e+00 : f32
    %cst_34 = arith.constant 1.500000e+01 : f32
    %109 = vector.broadcast %cst_33 : f32 to vector<1x256xf32>
    %110 = arith.maximumf %109, %108 : vector<1x256xf32>
    %111 = vector.broadcast %cst_34 : f32 to vector<1x256xf32>
    %112 = arith.minimumf %111, %110 : vector<1x256xf32>
    %113 = vector.broadcast %105 : vector<1x256xf32> to vector<16x256xf32>
    %114 = arith.subf %113, %22 : vector<16x256xf32>
    %115 = math.absf %114 : vector<16x256xf32>
    %cst_35 = arith.constant 1.000000e+00 : f32
    %116 = vector.broadcast %cst_35 : f32 to vector<16x256xf32>
    %117 = arith.subf %116, %115 : vector<16x256xf32>
    %cst_36 = arith.constant 0.000000e+00 : f32
    %118 = vector.broadcast %cst_36 : f32 to vector<16x256xf32>
    %119 = arith.maximumf %117, %118 : vector<16x256xf32>
    %120 = vector.broadcast %112 : vector<1x256xf32> to vector<16x256xf32>
    %121 = arith.subf %120, %20 : vector<16x256xf32>
    %122 = math.absf %121 : vector<16x256xf32>
    %cst_37 = arith.constant 1.000000e+00 : f32
    %123 = vector.broadcast %cst_37 : f32 to vector<16x256xf32>
    %124 = arith.subf %123, %122 : vector<16x256xf32>
    %cst_38 = arith.constant 0.000000e+00 : f32
    %125 = vector.broadcast %cst_38 : f32 to vector<16x256xf32>
    %126 = arith.maximumf %124, %125 : vector<16x256xf32>
    %127 = vector.extract_strided_slice %3 {offsets = [0, 16], sizes = [48, 16], strides = [1, 1]} : vector<48x128xf32> to vector<48x16xf32>
    %cst_39 = arith.constant dense<0.000000e+00> : vector<48x256xf32>
    %128 = tpu.matmul %127, %119, %cst_39 {dimension_numbers = #tpu.dot_dimension_numbers<[1], [0], [0], [1], [0, 0, 1, 1], [], []>} : vector<48x16xf32>, vector<16x256xf32>, vector<48x256xf32> -> vector<48x256xf32>
    %129 = vector.extract_strided_slice %128 {offsets = [0, 0], sizes = [16, 256], strides = [1, 1]} : vector<48x256xf32> to vector<16x256xf32>
    %130 = arith.mulf %129, %126 : vector<16x256xf32>
    %cst_40 = arith.constant dense<0.000000e+00> : vector<256xf32>
    %131 = vector.multi_reduction <add>, %130, %cst_40 [0] : vector<16x256xf32> to vector<256xf32>
    %132 = vector.shape_cast %131 : vector<256xf32> to vector<1x256xf32>
    %133 = vector.extract_strided_slice %128 {offsets = [16, 0], sizes = [16, 256], strides = [1, 1]} : vector<48x256xf32> to vector<16x256xf32>
    %134 = arith.mulf %133, %126 : vector<16x256xf32>
    %cst_41 = arith.constant dense<0.000000e+00> : vector<256xf32>
    %135 = vector.multi_reduction <add>, %134, %cst_41 [0] : vector<16x256xf32> to vector<256xf32>
    %136 = vector.shape_cast %135 : vector<256xf32> to vector<1x256xf32>
    %137 = vector.extract_strided_slice %128 {offsets = [32, 0], sizes = [16, 256], strides = [1, 1]} : vector<48x256xf32> to vector<16x256xf32>
    %138 = arith.mulf %137, %126 : vector<16x256xf32>
    %cst_42 = arith.constant dense<0.000000e+00> : vector<256xf32>
    %139 = vector.multi_reduction <add>, %138, %cst_42 [0] : vector<16x256xf32> to vector<256xf32>
    %140 = vector.shape_cast %139 : vector<256xf32> to vector<1x256xf32>
    %141 = arith.subf %132, %6 : vector<1x256xf32>
    %142 = math.absf %141 : vector<1x256xf32>
    %cst_43 = arith.constant 2.990000e-01 : f32
    %143 = vector.broadcast %cst_43 : f32 to vector<1x256xf32>
    %144 = arith.mulf %143, %142 : vector<1x256xf32>
    %145 = arith.subf %136, %7 : vector<1x256xf32>
    %146 = math.absf %145 : vector<1x256xf32>
    %cst_44 = arith.constant 5.870000e-01 : f32
    %147 = vector.broadcast %cst_44 : f32 to vector<1x256xf32>
    %148 = arith.mulf %147, %146 : vector<1x256xf32>
    %149 = arith.addf %144, %148 : vector<1x256xf32>
    %150 = arith.subf %140, %8 : vector<1x256xf32>
    %151 = math.absf %150 : vector<1x256xf32>
    %cst_45 = arith.constant 1.140000e-01 : f32
    %152 = vector.broadcast %cst_45 : f32 to vector<1x256xf32>
    %153 = arith.mulf %152, %151 : vector<1x256xf32>
    %154 = arith.addf %149, %153 : vector<1x256xf32>
    %c8_i32_46 = arith.constant 8 : i32
    %155 = arith.muli %arg0, %c8_i32_46 : i32
    %c2_i32_47 = arith.constant 2 : i32
    %156 = arith.addi %155, %c2_i32_47 : i32
    %c2_i32_48 = arith.constant 2 : i32
    %157 = arith.muli %156, %c2_i32_48 : i32
    %158 = arith.index_cast %157 : i32 to index
    %159 = memref.load %arg2[%158] : memref<64xi32, #tpu.memory_space<smem>>
    %160 = arith.sitofp %159 : i32 to f32
    %c1_i32_49 = arith.constant 1 : i32
    %161 = arith.addi %157, %c1_i32_49 : i32
    %162 = arith.index_cast %161 : i32 to index
    %163 = memref.load %arg2[%162] : memref<64xi32, #tpu.memory_space<smem>>
    %164 = arith.sitofp %163 : i32 to f32
    %165 = vector.broadcast %164 : f32 to vector<1x256xf32>
    %166 = arith.mulf %1, %165 : vector<1x256xf32>
    %167 = arith.subf %18, %166 : vector<1x256xf32>
    %cst_50 = arith.constant 0.000000e+00 : f32
    %cst_51 = arith.constant 1.500000e+01 : f32
    %168 = vector.broadcast %cst_50 : f32 to vector<1x256xf32>
    %169 = arith.maximumf %168, %167 : vector<1x256xf32>
    %170 = vector.broadcast %cst_51 : f32 to vector<1x256xf32>
    %171 = arith.minimumf %170, %169 : vector<1x256xf32>
    %172 = vector.broadcast %160 : f32 to vector<1x256xf32>
    %173 = arith.mulf %1, %172 : vector<1x256xf32>
    %174 = arith.subf %15, %173 : vector<1x256xf32>
    %cst_52 = arith.constant 0.000000e+00 : f32
    %cst_53 = arith.constant 1.500000e+01 : f32
    %175 = vector.broadcast %cst_52 : f32 to vector<1x256xf32>
    %176 = arith.maximumf %175, %174 : vector<1x256xf32>
    %177 = vector.broadcast %cst_53 : f32 to vector<1x256xf32>
    %178 = arith.minimumf %177, %176 : vector<1x256xf32>
    %179 = vector.broadcast %171 : vector<1x256xf32> to vector<16x256xf32>
    %180 = arith.subf %179, %22 : vector<16x256xf32>
    %181 = math.absf %180 : vector<16x256xf32>
    %cst_54 = arith.constant 1.000000e+00 : f32
    %182 = vector.broadcast %cst_54 : f32 to vector<16x256xf32>
    %183 = arith.subf %182, %181 : vector<16x256xf32>
    %cst_55 = arith.constant 0.000000e+00 : f32
    %184 = vector.broadcast %cst_55 : f32 to vector<16x256xf32>
    %185 = arith.maximumf %183, %184 : vector<16x256xf32>
    %186 = vector.broadcast %178 : vector<1x256xf32> to vector<16x256xf32>
    %187 = arith.subf %186, %20 : vector<16x256xf32>
    %188 = math.absf %187 : vector<16x256xf32>
    %cst_56 = arith.constant 1.000000e+00 : f32
    %189 = vector.broadcast %cst_56 : f32 to vector<16x256xf32>
    %190 = arith.subf %189, %188 : vector<16x256xf32>
    %cst_57 = arith.constant 0.000000e+00 : f32
    %191 = vector.broadcast %cst_57 : f32 to vector<16x256xf32>
    %192 = arith.maximumf %190, %191 : vector<16x256xf32>
    %193 = vector.extract_strided_slice %3 {offsets = [0, 32], sizes = [48, 16], strides = [1, 1]} : vector<48x128xf32> to vector<48x16xf32>
    %cst_58 = arith.constant dense<0.000000e+00> : vector<48x256xf32>
    %194 = tpu.matmul %193, %185, %cst_58 {dimension_numbers = #tpu.dot_dimension_numbers<[1], [0], [0], [1], [0, 0, 1, 1], [], []>} : vector<48x16xf32>, vector<16x256xf32>, vector<48x256xf32> -> vector<48x256xf32>
    %195 = vector.extract_strided_slice %194 {offsets = [0, 0], sizes = [16, 256], strides = [1, 1]} : vector<48x256xf32> to vector<16x256xf32>
    %196 = arith.mulf %195, %192 : vector<16x256xf32>
    %cst_59 = arith.constant dense<0.000000e+00> : vector<256xf32>
    %197 = vector.multi_reduction <add>, %196, %cst_59 [0] : vector<16x256xf32> to vector<256xf32>
    %198 = vector.shape_cast %197 : vector<256xf32> to vector<1x256xf32>
    %199 = vector.extract_strided_slice %194 {offsets = [16, 0], sizes = [16, 256], strides = [1, 1]} : vector<48x256xf32> to vector<16x256xf32>
    %200 = arith.mulf %199, %192 : vector<16x256xf32>
    %cst_60 = arith.constant dense<0.000000e+00> : vector<256xf32>
    %201 = vector.multi_reduction <add>, %200, %cst_60 [0] : vector<16x256xf32> to vector<256xf32>
    %202 = vector.shape_cast %201 : vector<256xf32> to vector<1x256xf32>
    %203 = vector.extract_strided_slice %194 {offsets = [32, 0], sizes = [16, 256], strides = [1, 1]} : vector<48x256xf32> to vector<16x256xf32>
    %204 = arith.mulf %203, %192 : vector<16x256xf32>
    %cst_61 = arith.constant dense<0.000000e+00> : vector<256xf32>
    %205 = vector.multi_reduction <add>, %204, %cst_61 [0] : vector<16x256xf32> to vector<256xf32>
    %206 = vector.shape_cast %205 : vector<256xf32> to vector<1x256xf32>
    %207 = arith.subf %198, %6 : vector<1x256xf32>
    %208 = math.absf %207 : vector<1x256xf32>
    %cst_62 = arith.constant 2.990000e-01 : f32
    %209 = vector.broadcast %cst_62 : f32 to vector<1x256xf32>
    %210 = arith.mulf %209, %208 : vector<1x256xf32>
    %211 = arith.subf %202, %7 : vector<1x256xf32>
    %212 = math.absf %211 : vector<1x256xf32>
    %cst_63 = arith.constant 5.870000e-01 : f32
    %213 = vector.broadcast %cst_63 : f32 to vector<1x256xf32>
    %214 = arith.mulf %213, %212 : vector<1x256xf32>
    %215 = arith.addf %210, %214 : vector<1x256xf32>
    %216 = arith.subf %206, %8 : vector<1x256xf32>
    %217 = math.absf %216 : vector<1x256xf32>
    %cst_64 = arith.constant 1.140000e-01 : f32
    %218 = vector.broadcast %cst_64 : f32 to vector<1x256xf32>
    %219 = arith.mulf %218, %217 : vector<1x256xf32>
    %220 = arith.addf %215, %219 : vector<1x256xf32>
    %c8_i32_65 = arith.constant 8 : i32
    %221 = arith.muli %arg0, %c8_i32_65 : i32
    %c3_i32 = arith.constant 3 : i32
    %222 = arith.addi %221, %c3_i32 : i32
    %c2_i32_66 = arith.constant 2 : i32
    %223 = arith.muli %222, %c2_i32_66 : i32
    %224 = arith.index_cast %223 : i32 to index
    %225 = memref.load %arg2[%224] : memref<64xi32, #tpu.memory_space<smem>>
    %226 = arith.sitofp %225 : i32 to f32
    %c1_i32_67 = arith.constant 1 : i32
    %227 = arith.addi %223, %c1_i32_67 : i32
    %228 = arith.index_cast %227 : i32 to index
    %229 = memref.load %arg2[%228] : memref<64xi32, #tpu.memory_space<smem>>
    %230 = arith.sitofp %229 : i32 to f32
    %231 = vector.broadcast %230 : f32 to vector<1x256xf32>
    %232 = arith.mulf %1, %231 : vector<1x256xf32>
    %233 = arith.subf %18, %232 : vector<1x256xf32>
    %cst_68 = arith.constant 0.000000e+00 : f32
    %cst_69 = arith.constant 1.500000e+01 : f32
    %234 = vector.broadcast %cst_68 : f32 to vector<1x256xf32>
    %235 = arith.maximumf %234, %233 : vector<1x256xf32>
    %236 = vector.broadcast %cst_69 : f32 to vector<1x256xf32>
    %237 = arith.minimumf %236, %235 : vector<1x256xf32>
    %238 = vector.broadcast %226 : f32 to vector<1x256xf32>
    %239 = arith.mulf %1, %238 : vector<1x256xf32>
    %240 = arith.subf %15, %239 : vector<1x256xf32>
    %cst_70 = arith.constant 0.000000e+00 : f32
    %cst_71 = arith.constant 1.500000e+01 : f32
    %241 = vector.broadcast %cst_70 : f32 to vector<1x256xf32>
    %242 = arith.maximumf %241, %240 : vector<1x256xf32>
    %243 = vector.broadcast %cst_71 : f32 to vector<1x256xf32>
    %244 = arith.minimumf %243, %242 : vector<1x256xf32>
    %245 = vector.broadcast %237 : vector<1x256xf32> to vector<16x256xf32>
    %246 = arith.subf %245, %22 : vector<16x256xf32>
    %247 = math.absf %246 : vector<16x256xf32>
    %cst_72 = arith.constant 1.000000e+00 : f32
    %248 = vector.broadcast %cst_72 : f32 to vector<16x256xf32>
    %249 = arith.subf %248, %247 : vector<16x256xf32>
    %cst_73 = arith.constant 0.000000e+00 : f32
    %250 = vector.broadcast %cst_73 : f32 to vector<16x256xf32>
    %251 = arith.maximumf %249, %250 : vector<16x256xf32>
    %252 = vector.broadcast %244 : vector<1x256xf32> to vector<16x256xf32>
    %253 = arith.subf %252, %20 : vector<16x256xf32>
    %254 = math.absf %253 : vector<16x256xf32>
    %cst_74 = arith.constant 1.000000e+00 : f32
    %255 = vector.broadcast %cst_74 : f32 to vector<16x256xf32>
    %256 = arith.subf %255, %254 : vector<16x256xf32>
    %cst_75 = arith.constant 0.000000e+00 : f32
    %257 = vector.broadcast %cst_75 : f32 to vector<16x256xf32>
    %258 = arith.maximumf %256, %257 : vector<16x256xf32>
    %259 = vector.extract_strided_slice %3 {offsets = [0, 48], sizes = [48, 16], strides = [1, 1]} : vector<48x128xf32> to vector<48x16xf32>
    %cst_76 = arith.constant dense<0.000000e+00> : vector<48x256xf32>
    %260 = tpu.matmul %259, %251, %cst_76 {dimension_numbers = #tpu.dot_dimension_numbers<[1], [0], [0], [1], [0, 0, 1, 1], [], []>} : vector<48x16xf32>, vector<16x256xf32>, vector<48x256xf32> -> vector<48x256xf32>
    %261 = vector.extract_strided_slice %260 {offsets = [0, 0], sizes = [16, 256], strides = [1, 1]} : vector<48x256xf32> to vector<16x256xf32>
    %262 = arith.mulf %261, %258 : vector<16x256xf32>
    %cst_77 = arith.constant dense<0.000000e+00> : vector<256xf32>
    %263 = vector.multi_reduction <add>, %262, %cst_77 [0] : vector<16x256xf32> to vector<256xf32>
    %264 = vector.shape_cast %263 : vector<256xf32> to vector<1x256xf32>
    %265 = vector.extract_strided_slice %260 {offsets = [16, 0], sizes = [16, 256], strides = [1, 1]} : vector<48x256xf32> to vector<16x256xf32>
    %266 = arith.mulf %265, %258 : vector<16x256xf32>
    %cst_78 = arith.constant dense<0.000000e+00> : vector<256xf32>
    %267 = vector.multi_reduction <add>, %266, %cst_78 [0] : vector<16x256xf32> to vector<256xf32>
    %268 = vector.shape_cast %267 : vector<256xf32> to vector<1x256xf32>
    %269 = vector.extract_strided_slice %260 {offsets = [32, 0], sizes = [16, 256], strides = [1, 1]} : vector<48x256xf32> to vector<16x256xf32>
    %270 = arith.mulf %269, %258 : vector<16x256xf32>
    %cst_79 = arith.constant dense<0.000000e+00> : vector<256xf32>
    %271 = vector.multi_reduction <add>, %270, %cst_79 [0] : vector<16x256xf32> to vector<256xf32>
    %272 = vector.shape_cast %271 : vector<256xf32> to vector<1x256xf32>
    %273 = arith.subf %264, %6 : vector<1x256xf32>
    %274 = math.absf %273 : vector<1x256xf32>
    %cst_80 = arith.constant 2.990000e-01 : f32
    %275 = vector.broadcast %cst_80 : f32 to vector<1x256xf32>
    %276 = arith.mulf %275, %274 : vector<1x256xf32>
    %277 = arith.subf %268, %7 : vector<1x256xf32>
    %278 = math.absf %277 : vector<1x256xf32>
    %cst_81 = arith.constant 5.870000e-01 : f32
    %279 = vector.broadcast %cst_81 : f32 to vector<1x256xf32>
    %280 = arith.mulf %279, %278 : vector<1x256xf32>
    %281 = arith.addf %276, %280 : vector<1x256xf32>
    %282 = arith.subf %272, %8 : vector<1x256xf32>
    %283 = math.absf %282 : vector<1x256xf32>
    %cst_82 = arith.constant 1.140000e-01 : f32
    %284 = vector.broadcast %cst_82 : f32 to vector<1x256xf32>
    %285 = arith.mulf %284, %283 : vector<1x256xf32>
    %286 = arith.addf %281, %285 : vector<1x256xf32>
    %c8_i32_83 = arith.constant 8 : i32
    %287 = arith.muli %arg0, %c8_i32_83 : i32
    %c4_i32 = arith.constant 4 : i32
    %288 = arith.addi %287, %c4_i32 : i32
    %c2_i32_84 = arith.constant 2 : i32
    %289 = arith.muli %288, %c2_i32_84 : i32
    %290 = arith.index_cast %289 : i32 to index
    %291 = memref.load %arg2[%290] : memref<64xi32, #tpu.memory_space<smem>>
    %292 = arith.sitofp %291 : i32 to f32
    %c1_i32_85 = arith.constant 1 : i32
    %293 = arith.addi %289, %c1_i32_85 : i32
    %294 = arith.index_cast %293 : i32 to index
    %295 = memref.load %arg2[%294] : memref<64xi32, #tpu.memory_space<smem>>
    %296 = arith.sitofp %295 : i32 to f32
    %297 = vector.broadcast %296 : f32 to vector<1x256xf32>
    %298 = arith.mulf %1, %297 : vector<1x256xf32>
    %299 = arith.subf %18, %298 : vector<1x256xf32>
    %cst_86 = arith.constant 0.000000e+00 : f32
    %cst_87 = arith.constant 1.500000e+01 : f32
    %300 = vector.broadcast %cst_86 : f32 to vector<1x256xf32>
    %301 = arith.maximumf %300, %299 : vector<1x256xf32>
    %302 = vector.broadcast %cst_87 : f32 to vector<1x256xf32>
    %303 = arith.minimumf %302, %301 : vector<1x256xf32>
    %304 = vector.broadcast %292 : f32 to vector<1x256xf32>
    %305 = arith.mulf %1, %304 : vector<1x256xf32>
    %306 = arith.subf %15, %305 : vector<1x256xf32>
    %cst_88 = arith.constant 0.000000e+00 : f32
    %cst_89 = arith.constant 1.500000e+01 : f32
    %307 = vector.broadcast %cst_88 : f32 to vector<1x256xf32>
    %308 = arith.maximumf %307, %306 : vector<1x256xf32>
    %309 = vector.broadcast %cst_89 : f32 to vector<1x256xf32>
    %310 = arith.minimumf %309, %308 : vector<1x256xf32>
    %311 = vector.broadcast %303 : vector<1x256xf32> to vector<16x256xf32>
    %312 = arith.subf %311, %22 : vector<16x256xf32>
    %313 = math.absf %312 : vector<16x256xf32>
    %cst_90 = arith.constant 1.000000e+00 : f32
    %314 = vector.broadcast %cst_90 : f32 to vector<16x256xf32>
    %315 = arith.subf %314, %313 : vector<16x256xf32>
    %cst_91 = arith.constant 0.000000e+00 : f32
    %316 = vector.broadcast %cst_91 : f32 to vector<16x256xf32>
    %317 = arith.maximumf %315, %316 : vector<16x256xf32>
    %318 = vector.broadcast %310 : vector<1x256xf32> to vector<16x256xf32>
    %319 = arith.subf %318, %20 : vector<16x256xf32>
    %320 = math.absf %319 : vector<16x256xf32>
    %cst_92 = arith.constant 1.000000e+00 : f32
    %321 = vector.broadcast %cst_92 : f32 to vector<16x256xf32>
    %322 = arith.subf %321, %320 : vector<16x256xf32>
    %cst_93 = arith.constant 0.000000e+00 : f32
    %323 = vector.broadcast %cst_93 : f32 to vector<16x256xf32>
    %324 = arith.maximumf %322, %323 : vector<16x256xf32>
    %325 = vector.extract_strided_slice %3 {offsets = [0, 64], sizes = [48, 16], strides = [1, 1]} : vector<48x128xf32> to vector<48x16xf32>
    %cst_94 = arith.constant dense<0.000000e+00> : vector<48x256xf32>
    %326 = tpu.matmul %325, %317, %cst_94 {dimension_numbers = #tpu.dot_dimension_numbers<[1], [0], [0], [1], [0, 0, 1, 1], [], []>} : vector<48x16xf32>, vector<16x256xf32>, vector<48x256xf32> -> vector<48x256xf32>
    %327 = vector.extract_strided_slice %326 {offsets = [0, 0], sizes = [16, 256], strides = [1, 1]} : vector<48x256xf32> to vector<16x256xf32>
    %328 = arith.mulf %327, %324 : vector<16x256xf32>
    %cst_95 = arith.constant dense<0.000000e+00> : vector<256xf32>
    %329 = vector.multi_reduction <add>, %328, %cst_95 [0] : vector<16x256xf32> to vector<256xf32>
    %330 = vector.shape_cast %329 : vector<256xf32> to vector<1x256xf32>
    %331 = vector.extract_strided_slice %326 {offsets = [16, 0], sizes = [16, 256], strides = [1, 1]} : vector<48x256xf32> to vector<16x256xf32>
    %332 = arith.mulf %331, %324 : vector<16x256xf32>
    %cst_96 = arith.constant dense<0.000000e+00> : vector<256xf32>
    %333 = vector.multi_reduction <add>, %332, %cst_96 [0] : vector<16x256xf32> to vector<256xf32>
    %334 = vector.shape_cast %333 : vector<256xf32> to vector<1x256xf32>
    %335 = vector.extract_strided_slice %326 {offsets = [32, 0], sizes = [16, 256], strides = [1, 1]} : vector<48x256xf32> to vector<16x256xf32>
    %336 = arith.mulf %335, %324 : vector<16x256xf32>
    %cst_97 = arith.constant dense<0.000000e+00> : vector<256xf32>
    %337 = vector.multi_reduction <add>, %336, %cst_97 [0] : vector<16x256xf32> to vector<256xf32>
    %338 = vector.shape_cast %337 : vector<256xf32> to vector<1x256xf32>
    %339 = arith.subf %330, %6 : vector<1x256xf32>
    %340 = math.absf %339 : vector<1x256xf32>
    %cst_98 = arith.constant 2.990000e-01 : f32
    %341 = vector.broadcast %cst_98 : f32 to vector<1x256xf32>
    %342 = arith.mulf %341, %340 : vector<1x256xf32>
    %343 = arith.subf %334, %7 : vector<1x256xf32>
    %344 = math.absf %343 : vector<1x256xf32>
    %cst_99 = arith.constant 5.870000e-01 : f32
    %345 = vector.broadcast %cst_99 : f32 to vector<1x256xf32>
    %346 = arith.mulf %345, %344 : vector<1x256xf32>
    %347 = arith.addf %342, %346 : vector<1x256xf32>
    %348 = arith.subf %338, %8 : vector<1x256xf32>
    %349 = math.absf %348 : vector<1x256xf32>
    %cst_100 = arith.constant 1.140000e-01 : f32
    %350 = vector.broadcast %cst_100 : f32 to vector<1x256xf32>
    %351 = arith.mulf %350, %349 : vector<1x256xf32>
    %352 = arith.addf %347, %351 : vector<1x256xf32>
    %c8_i32_101 = arith.constant 8 : i32
    %353 = arith.muli %arg0, %c8_i32_101 : i32
    %c5_i32 = arith.constant 5 : i32
    %354 = arith.addi %353, %c5_i32 : i32
    %c2_i32_102 = arith.constant 2 : i32
    %355 = arith.muli %354, %c2_i32_102 : i32
    %356 = arith.index_cast %355 : i32 to index
    %357 = memref.load %arg2[%356] : memref<64xi32, #tpu.memory_space<smem>>
    %358 = arith.sitofp %357 : i32 to f32
    %c1_i32_103 = arith.constant 1 : i32
    %359 = arith.addi %355, %c1_i32_103 : i32
    %360 = arith.index_cast %359 : i32 to index
    %361 = memref.load %arg2[%360] : memref<64xi32, #tpu.memory_space<smem>>
    %362 = arith.sitofp %361 : i32 to f32
    %363 = vector.broadcast %362 : f32 to vector<1x256xf32>
    %364 = arith.mulf %1, %363 : vector<1x256xf32>
    %365 = arith.subf %18, %364 : vector<1x256xf32>
    %cst_104 = arith.constant 0.000000e+00 : f32
    %cst_105 = arith.constant 1.500000e+01 : f32
    %366 = vector.broadcast %cst_104 : f32 to vector<1x256xf32>
    %367 = arith.maximumf %366, %365 : vector<1x256xf32>
    %368 = vector.broadcast %cst_105 : f32 to vector<1x256xf32>
    %369 = arith.minimumf %368, %367 : vector<1x256xf32>
    %370 = vector.broadcast %358 : f32 to vector<1x256xf32>
    %371 = arith.mulf %1, %370 : vector<1x256xf32>
    %372 = arith.subf %15, %371 : vector<1x256xf32>
    %cst_106 = arith.constant 0.000000e+00 : f32
    %cst_107 = arith.constant 1.500000e+01 : f32
    %373 = vector.broadcast %cst_106 : f32 to vector<1x256xf32>
    %374 = arith.maximumf %373, %372 : vector<1x256xf32>
    %375 = vector.broadcast %cst_107 : f32 to vector<1x256xf32>
    %376 = arith.minimumf %375, %374 : vector<1x256xf32>
    %377 = vector.broadcast %369 : vector<1x256xf32> to vector<16x256xf32>
    %378 = arith.subf %377, %22 : vector<16x256xf32>
    %379 = math.absf %378 : vector<16x256xf32>
    %cst_108 = arith.constant 1.000000e+00 : f32
    %380 = vector.broadcast %cst_108 : f32 to vector<16x256xf32>
    %381 = arith.subf %380, %379 : vector<16x256xf32>
    %cst_109 = arith.constant 0.000000e+00 : f32
    %382 = vector.broadcast %cst_109 : f32 to vector<16x256xf32>
    %383 = arith.maximumf %381, %382 : vector<16x256xf32>
    %384 = vector.broadcast %376 : vector<1x256xf32> to vector<16x256xf32>
    %385 = arith.subf %384, %20 : vector<16x256xf32>
    %386 = math.absf %385 : vector<16x256xf32>
    %cst_110 = arith.constant 1.000000e+00 : f32
    %387 = vector.broadcast %cst_110 : f32 to vector<16x256xf32>
    %388 = arith.subf %387, %386 : vector<16x256xf32>
    %cst_111 = arith.constant 0.000000e+00 : f32
    %389 = vector.broadcast %cst_111 : f32 to vector<16x256xf32>
    %390 = arith.maximumf %388, %389 : vector<16x256xf32>
    %391 = vector.extract_strided_slice %3 {offsets = [0, 80], sizes = [48, 16], strides = [1, 1]} : vector<48x128xf32> to vector<48x16xf32>
    %cst_112 = arith.constant dense<0.000000e+00> : vector<48x256xf32>
    %392 = tpu.matmul %391, %383, %cst_112 {dimension_numbers = #tpu.dot_dimension_numbers<[1], [0], [0], [1], [0, 0, 1, 1], [], []>} : vector<48x16xf32>, vector<16x256xf32>, vector<48x256xf32> -> vector<48x256xf32>
    %393 = vector.extract_strided_slice %392 {offsets = [0, 0], sizes = [16, 256], strides = [1, 1]} : vector<48x256xf32> to vector<16x256xf32>
    %394 = arith.mulf %393, %390 : vector<16x256xf32>
    %cst_113 = arith.constant dense<0.000000e+00> : vector<256xf32>
    %395 = vector.multi_reduction <add>, %394, %cst_113 [0] : vector<16x256xf32> to vector<256xf32>
    %396 = vector.shape_cast %395 : vector<256xf32> to vector<1x256xf32>
    %397 = vector.extract_strided_slice %392 {offsets = [16, 0], sizes = [16, 256], strides = [1, 1]} : vector<48x256xf32> to vector<16x256xf32>
    %398 = arith.mulf %397, %390 : vector<16x256xf32>
    %cst_114 = arith.constant dense<0.000000e+00> : vector<256xf32>
    %399 = vector.multi_reduction <add>, %398, %cst_114 [0] : vector<16x256xf32> to vector<256xf32>
    %400 = vector.shape_cast %399 : vector<256xf32> to vector<1x256xf32>
    %401 = vector.extract_strided_slice %392 {offsets = [32, 0], sizes = [16, 256], strides = [1, 1]} : vector<48x256xf32> to vector<16x256xf32>
    %402 = arith.mulf %401, %390 : vector<16x256xf32>
    %cst_115 = arith.constant dense<0.000000e+00> : vector<256xf32>
    %403 = vector.multi_reduction <add>, %402, %cst_115 [0] : vector<16x256xf32> to vector<256xf32>
    %404 = vector.shape_cast %403 : vector<256xf32> to vector<1x256xf32>
    %405 = arith.subf %396, %6 : vector<1x256xf32>
    %406 = math.absf %405 : vector<1x256xf32>
    %cst_116 = arith.constant 2.990000e-01 : f32
    %407 = vector.broadcast %cst_116 : f32 to vector<1x256xf32>
    %408 = arith.mulf %407, %406 : vector<1x256xf32>
    %409 = arith.subf %400, %7 : vector<1x256xf32>
    %410 = math.absf %409 : vector<1x256xf32>
    %cst_117 = arith.constant 5.870000e-01 : f32
    %411 = vector.broadcast %cst_117 : f32 to vector<1x256xf32>
    %412 = arith.mulf %411, %410 : vector<1x256xf32>
    %413 = arith.addf %408, %412 : vector<1x256xf32>
    %414 = arith.subf %404, %8 : vector<1x256xf32>
    %415 = math.absf %414 : vector<1x256xf32>
    %cst_118 = arith.constant 1.140000e-01 : f32
    %416 = vector.broadcast %cst_118 : f32 to vector<1x256xf32>
    %417 = arith.mulf %416, %415 : vector<1x256xf32>
    %418 = arith.addf %413, %417 : vector<1x256xf32>
    %c8_i32_119 = arith.constant 8 : i32
    %419 = arith.muli %arg0, %c8_i32_119 : i32
    %c6_i32 = arith.constant 6 : i32
    %420 = arith.addi %419, %c6_i32 : i32
    %c2_i32_120 = arith.constant 2 : i32
    %421 = arith.muli %420, %c2_i32_120 : i32
    %422 = arith.index_cast %421 : i32 to index
    %423 = memref.load %arg2[%422] : memref<64xi32, #tpu.memory_space<smem>>
    %424 = arith.sitofp %423 : i32 to f32
    %c1_i32_121 = arith.constant 1 : i32
    %425 = arith.addi %421, %c1_i32_121 : i32
    %426 = arith.index_cast %425 : i32 to index
    %427 = memref.load %arg2[%426] : memref<64xi32, #tpu.memory_space<smem>>
    %428 = arith.sitofp %427 : i32 to f32
    %429 = vector.broadcast %428 : f32 to vector<1x256xf32>
    %430 = arith.mulf %1, %429 : vector<1x256xf32>
    %431 = arith.subf %18, %430 : vector<1x256xf32>
    %cst_122 = arith.constant 0.000000e+00 : f32
    %cst_123 = arith.constant 1.500000e+01 : f32
    %432 = vector.broadcast %cst_122 : f32 to vector<1x256xf32>
    %433 = arith.maximumf %432, %431 : vector<1x256xf32>
    %434 = vector.broadcast %cst_123 : f32 to vector<1x256xf32>
    %435 = arith.minimumf %434, %433 : vector<1x256xf32>
    %436 = vector.broadcast %424 : f32 to vector<1x256xf32>
    %437 = arith.mulf %1, %436 : vector<1x256xf32>
    %438 = arith.subf %15, %437 : vector<1x256xf32>
    %cst_124 = arith.constant 0.000000e+00 : f32
    %cst_125 = arith.constant 1.500000e+01 : f32
    %439 = vector.broadcast %cst_124 : f32 to vector<1x256xf32>
    %440 = arith.maximumf %439, %438 : vector<1x256xf32>
    %441 = vector.broadcast %cst_125 : f32 to vector<1x256xf32>
    %442 = arith.minimumf %441, %440 : vector<1x256xf32>
    %443 = vector.broadcast %435 : vector<1x256xf32> to vector<16x256xf32>
    %444 = arith.subf %443, %22 : vector<16x256xf32>
    %445 = math.absf %444 : vector<16x256xf32>
    %cst_126 = arith.constant 1.000000e+00 : f32
    %446 = vector.broadcast %cst_126 : f32 to vector<16x256xf32>
    %447 = arith.subf %446, %445 : vector<16x256xf32>
    %cst_127 = arith.constant 0.000000e+00 : f32
    %448 = vector.broadcast %cst_127 : f32 to vector<16x256xf32>
    %449 = arith.maximumf %447, %448 : vector<16x256xf32>
    %450 = vector.broadcast %442 : vector<1x256xf32> to vector<16x256xf32>
    %451 = arith.subf %450, %20 : vector<16x256xf32>
    %452 = math.absf %451 : vector<16x256xf32>
    %cst_128 = arith.constant 1.000000e+00 : f32
    %453 = vector.broadcast %cst_128 : f32 to vector<16x256xf32>
    %454 = arith.subf %453, %452 : vector<16x256xf32>
    %cst_129 = arith.constant 0.000000e+00 : f32
    %455 = vector.broadcast %cst_129 : f32 to vector<16x256xf32>
    %456 = arith.maximumf %454, %455 : vector<16x256xf32>
    %457 = vector.extract_strided_slice %3 {offsets = [0, 96], sizes = [48, 16], strides = [1, 1]} : vector<48x128xf32> to vector<48x16xf32>
    %cst_130 = arith.constant dense<0.000000e+00> : vector<48x256xf32>
    %458 = tpu.matmul %457, %449, %cst_130 {dimension_numbers = #tpu.dot_dimension_numbers<[1], [0], [0], [1], [0, 0, 1, 1], [], []>} : vector<48x16xf32>, vector<16x256xf32>, vector<48x256xf32> -> vector<48x256xf32>
    %459 = vector.extract_strided_slice %458 {offsets = [0, 0], sizes = [16, 256], strides = [1, 1]} : vector<48x256xf32> to vector<16x256xf32>
    %460 = arith.mulf %459, %456 : vector<16x256xf32>
    %cst_131 = arith.constant dense<0.000000e+00> : vector<256xf32>
    %461 = vector.multi_reduction <add>, %460, %cst_131 [0] : vector<16x256xf32> to vector<256xf32>
    %462 = vector.shape_cast %461 : vector<256xf32> to vector<1x256xf32>
    %463 = vector.extract_strided_slice %458 {offsets = [16, 0], sizes = [16, 256], strides = [1, 1]} : vector<48x256xf32> to vector<16x256xf32>
    %464 = arith.mulf %463, %456 : vector<16x256xf32>
    %cst_132 = arith.constant dense<0.000000e+00> : vector<256xf32>
    %465 = vector.multi_reduction <add>, %464, %cst_132 [0] : vector<16x256xf32> to vector<256xf32>
    %466 = vector.shape_cast %465 : vector<256xf32> to vector<1x256xf32>
    %467 = vector.extract_strided_slice %458 {offsets = [32, 0], sizes = [16, 256], strides = [1, 1]} : vector<48x256xf32> to vector<16x256xf32>
    %468 = arith.mulf %467, %456 : vector<16x256xf32>
    %cst_133 = arith.constant dense<0.000000e+00> : vector<256xf32>
    %469 = vector.multi_reduction <add>, %468, %cst_133 [0] : vector<16x256xf32> to vector<256xf32>
    %470 = vector.shape_cast %469 : vector<256xf32> to vector<1x256xf32>
    %471 = arith.subf %462, %6 : vector<1x256xf32>
    %472 = math.absf %471 : vector<1x256xf32>
    %cst_134 = arith.constant 2.990000e-01 : f32
    %473 = vector.broadcast %cst_134 : f32 to vector<1x256xf32>
    %474 = arith.mulf %473, %472 : vector<1x256xf32>
    %475 = arith.subf %466, %7 : vector<1x256xf32>
    %476 = math.absf %475 : vector<1x256xf32>
    %cst_135 = arith.constant 5.870000e-01 : f32
    %477 = vector.broadcast %cst_135 : f32 to vector<1x256xf32>
    %478 = arith.mulf %477, %476 : vector<1x256xf32>
    %479 = arith.addf %474, %478 : vector<1x256xf32>
    %480 = arith.subf %470, %8 : vector<1x256xf32>
    %481 = math.absf %480 : vector<1x256xf32>
    %cst_136 = arith.constant 1.140000e-01 : f32
    %482 = vector.broadcast %cst_136 : f32 to vector<1x256xf32>
    %483 = arith.mulf %482, %481 : vector<1x256xf32>
    %484 = arith.addf %479, %483 : vector<1x256xf32>
    %c8_i32_137 = arith.constant 8 : i32
    %485 = arith.muli %arg0, %c8_i32_137 : i32
    %c7_i32 = arith.constant 7 : i32
    %486 = arith.addi %485, %c7_i32 : i32
    %c2_i32_138 = arith.constant 2 : i32
    %487 = arith.muli %486, %c2_i32_138 : i32
    %488 = arith.index_cast %487 : i32 to index
    %489 = memref.load %arg2[%488] : memref<64xi32, #tpu.memory_space<smem>>
    %490 = arith.sitofp %489 : i32 to f32
    %c1_i32_139 = arith.constant 1 : i32
    %491 = arith.addi %487, %c1_i32_139 : i32
    %492 = arith.index_cast %491 : i32 to index
    %493 = memref.load %arg2[%492] : memref<64xi32, #tpu.memory_space<smem>>
    %494 = arith.sitofp %493 : i32 to f32
    %495 = vector.broadcast %494 : f32 to vector<1x256xf32>
    %496 = arith.mulf %1, %495 : vector<1x256xf32>
    %497 = arith.subf %18, %496 : vector<1x256xf32>
    %cst_140 = arith.constant 0.000000e+00 : f32
    %cst_141 = arith.constant 1.500000e+01 : f32
    %498 = vector.broadcast %cst_140 : f32 to vector<1x256xf32>
    %499 = arith.maximumf %498, %497 : vector<1x256xf32>
    %500 = vector.broadcast %cst_141 : f32 to vector<1x256xf32>
    %501 = arith.minimumf %500, %499 : vector<1x256xf32>
    %502 = vector.broadcast %490 : f32 to vector<1x256xf32>
    %503 = arith.mulf %1, %502 : vector<1x256xf32>
    %504 = arith.subf %15, %503 : vector<1x256xf32>
    %cst_142 = arith.constant 0.000000e+00 : f32
    %cst_143 = arith.constant 1.500000e+01 : f32
    %505 = vector.broadcast %cst_142 : f32 to vector<1x256xf32>
    %506 = arith.maximumf %505, %504 : vector<1x256xf32>
    %507 = vector.broadcast %cst_143 : f32 to vector<1x256xf32>
    %508 = arith.minimumf %507, %506 : vector<1x256xf32>
    %509 = vector.broadcast %501 : vector<1x256xf32> to vector<16x256xf32>
    %510 = arith.subf %509, %22 : vector<16x256xf32>
    %511 = math.absf %510 : vector<16x256xf32>
    %cst_144 = arith.constant 1.000000e+00 : f32
    %512 = vector.broadcast %cst_144 : f32 to vector<16x256xf32>
    %513 = arith.subf %512, %511 : vector<16x256xf32>
    %cst_145 = arith.constant 0.000000e+00 : f32
    %514 = vector.broadcast %cst_145 : f32 to vector<16x256xf32>
    %515 = arith.maximumf %513, %514 : vector<16x256xf32>
    %516 = vector.broadcast %508 : vector<1x256xf32> to vector<16x256xf32>
    %517 = arith.subf %516, %20 : vector<16x256xf32>
    %518 = math.absf %517 : vector<16x256xf32>
    %cst_146 = arith.constant 1.000000e+00 : f32
    %519 = vector.broadcast %cst_146 : f32 to vector<16x256xf32>
    %520 = arith.subf %519, %518 : vector<16x256xf32>
    %cst_147 = arith.constant 0.000000e+00 : f32
    %521 = vector.broadcast %cst_147 : f32 to vector<16x256xf32>
    %522 = arith.maximumf %520, %521 : vector<16x256xf32>
    %523 = vector.extract_strided_slice %3 {offsets = [0, 112], sizes = [48, 16], strides = [1, 1]} : vector<48x128xf32> to vector<48x16xf32>
    %cst_148 = arith.constant dense<0.000000e+00> : vector<48x256xf32>
    %524 = tpu.matmul %523, %515, %cst_148 {dimension_numbers = #tpu.dot_dimension_numbers<[1], [0], [0], [1], [0, 0, 1, 1], [], []>} : vector<48x16xf32>, vector<16x256xf32>, vector<48x256xf32> -> vector<48x256xf32>
    %525 = vector.extract_strided_slice %524 {offsets = [0, 0], sizes = [16, 256], strides = [1, 1]} : vector<48x256xf32> to vector<16x256xf32>
    %526 = arith.mulf %525, %522 : vector<16x256xf32>
    %cst_149 = arith.constant dense<0.000000e+00> : vector<256xf32>
    %527 = vector.multi_reduction <add>, %526, %cst_149 [0] : vector<16x256xf32> to vector<256xf32>
    %528 = vector.shape_cast %527 : vector<256xf32> to vector<1x256xf32>
    %529 = vector.extract_strided_slice %524 {offsets = [16, 0], sizes = [16, 256], strides = [1, 1]} : vector<48x256xf32> to vector<16x256xf32>
    %530 = arith.mulf %529, %522 : vector<16x256xf32>
    %cst_150 = arith.constant dense<0.000000e+00> : vector<256xf32>
    %531 = vector.multi_reduction <add>, %530, %cst_150 [0] : vector<16x256xf32> to vector<256xf32>
    %532 = vector.shape_cast %531 : vector<256xf32> to vector<1x256xf32>
    %533 = vector.extract_strided_slice %524 {offsets = [32, 0], sizes = [16, 256], strides = [1, 1]} : vector<48x256xf32> to vector<16x256xf32>
    %534 = arith.mulf %533, %522 : vector<16x256xf32>
    %cst_151 = arith.constant dense<0.000000e+00> : vector<256xf32>
    %535 = vector.multi_reduction <add>, %534, %cst_151 [0] : vector<16x256xf32> to vector<256xf32>
    %536 = vector.shape_cast %535 : vector<256xf32> to vector<1x256xf32>
    %537 = arith.subf %528, %6 : vector<1x256xf32>
    %538 = math.absf %537 : vector<1x256xf32>
    %cst_152 = arith.constant 2.990000e-01 : f32
    %539 = vector.broadcast %cst_152 : f32 to vector<1x256xf32>
    %540 = arith.mulf %539, %538 : vector<1x256xf32>
    %541 = arith.subf %532, %7 : vector<1x256xf32>
    %542 = math.absf %541 : vector<1x256xf32>
    %cst_153 = arith.constant 5.870000e-01 : f32
    %543 = vector.broadcast %cst_153 : f32 to vector<1x256xf32>
    %544 = arith.mulf %543, %542 : vector<1x256xf32>
    %545 = arith.addf %540, %544 : vector<1x256xf32>
    %546 = arith.subf %536, %8 : vector<1x256xf32>
    %547 = math.absf %546 : vector<1x256xf32>
    %cst_154 = arith.constant 1.140000e-01 : f32
    %548 = vector.broadcast %cst_154 : f32 to vector<1x256xf32>
    %549 = arith.mulf %548, %547 : vector<1x256xf32>
    %550 = arith.addf %545, %549 : vector<1x256xf32>
    %551 = arith.addf %352, %418 : vector<1x256xf32>
    %552 = arith.addf %551, %484 : vector<1x256xf32>
    %553 = arith.addf %552, %550 : vector<1x256xf32>
    %554 = arith.addf %553, %286 : vector<1x256xf32>
    %555 = arith.addf %554, %220 : vector<1x256xf32>
    %556 = arith.addf %555, %154 : vector<1x256xf32>
    %557 = arith.addf %556, %88 : vector<1x256xf32>
    %558 = arith.addf %88, %154 : vector<1x256xf32>
    %559 = arith.addf %558, %220 : vector<1x256xf32>
    %560 = arith.addf %559, %286 : vector<1x256xf32>
    %561 = arith.addf %560, %352 : vector<1x256xf32>
    %562 = arith.addf %561, %418 : vector<1x256xf32>
    %563 = arith.addf %562, %484 : vector<1x256xf32>
    %cst_155 = arith.constant 0.111111112 : f32
    %564 = vector.broadcast %cst_155 : f32 to vector<1x256xf32>
    %565 = arith.mulf %557, %564 : vector<1x256xf32>
    %cst_156 = arith.constant 1.250000e-01 : f32
    %566 = vector.broadcast %cst_156 : f32 to vector<1x256xf32>
    %567 = arith.mulf %556, %566 : vector<1x256xf32>
    %cst_157 = arith.constant 0.142857149 : f32
    %568 = vector.broadcast %cst_157 : f32 to vector<1x256xf32>
    %569 = arith.mulf %555, %568 : vector<1x256xf32>
    %cst_158 = arith.constant 0.166666672 : f32
    %570 = vector.broadcast %cst_158 : f32 to vector<1x256xf32>
    %571 = arith.mulf %554, %570 : vector<1x256xf32>
    %cst_159 = arith.constant 2.000000e-01 : f32
    %572 = vector.broadcast %cst_159 : f32 to vector<1x256xf32>
    %573 = arith.mulf %553, %572 : vector<1x256xf32>
    %cst_160 = arith.constant 1.250000e-01 : f32
    %574 = vector.broadcast %cst_160 : f32 to vector<1x256xf32>
    %575 = arith.mulf %563, %574 : vector<1x256xf32>
    %cst_161 = arith.constant 0.142857149 : f32
    %576 = vector.broadcast %cst_161 : f32 to vector<1x256xf32>
    %577 = arith.mulf %562, %576 : vector<1x256xf32>
    %cst_162 = arith.constant 0.166666672 : f32
    %578 = vector.broadcast %cst_162 : f32 to vector<1x256xf32>
    %579 = arith.mulf %561, %578 : vector<1x256xf32>
    %cst_163 = arith.constant 2.000000e-01 : f32
    %580 = vector.broadcast %cst_163 : f32 to vector<1x256xf32>
    %581 = arith.mulf %560, %580 : vector<1x256xf32>
    %582 = arith.subf %581, %573 : vector<1x256xf32>
    %583 = math.absf %582 : vector<1x256xf32>
    %cst_164 = arith.constant 0.00999999977 : f32
    %584 = vector.broadcast %cst_164 : f32 to vector<1x256xf32>
    %585 = arith.cmpf olt, %583, %584 : vector<1x256xf32>
    %cst_165 = arith.constant 1.000000e+00 : f32
    %cst_166 = arith.constant 0.000000e+00 : f32
    %586 = vector.broadcast %cst_165 : f32 to vector<1x256xf32>
    %587 = vector.broadcast %cst_166 : f32 to vector<1x256xf32>
    %588 = arith.select %585, %586, %587 : vector<1x256xi1>, vector<1x256xf32>
    %589 = arith.minimumf %565, %567 : vector<1x256xf32>
    %590 = arith.minimumf %589, %569 : vector<1x256xf32>
    %591 = arith.minimumf %590, %571 : vector<1x256xf32>
    %592 = arith.minimumf %591, %573 : vector<1x256xf32>
    %593 = arith.minimumf %592, %575 : vector<1x256xf32>
    %594 = arith.minimumf %593, %577 : vector<1x256xf32>
    %595 = arith.minimumf %594, %579 : vector<1x256xf32>
    %596 = arith.minimumf %595, %581 : vector<1x256xf32>
    %cst_167 = arith.constant 1.000000e+00 : f32
    %597 = vector.broadcast %cst_167 : f32 to vector<1x256xf32>
    %598 = arith.subf %597, %588 : vector<1x256xf32>
    %599 = arith.mulf %596, %598 : vector<1x256xf32>
    %600 = arith.mulf %565, %588 : vector<1x256xf32>
    %601 = arith.addf %599, %600 : vector<1x256xf32>
    %602 = vector.shape_cast %601 : vector<1x256xf32> to vector<1x1x256xf32>
    %cst_168 = arith.constant dense<0.000000e+00> : vector<1xf32>
    %603 = vector.multi_reduction <add>, %602, %cst_168 [1, 2] : vector<1x1x256xf32> to vector<1xf32>
    %604 = vector.shape_cast %603 : vector<1xf32> to vector<1x1x1xf32>
    %605 = vector.extract %604[0, 0, 0] : f32 from vector<1x1x1xf32>
    %cst_169 = arith.constant 0.001953125 : f32
    %606 = arith.mulf %605, %cst_169 : f32
    %607 = vector.broadcast %606 : f32 to vector<1x1x1x1xf32>
    %c0_170 = arith.constant 0 : index
    %c0_171 = arith.constant 0 : index
    %c0_172 = arith.constant 0 : index
    %c0_173 = arith.constant 0 : index
    %608 = vector.load %arg6[%c0_170, %c0_171, %c0_172, %c0_173] : memref<1x1x1x1xf32, #tpu.memory_space<vmem>>, vector<1x1x1x1xf32>
    tpu.vector_store %arg6[%c0_170, %c0_171, %c0_172, %c0_173], %607 {strides = array<i32>} : memref<1x1x1x1xf32, #tpu.memory_space<vmem>>, vector<1x1x1x1xf32>,
    return
  }
  func.func @transform_0(%arg0: i32, %arg1: i32, %arg2: memref<64xi32, #tpu.memory_space<smem>>) -> (i32, i32, i32) {
    %c0_i32 = arith.constant 0 : i32
    %c0_i32_0 = arith.constant 0 : i32
    %c0_i32_1 = arith.constant 0 : i32
    return %arg1, %c0_i32, %c0_i32_0 : i32, i32, i32
  }
  func.func @transform_1(%arg0: i32, %arg1: i32, %arg2: memref<64xi32, #tpu.memory_space<smem>>) -> (i32, i32, i32, i32) {
    %c0_i32 = arith.constant 0 : i32
    %c0_i32_0 = arith.constant 0 : i32
    %c0_i32_1 = arith.constant 0 : i32
    return %arg0, %arg1, %c0_i32, %c0_i32_0 : i32, i32, i32, i32
  }
  func.func @transform_2(%arg0: i32, %arg1: i32, %arg2: memref<64xi32, #tpu.memory_space<smem>>) -> (i32, i32, i32, i32) {
    %c0_i32 = arith.constant 0 : i32
    %c0_i32_0 = arith.constant 0 : i32
    %c0_i32_1 = arith.constant 0 : i32
    return %arg0, %arg1, %c0_i32, %c0_i32_0 : i32, i32, i32, i32
  }
  func.func @transform_3(%arg0: i32, %arg1: i32, %arg2: memref<64xi32, #tpu.memory_space<smem>>) -> (i32, i32, i32, i32) {
    %c0_i32 = arith.constant 0 : i32
    %c0_i32_0 = arith.constant 0 : i32
    %c0_i32_1 = arith.constant 0 : i32
    return %arg0, %arg1, %c0_i32, %c0_i32_0 : i32, i32, i32, i32
  }
}

</mosaic_0001>

<llo_original>
// kernel: lossv9_pallas.1
$region0: #{lossv9_pallas.1}
  #allocation0 [shape = 'u32[]', space=smem, size = 0x4, offset = 0x4, fixed_abs, tag = 'smem constant byte address 0x4 - core index']
  #allocation1 [shape = 'u32[144,128]{1,0:T(1,128)}', space=vmem, size = 0x12000, scoped, tag = 'internal scratch']
  #allocation2 [shape = 's32[1]{0}', space=sflag, size = 0x4, scoped, tag = 'scoped memory for lossv9_pallas.1']
  #allocation3 [shape = 'u8[512]{0}', space=smem, size = 0x200, scoped, tag = 'prefetched SMEM operand 0']
  %s0 = inlined_call_operand.vmem [shape: s32[64], index: 0, kind: input, shape index: {}]
  %s1 = inlined_call_operand.vmem [shape: f32[2,1,256], index: 1, kind: input, shape index: {}]
  %s2 = inlined_call_operand.vmem [shape: f32[4,2,48,128], index: 2, kind: input, shape index: {}]
  %s3 = inlined_call_operand.vmem [shape: f32[4,2,3,256], index: 3, kind: input, shape index: {}]
  %s4 = inlined_call_operand.vmem [shape: f32[4,2,1,1], index: 4, kind: output, shape index: {}]
  %s5 = sld [smem:[#allocation0]]
  $region45: #{lossv9_pallas.1} parent=0
    _
  %s7 = ssub.s32 1, %s5
  %s8 = scalar_select 0, %s7, %s5
  %s9 = sshll.u32 %s0, 4
  %s10 = int_to_ptr.vmem [resolvable:$true] %s9
  %12 = dma.vmem_to_smem %s10, 16, [#allocation3], [#allocation2]
  %13 = dma.done [#allocation2], 16
  %14 = sfence
  loop: start=0, step=1, limit=10
  $region2: #{lossv9_pallas.1} parent=0 // loop_pre_header
    _
  $region3: #{lossv9_pallas.1} parent=0 // loop_header
    %s16 = sphi 0, %s20
    %p17 = scmp.ge.s32.totalorder %s16, 10
    %s23 = sphi 0, %s35
    %s24 = sphi 0, %s31
    %s25 = sphi 0, %s23
    %s26 = sphi 0, %s24
    %s27 = sphi 0, %s25
    %s28 = sphi 0, %s26
    %s38 = sphi 0, %s40
    %s41 = sphi 0, %s38
    %s42 = sphi 0, %s41
    %s58 = sphi 0, %s42
    %s66 = sphi 0, %s68
    %s69 = sphi 0, %s66
    %s70 = sphi 0, %s69
    %s86 = sphi 0, %s70
    %s94 = sphi 0, %s96
    %s97 = sphi 0, %s94
    %s98 = sphi 0, %s97
    %s114 = sphi 0, %s98
    %s122 = sphi 0, %s124
    %s125 = sphi 0, %s122
    %s126 = sphi 0, %s125
    %s142 = sphi 0, %s126
  $region4: #{lossv9_pallas.1} parent=0 // loop_header_branch
    %19 = sbr.rel (%p17) target = $region8
  $region5: #{lossv9_pallas.1} parent=0 // loop_body
    %s21 = ssub.s32 %s16, 1
    %s22 = ssub.s32 %s16, 2
    %s29 = sadd.s32 1, %s24
    %p30 = scmp.ge.s32.totalorder %s29, 2
    %s31 = scalar_select %p30, 0, %s29
    %s32 = sadd.s32 1, %s23
    %s33 = scalar_select %p30, %s32, %s23
    %p34 = scmp.ge.s32.totalorder %s33, 4
    %s35 = scalar_select %p34, 0, %s33
    %s36 = ssub.s32 %s24, %s31
    %p37 = scmp.eq.s32.totalorder %s36, 0
    %s39 = sadd.s32 %s38, 1
    %s40 = scalar_select %p37, %s38, %s39
    %p43 = pneg %p37
    %p44 = scmp.eq.s32.totalorder %s16, 7
    %p45 = por %p43, %p44
    %p46 = scmp.ne.s32.totalorder %s38, %s41
    %p47 = scmp.eq.s32.totalorder %s16, 0
    %p48 = por %p46, %p47
    %p49 = scmp.ne.s32.totalorder %s38, %s41
    %p50 = scmp.eq.s32.totalorder %s21, 7
    %p51 = por %p49, %p50
    %p52 = scmp.ne.s32.totalorder %s41, %s42
    %p53 = scmp.eq.s32.totalorder %s21, 0
    %p54 = por %p52, %p53
    %p55 = scmp.ne.s32.totalorder %s41, %s42
    %p56 = scmp.eq.s32.totalorder %s22, 7
    %p57 = por %p55, %p56
    %p59 = scmp.ne.s32.totalorder %s42, %s58
    %p60 = scmp.eq.s32.totalorder %s22, 0
    %p61 = por %p59, %p60
    %s62 = ssub.s32 %s23, %s35
    %s63 = ssub.s32 %s24, %s31
    %s64 = sor.u32 %s62, %s63
    %p65 = scmp.eq.s32.totalorder %s64, 0
    %s67 = sadd.s32 %s66, 1
    %s68 = scalar_select %p65, %s66, %s67
    %p71 = pneg %p65
    %p72 = scmp.eq.s32.totalorder %s16, 7
    %p73 = por %p71, %p72
    %p74 = scmp.ne.s32.totalorder %s66, %s69
    %p75 = scmp.eq.s32.totalorder %s16, 0
    %p76 = por %p74, %p75
    %p77 = scmp.ne.s32.totalorder %s66, %s69
    %p78 = scmp.eq.s32.totalorder %s21, 7
    %p79 = por %p77, %p78
    %p80 = scmp.ne.s32.totalorder %s69, %s70
    %p81 = scmp.eq.s32.totalorder %s21, 0
    %p82 = por %p80, %p81
    %p83 = scmp.ne.s32.totalorder %s69, %s70
    %p84 = scmp.eq.s32.totalorder %s22, 7
    %p85 = por %p83, %p84
    %p87 = scmp.ne.s32.totalorder %s70, %s86
    %p88 = scmp.eq.s32.totalorder %s22, 0
    %p89 = por %p87, %p88
    %s90 = ssub.s32 %s23, %s35
    %s91 = ssub.s32 %s24, %s31
    %s92 = sor.u32 %s90, %s91
    %p93 = scmp.eq.s32.totalorder %s92, 0
    %s95 = sadd.s32 %s94, 1
    %s96 = scalar_select %p93, %s94, %s95
    %p99 = pneg %p93
    %p100 = scmp.eq.s32.totalorder %s16, 7
    %p101 = por %p99, %p100
    %p102 = scmp.ne.s32.totalorder %s94, %s97
    %p103 = scmp.eq.s32.totalorder %s16, 0
    %p104 = por %p102, %p103
    %p105 = scmp.ne.s32.totalorder %s94, %s97
    %p106 = scmp.eq.s32.totalorder %s21, 7
    %p107 = por %p105, %p106
    %p108 = scmp.ne.s32.totalorder %s97, %s98
    %p109 = scmp.eq.s32.totalorder %s21, 0
    %p110 = por %p108, %p109
    %p111 = scmp.ne.s32.totalorder %s97, %s98
    %p112 = scmp.eq.s32.totalorder %s22, 7
    %p113 = por %p111, %p112
    %p115 = scmp.ne.s32.totalorder %s98, %s114
    %p116 = scmp.eq.s32.totalorder %s22, 0
    %p117 = por %p115, %p116
    %s118 = ssub.s32 %s23, %s35
    %s119 = ssub.s32 %s24, %s31
    %s120 = sor.u32 %s118, %s119
    %p121 = scmp.eq.s32.totalorder %s120, 0
    %s123 = sadd.s32 %s122, 1
    %s124 = scalar_select %p121, %s122, %s123
    %p127 = pneg %p121
    %p128 = scmp.eq.s32.totalorder %s16, 7
    %p129 = por %p127, %p128
    %p130 = scmp.ne.s32.totalorder %s122, %s125
    %p131 = scmp.eq.s32.totalorder %s16, 0
    %p132 = por %p130, %p131
    %p133 = scmp.ne.s32.totalorder %s122, %s125
    %p134 = scmp.eq.s32.totalorder %s21, 7
    %p135 = por %p133, %p134
    %p136 = scmp.ne.s32.totalorder %s125, %s126
    %p137 = scmp.eq.s32.totalorder %s21, 0
    %p138 = por %p136, %p137
    %p139 = scmp.ne.s32.totalorder %s125, %s126
    %p140 = scmp.eq.s32.totalorder %s22, 7
    %p141 = por %p139, %p140
    %p143 = scmp.ne.s32.totalorder %s126, %s142
    %p144 = scmp.eq.s32.totalorder %s22, 0
    %p145 = por %p143, %p144
    %p146 = scmp.le.s32.totalorder 1, %s16
    %p147 = scmp.lt.s32.totalorder %s16, 9
    %p148 = pnand %p146, %p147
    %p149 = pneg %p148
    // Predicated region
    $region9: #{lossv9_pallas.1} parent=5 // pred_check
      _
    $region10: #{lossv9_pallas.1} parent=5 // pred_check_branch
      %151 = sbr.rel (%p148) target = $region12
    $region11: #{lossv9_pallas.1} parent=5 // pred_region
      %s152 = ssub.s32 %s16, 1
    $region12: #{lossv9_pallas.1} parent=5 // pred_fallthru
      _
    %p153 = scmp.lt.s32.totalorder %s16, 8
    // Predicated region
    $region13: #{lossv9_pallas.1} parent=5 // pred_check
      %p154 = pneg %p153
    $region14: #{lossv9_pallas.1} parent=5 // pred_check_branch
      %156 = sbr.rel (%p154) target = $region16
    $region15: #{lossv9_pallas.1} parent=5 // pred_region
      // Predicated region
      $region17: #{lossv9_pallas.1} parent=15 // pred_check
        %p157 = pneg %p48
      $region18: #{lossv9_pallas.1} parent=15 // pred_check_branch
        %159 = sbr.rel (%p157) target = $region20
      $region19: #{lossv9_pallas.1} parent=15 // pred_region
        %p160 = scmp.lt.s32.totalorder %s24, 1
        %s161 = scalar_select %p160, %s24, 1
        %s162 = smul.addr %s161, 2
        %s163 = scalar_lea.vmem %s1, %s162
      $region20: #{lossv9_pallas.1} parent=15 // pred_fallthru
        _
      // Predicated region
      $region21: #{lossv9_pallas.1} parent=15 // pred_check
        %p164 = pneg %p76
      $region22: #{lossv9_pallas.1} parent=15 // pred_check_branch
        %166 = sbr.rel (%p164) target = $region24
      $region23: #{lossv9_pallas.1} parent=15 // pred_region
        %p167 = scmp.lt.s32.totalorder %s23, 3
        %s168 = scalar_select %p167, %s23, 3
        %p169 = scmp.lt.s32.totalorder %s24, 1
        %s170 = scalar_select %p169, %s24, 1
        %s171 = smul.addr %s170, 6
        %s172 = smul.addr %s168, 12
        %s173 = sadd.s32 %s171, %s172
        %s174 = smul.addr %s173, 8
        %s175 = scalar_lea.vmem %s2, %s174
      $region24: #{lossv9_pallas.1} parent=15 // pred_fallthru
        _
      // Predicated region
      $region25: #{lossv9_pallas.1} parent=15 // pred_check
        %p176 = pneg %p104
      $region26: #{lossv9_pallas.1} parent=15 // pred_check_branch
        %178 = sbr.rel (%p176) target = $region28
      $region27: #{lossv9_pallas.1} parent=15 // pred_region
        %p179 = scmp.lt.s32.totalorder %s23, 3
        %s180 = scalar_select %p179, %s23, 3
        %p181 = scmp.lt.s32.totalorder %s24, 1
        %s182 = scalar_select %p181, %s24, 1
        %s183 = smul.addr %s182, 2
        %s184 = smul.addr %s180, 4
        %s185 = sadd.s32 %s183, %s184
        %s186 = smul.addr %s185, 4
        %s187 = scalar_lea.vmem %s3, %s186
      $region28: #{lossv9_pallas.1} parent=15 // pred_fallthru
        _
    $region16: #{lossv9_pallas.1} parent=5 // pred_fallthru
      _
    %p188 = scmp.le.s32.totalorder 1, %s16
    %p189 = scmp.lt.s32.totalorder %s16, 9
    %p190 = pnand %p188, %p189
    %p191 = pneg %p190
    // Predicated region
    $region29: #{lossv9_pallas.1} parent=5 // pred_check
      _
    $region30: #{lossv9_pallas.1} parent=5 // pred_check_branch
      %193 = sbr.rel (%p190) target = $region32
    $region31: #{lossv9_pallas.1} parent=5 // pred_region
      %s194 = ssub.s32 %s16, 1
      %p195 = scmp.lt.s32.totalorder %s26, 1
      %s196 = scalar_select %p195, %s26, 1
      %s197 = smul.addr %s196, 2
      %s198 = scalar_lea.vmem %s1, %s197
      %p199 = pneg %p54
      %p200 = pneg %p51
      %p201 = scmp.lt.s32.totalorder %s25, 3
      %s202 = scalar_select %p201, %s25, 3
      %p203 = scmp.lt.s32.totalorder %s26, 1
      %s204 = scalar_select %p203, %s26, 1
      %s205 = smul.addr %s204, 6
      %s206 = smul.addr %s202, 12
      %s207 = sadd.s32 %s205, %s206
      %s208 = smul.addr %s207, 8
      %s209 = scalar_lea.vmem %s2, %s208
      %p210 = pneg %p82
      %p211 = pneg %p79
      %p212 = scmp.lt.s32.totalorder %s25, 3
      %s213 = scalar_select %p212, %s25, 3
      %p214 = scmp.lt.s32.totalorder %s26, 1
      %s215 = scalar_select %p214, %s26, 1
      %s216 = smul.addr %s215, 2
      %s217 = smul.addr %s213, 4
      %s218 = sadd.s32 %s216, %s217
      %s219 = smul.addr %s218, 4
      %s220 = scalar_lea.vmem %s3, %s219
      %p221 = pneg %p110
      %p222 = pneg %p107
      %p223 = pneg %p138
      %p224 = pneg %p135
      %p225 = scmp.lt.s32.totalorder %s25, 3
      %s226 = scalar_select %p225, %s25, 3
      %p227 = scmp.lt.s32.totalorder %s26, 1
      %s228 = scalar_select %p227, %s26, 1
      %s229 = smul.addr %s226, 2
      %s230 = sadd.s32 %s228, %s229
      %s231 = scalar_lea.vmem %s4, %s230
      %p232 = scmp.lt.s32.totalorder %s26, 1
      %s233 = scalar_select %p232, %s26, 1
      %s234 = smul.addr %s233, 2
      %s235 = scalar_lea.vmem %s1, %s234
      %p236 = scmp.lt.s32.totalorder %s25, 3
      %s237 = scalar_select %p236, %s25, 3
      %p238 = scmp.lt.s32.totalorder %s26, 1
      %s239 = scalar_select %p238, %s26, 1
      %s240 = smul.addr %s239, 6
      %s241 = smul.addr %s237, 12
      %s242 = sadd.s32 %s240, %s241
      %s243 = smul.addr %s242, 8
      %s244 = scalar_lea.vmem %s2, %s243
      %p245 = scmp.lt.s32.totalorder %s25, 3
      %s246 = scalar_select %p245, %s25, 3
      %p247 = scmp.lt.s32.totalorder %s26, 1
      %s248 = scalar_select %p247, %s26, 1
      %s249 = smul.addr %s248, 2
      %s250 = smul.addr %s246, 4
      %s251 = sadd.s32 %s249, %s250
      %s252 = smul.addr %s251, 4
      %s253 = scalar_lea.vmem %s3, %s252
      %p254 = scmp.lt.s32.totalorder %s25, 3
      %s255 = scalar_select %p254, %s25, 3
      %p256 = scmp.lt.s32.totalorder %s26, 1
      %s257 = scalar_select %p256, %s26, 1
      %s258 = smul.addr %s255, 2
      %s259 = sadd.s32 %s257, %s258
      %s260 = scalar_lea.vmem %s4, %s259
      %v261 = vld [vmem:[%s235] sm:$0x3]
      %v262 = vld [vmem:[%s244] sm:$0xff]
      %v263 = vld [vmem:[%s244 + $0x8] sm:$0xff]
      %v264 = vld [vmem:[%s244 + $0x10] sm:$0xff]
      %v265 = vld [vmem:[%s244 + $0x18] sm:$0xff]
      %v266 = vld [vmem:[%s244 + $0x20] sm:$0xff]
      %v267 = vld [vmem:[%s244 + $0x28] sm:$0xff]
      %v268 = vld [vmem:[%s253] sm:$0x77]
      %v269 = vlaneseq
      %v270 = vand.u32 %v269, 127
      %v271 = vadd.s32 %v270, 128
      %v272 = vcvt.s32.f32 %v270
      %v273 = vcvt.s32.f32 %v271
      %v274 = vadd.f32 %v272, 0.5
      %v275 = vadd.f32 %v273, 0.5
      %v276 = vrcp.pop 16.0
      %v277 = vmul.f32 %v274, %v276
      %v278 = vmul.f32 %v275, %v276
      %v279 = vfloor.f32 %v277
      %v280 = vfloor.f32 %v278
      %v281 = vmul.f32 %v279, 16.0
      %v282 = vmul.f32 %v280, 16.0
      %v283 = vsub.f32 %v272, %v281
      %v284 = vsub.f32 %v273, %v282
      %v285 = vlaneseq
      %v286 = vshrl.u32 %v285, 7
      %v287 = vadd.s32 %v286, 8
      %v288 = vcvt.s32.f32 %v286
      %v289 = vcvt.s32.f32 %v287
      %s290 = smul.u32 %s25, 16
      %s291 = sld [smem:[#allocation3 + %s290]]
      %s292 = scvt.s32.f32 %s291
      %s293 = sadd.s32 %s290, 1
      %s294 = sld [smem:[#allocation3 + %s293]]
      %s295 = scvt.s32.f32 %s294
      %v296 = vstv %s295
      %v297 = vmul.f32 %v261, %v296
      %v299 = vlaneseq
      %v300 = vshrl.u32 %v299, 7
      %v301 = vsub.s32 0, %v300
      %v302 = vrot.slane %v297, %v301
      %v303 = vlaneseq
      %v304 = vshrl.u32 %v303, 7
      %v305 = vsub.s32 1, %v304
      %v306 = vrot.slane %v297, %v305
      %v309 = vsub.f32 %v283, %v302
      %v310 = vsub.f32 %v284, %v306
      %v311 = vmax.f32 %v309, 0.0
      %v312 = vmax.f32 %v310, 0.0
      %v313 = vmin.f32 %v311, 15.0
      %v314 = vmin.f32 %v312, 15.0
      %v315 = vstv %s292
      %v316 = vmul.f32 %v261, %v315
      %v318 = vlaneseq
      %v319 = vshrl.u32 %v318, 7
      %v320 = vsub.s32 0, %v319
      %v321 = vrot.slane %v316, %v320
      %v322 = vlaneseq
      %v323 = vshrl.u32 %v322, 7
      %v324 = vsub.s32 1, %v323
      %v325 = vrot.slane %v316, %v324
      %v328 = vsub.f32 %v279, %v321
      %v329 = vsub.f32 %v280, %v325
      %v330 = vmax.f32 %v328, 0.0
      %v331 = vmax.f32 %v329, 0.0
      %v332 = vmin.f32 %v330, 15.0
      %v333 = vmin.f32 %v331, 15.0
      %v334 = vlaneseq
      %v335 = vshrl.u32 %v334, 7
      %v336 = vsub.s32 0, %v335
      %v337 = vrot.slane %v313, %v336
      %v338 = vlaneseq
      %v339 = vshrl.u32 %v338, 7
      %v340 = vsub.s32 0, %v339
      %v341 = vrot.slane %v314, %v340
      %v342 = vsub.f32 %v337, %v288
      %v343 = vsub.f32 %v341, %v288
      %v344 = vsub.f32 %v337, %v289
      %v345 = vsub.f32 %v341, %v289
      %v346 = vand.u32 2147483647, %v342
      %v347 = vand.u32 2147483647, %v343
      %v348 = vand.u32 2147483647, %v344
      %v349 = vand.u32 2147483647, %v345
      %v350 = vsub.f32 1.0, %v346
      %v351 = vsub.f32 1.0, %v347
      %v352 = vsub.f32 1.0, %v348
      %v353 = vsub.f32 1.0, %v349
      %v354 = vmax.f32 %v350, 0.0
      %v355 = vmax.f32 %v351, 0.0
      %v356 = vmax.f32 %v352, 0.0
      %v357 = vmax.f32 %v353, 0.0
      %v358 = vlaneseq
      %v359 = vshrl.u32 %v358, 7
      %v360 = vsub.s32 0, %v359
      %v361 = vrot.slane %v332, %v360
      %v362 = vlaneseq
      %v363 = vshrl.u32 %v362, 7
      %v364 = vsub.s32 0, %v363
      %v365 = vrot.slane %v333, %v364
      %v366 = vsub.f32 %v361, %v288
      %v367 = vsub.f32 %v365, %v288
      %v368 = vsub.f32 %v361, %v289
      %v369 = vsub.f32 %v365, %v289
      %v370 = vand.u32 2147483647, %v366
      %v371 = vand.u32 2147483647, %v367
      %v372 = vand.u32 2147483647, %v368
      %v373 = vand.u32 2147483647, %v369
      %v374 = vsub.f32 1.0, %v370
      %v375 = vsub.f32 1.0, %v371
      %v376 = vsub.f32 1.0, %v372
      %v377 = vsub.f32 1.0, %v373
      %v378 = vmax.f32 %v374, 0.0
      %v379 = vmax.f32 %v375, 0.0
      %v380 = vmax.f32 %v376, 0.0
      %v381 = vmax.f32 %v377, 0.0
      %vm382 = vcmask 130048
      %v384 = vsel %vm382, %v262, 0
      %v387 = vsel %vm382, %v263, 0
      %v390 = vsel %vm382, %v264, 0
      %v393 = vsel %vm382, %v265, 0
      %v396 = vsel %vm382, %v266, 0
      %v399 = vsel %vm382, %v267, 0
      %401 = vmatprep.subr.mxu0 0.0
      %402 = vmatpush1.msra.mxu0 0.0
      %403 = vmatprep.subr.mxu0 0.0
      %404 = vmatpush1.msra.mxu0 0.0
      %405 = vmatprep.subr.mxu0 0.0
      %406 = vmatpush1.msra.mxu0 0.0
      %407 = vmatprep.subr.mxu0 0.0
      %408 = vmatpush1.msra.mxu0 0.0
      %409 = vmatprep.subr.mxu0 0.0
      %410 = vmatpush1.msra.mxu0 0.0
      %411 = vmatprep.subr.mxu0 0.0
      %412 = vmatpush1.msra.mxu0 0.0
      %413 = vmatprep.subr.mxu0 0.0
      %414 = vmatpush1.msra.mxu0 0.0
      %415 = vmatprep.subr.mxu0 0.0
      %416 = vmatpush1.msra.mxu0 0.0
      %417 = vmatprep.subr.mxu0 0.0
      %418 = vmatpush1.msra.mxu0 0.0
      %419 = vmatprep.subr.mxu0 0.0
      %420 = vmatpush1.msra.mxu0 0.0
      %421 = vmatprep.subr.mxu0 0.0
      %422 = vmatpush1.msra.mxu0 0.0
      %423 = vmatprep.subr.mxu0 0.0
      %424 = vmatpush1.msra.mxu0 0.0
      %425 = vmatprep.subr.mxu0 0.0
      %426 = vmatpush1.msra.mxu0 0.0
      %427 = vmatprep.subr.mxu0 0.0
      %428 = vmatpush1.msra.mxu0 0.0
      %429 = vmatprep.subr.mxu0 %v357
      %430 = vmatpush1.msra.mxu0 %v356
      %431 = vmatprep.subr.mxu0 %v355
      %432 = vmatpush1.msra.mxu0 %v354
      %433 = vmatprep.subr.mxu0 0.0
      %434 = vmatpush2.msra.mxu0 0.0
      %435 = vmatprep.subr.mxu0 0.0
      %436 = vmatpush2.msra.mxu0 0.0
      %437 = vmatprep.subr.mxu0 0.0
      %438 = vmatpush2.msra.mxu0 0.0
      %439 = vmatprep.subr.mxu0 0.0
      %440 = vmatpush2.msra.mxu0 0.0
      %441 = vmatprep.subr.mxu0 0.0
      %442 = vmatpush2.msra.mxu0 0.0
      %443 = vmatprep.subr.mxu0 0.0
      %444 = vmatpush2.msra.mxu0 0.0
      %445 = vmatprep.subr.mxu0 0.0
      %446 = vmatpush2.msra.mxu0 0.0
      %447 = vmatprep.subr.mxu0 0.0
      %448 = vmatpush2.msra.mxu0 0.0
      %449 = vmatprep.subr.mxu0 0.0
      %450 = vmatpush2.msra.mxu0 0.0
      %451 = vmatprep.subr.mxu0 0.0
      %452 = vmatpush2.msra.mxu0 0.0
      %453 = vmatprep.subr.mxu0 0.0
      %454 = vmatpush2.msra.mxu0 0.0
      %455 = vmatprep.subr.mxu0 0.0
      %456 = vmatpush2.msra.mxu0 0.0
      %457 = vmatprep.subr.mxu0 0.0
      %458 = vmatpush2.msra.mxu0 0.0
      %459 = vmatprep.subr.mxu0 0.0
      %460 = vmatpush2.msra.mxu0 0.0
      %461 = vmatprep.subr.mxu0 0.0
      %462 = vmatpush2.msra.mxu0 0.0
      %463 = vmatprep.subr.mxu0 0.0
      %464 = vmatpush2.msra.mxu0 0.0
      %465 = vmatprep.mubr.f32.mxu0 0.0
      %466 = vmatmul.mubr.f32.gmra.mxu0 %v384
      %v467 = vpop.f32.mrf.mxu0
      %v468 = vadd.f32 0.0, %v467
      %v469 = vpop.f32.mrf.mxu0
      %v470 = vadd.f32 0.0, %v469
      %471 = vmatprep.mubr.f32.mxu0 0.0
      %472 = vmatmul.mubr.f32.gmra.mxu0 %v387
      %v473 = vpop.f32.mrf.mxu0
      %v474 = vadd.f32 0.0, %v473
      %v475 = vpop.f32.mrf.mxu0
      %v476 = vadd.f32 0.0, %v475
      %477 = vmatprep.mubr.f32.mxu0 0.0
      %478 = vmatmul.mubr.f32.gmra.mxu0 %v390
      %v479 = vpop.f32.mrf.mxu0
      %v480 = vadd.f32 0.0, %v479
      %v481 = vpop.f32.mrf.mxu0
      %v482 = vadd.f32 0.0, %v481
      %483 = vmatprep.mubr.f32.mxu0 0.0
      %484 = vmatmul.mubr.f32.gmra.mxu0 %v393
      %v485 = vpop.f32.mrf.mxu0
      %v486 = vadd.f32 0.0, %v485
      %v487 = vpop.f32.mrf.mxu0
      %v488 = vadd.f32 0.0, %v487
      %489 = vmatprep.mubr.f32.mxu0 0.0
      %490 = vmatmul.mubr.f32.gmra.mxu0 %v396
      %v491 = vpop.f32.mrf.mxu0
      %v492 = vadd.f32 0.0, %v491
      %v493 = vpop.f32.mrf.mxu0
      %v494 = vadd.f32 0.0, %v493
      %495 = vmatprep.mubr.f32.mxu0 0.0
      %496 = vmatmul.mubr.f32.gmra.mxu0 %v399
      %v497 = vpop.f32.mrf.mxu0
      %v498 = vadd.f32 0.0, %v497
      %v499 = vpop.f32.mrf.mxu0
      %v500 = vadd.f32 0.0, %v499
      %501 = vdwg.mxu0
      %v502 = vmul.f32 %v468, %v378
      %v503 = vmul.f32 %v470, %v379
      %v504 = vmul.f32 %v474, %v380
      %v505 = vmul.f32 %v476, %v381
      %v506 = vadd.f32 %v502, %v504
      %v507 = vrot.slane %v506, 4
      %v508 = vadd.f32 %v506, %v507
      %v509 = vrot.slane %v508, 2
      %v510 = vadd.f32 %v508, %v509
      %v511 = vrot.slane %v510, 1
      %v512 = vadd.f32 %v510, %v511
      %v513 = vadd.f32 %v503, %v505
      %v514 = vrot.slane %v513, 4
      %v515 = vadd.f32 %v513, %v514
      %v516 = vrot.slane %v515, 2
      %v517 = vadd.f32 %v515, %v516
      %v518 = vrot.slane %v517, 1
      %v519 = vadd.f32 %v517, %v518
      %v520 = vmul.f32 %v480, %v378
      %v521 = vmul.f32 %v482, %v379
      %v522 = vmul.f32 %v486, %v380
      %v523 = vmul.f32 %v488, %v381
      %v524 = vadd.f32 %v520, %v522
      %v525 = vrot.slane %v524, 4
      %v526 = vadd.f32 %v524, %v525
      %v527 = vrot.slane %v526, 2
      %v528 = vadd.f32 %v526, %v527
      %v529 = vrot.slane %v528, 1
      %v530 = vadd.f32 %v528, %v529
      %v531 = vadd.f32 %v521, %v523
      %v532 = vrot.slane %v531, 4
      %v533 = vadd.f32 %v531, %v532
      %v534 = vrot.slane %v533, 2
      %v535 = vadd.f32 %v533, %v534
      %v536 = vrot.slane %v535, 1
      %v537 = vadd.f32 %v535, %v536
      %v538 = vmul.f32 %v492, %v378
      %v539 = vmul.f32 %v494, %v379
      %v540 = vmul.f32 %v498, %v380
      %v541 = vmul.f32 %v500, %v381
      %v542 = vadd.f32 %v538, %v540
      %v543 = vrot.slane %v542, 4
      %v544 = vadd.f32 %v542, %v543
      %v545 = vrot.slane %v544, 2
      %v546 = vadd.f32 %v544, %v545
      %v547 = vrot.slane %v546, 1
      %v548 = vadd.f32 %v546, %v547
      %v549 = vadd.f32 %v539, %v541
      %v550 = vrot.slane %v549, 4
      %v551 = vadd.f32 %v549, %v550
      %v552 = vrot.slane %v551, 2
      %v553 = vadd.f32 %v551, %v552
      %v554 = vrot.slane %v553, 1
      %v555 = vadd.f32 %v553, %v554
      %v557 = vlaneseq
      %v558 = vshrl.u32 %v557, 7
      %v559 = vsub.s32 0, %v558
      %v560 = vrot.slane %v268, %v559
      %v561 = vlaneseq
      %v562 = vshrl.u32 %v561, 7
      %v563 = vsub.s32 4, %v562
      %v564 = vrot.slane %v268, %v563
      %v567 = vsub.f32 %v512, %v560
      %v568 = vsub.f32 %v519, %v564
      %v569 = vand.u32 2147483647, %v567
      %v570 = vand.u32 2147483647, %v568
      %v571 = vmul.f32 %v569, 0.299
      %v572 = vmul.f32 %v570, 0.299
      %v573 = vlaneseq
      %v574 = vshrl.u32 %v573, 7
      %v575 = vsub.s32 1, %v574
      %v576 = vrot.slane %v268, %v575
      %v577 = vlaneseq
      %v578 = vshrl.u32 %v577, 7
      %v579 = vsub.s32 5, %v578
      %v580 = vrot.slane %v268, %v579
      %v583 = vsub.f32 %v530, %v576
      %v584 = vsub.f32 %v537, %v580
      %v585 = vand.u32 2147483647, %v583
      %v586 = vand.u32 2147483647, %v584
      %v587 = vmul.f32 %v585, 0.587
      %v588 = vmul.f32 %v586, 0.587
      %v589 = vadd.f32 %v571, %v587
      %v590 = vadd.f32 %v572, %v588
      %v591 = vlaneseq
      %v592 = vshrl.u32 %v591, 7
      %v593 = vsub.s32 2, %v592
      %v594 = vrot.slane %v268, %v593
      %v595 = vlaneseq
      %v596 = vshrl.u32 %v595, 7
      %v597 = vsub.s32 6, %v596
      %v598 = vrot.slane %v268, %v597
      %v601 = vsub.f32 %v548, %v594
      %v602 = vsub.f32 %v555, %v598
      %v603 = vand.u32 2147483647, %v601
      %v604 = vand.u32 2147483647, %v602
      %v605 = vmul.f32 %v603, 0.114
      %v606 = vmul.f32 %v604, 0.114
      %v607 = vadd.f32 %v589, %v605
      %v608 = vadd.f32 %v590, %v606
      %s609 = smul.u32 %s25, 8
      %s610 = sadd.s32 %s609, 1
      %s611 = smul.u32 %s610, 2
      %s612 = sld [smem:[#allocation3 + %s611]]
      %s613 = scvt.s32.f32 %s612
      %s614 = sadd.s32 %s611, 1
      %s615 = sld [smem:[#allocation3 + %s614]]
      %s616 = scvt.s32.f32 %s615
      %v617 = vstv %s616
      %v618 = vmul.f32 %v261, %v617
      %v620 = vlaneseq
      %v621 = vshrl.u32 %v620, 7
      %v622 = vsub.s32 0, %v621
      %v623 = vrot.slane %v618, %v622
      %v624 = vlaneseq
      %v625 = vshrl.u32 %v624, 7
      %v626 = vsub.s32 1, %v625
      %v627 = vrot.slane %v618, %v626
      %v630 = vsub.f32 %v283, %v623
      %v631 = vsub.f32 %v284, %v627
      %v632 = vmax.f32 %v630, 0.0
      %v633 = vmax.f32 %v631, 0.0
      %v634 = vmin.f32 %v632, 15.0
      %v635 = vmin.f32 %v633, 15.0
      %v636 = vstv %s613
      %v637 = vmul.f32 %v261, %v636
      %v639 = vlaneseq
      %v640 = vshrl.u32 %v639, 7
      %v641 = vsub.s32 0, %v640
      %v642 = vrot.slane %v637, %v641
      %v643 = vlaneseq
      %v644 = vshrl.u32 %v643, 7
      %v645 = vsub.s32 1, %v644
      %v646 = vrot.slane %v637, %v645
      %v649 = vsub.f32 %v279, %v642
      %v650 = vsub.f32 %v280, %v646
      %v651 = vmax.f32 %v649, 0.0
      %v652 = vmax.f32 %v650, 0.0
      %v653 = vmin.f32 %v651, 15.0
      %v654 = vmin.f32 %v652, 15.0
      %v655 = vlaneseq
      %v656 = vshrl.u32 %v655, 7
      %v657 = vsub.s32 0, %v656
      %v658 = vrot.slane %v634, %v657
      %v659 = vlaneseq
      %v660 = vshrl.u32 %v659, 7
      %v661 = vsub.s32 0, %v660
      %v662 = vrot.slane %v635, %v661
      %v663 = vsub.f32 %v658, %v288
      %v664 = vsub.f32 %v662, %v288
      %v665 = vsub.f32 %v658, %v289
      %v666 = vsub.f32 %v662, %v289
      %v667 = vand.u32 2147483647, %v663
      %v668 = vand.u32 2147483647, %v664
      %v669 = vand.u32 2147483647, %v665
      %v670 = vand.u32 2147483647, %v666
      %v671 = vsub.f32 1.0, %v667
      %v672 = vsub.f32 1.0, %v668
      %v673 = vsub.f32 1.0, %v669
      %v674 = vsub.f32 1.0, %v670
      %v675 = vmax.f32 %v671, 0.0
      %v676 = vmax.f32 %v672, 0.0
      %v677 = vmax.f32 %v673, 0.0
      %v678 = vmax.f32 %v674, 0.0
      %v679 = vlaneseq
      %v680 = vshrl.u32 %v679, 7
      %v681 = vsub.s32 0, %v680
      %v682 = vrot.slane %v653, %v681
      %v683 = vlaneseq
      %v684 = vshrl.u32 %v683, 7
      %v685 = vsub.s32 0, %v684
      %v686 = vrot.slane %v654, %v685
      %v687 = vsub.f32 %v682, %v288
      %v688 = vsub.f32 %v686, %v288
      %v689 = vsub.f32 %v682, %v289
      %v690 = vsub.f32 %v686, %v289
      %v691 = vand.u32 2147483647, %v687
      %v692 = vand.u32 2147483647, %v688
      %v693 = vand.u32 2147483647, %v689
      %v694 = vand.u32 2147483647, %v690
      %v695 = vsub.f32 1.0, %v691
      %v696 = vsub.f32 1.0, %v692
      %v697 = vsub.f32 1.0, %v693
      %v698 = vsub.f32 1.0, %v694
      %v699 = vmax.f32 %v695, 0.0
      %v700 = vmax.f32 %v696, 0.0
      %v701 = vmax.f32 %v697, 0.0
      %v702 = vmax.f32 %v698, 0.0
      %703 = vrot.lane.b32.xlu0 %v262, 112
      %v704 = vpop.permute.xlu0 %703
      %705 = vrot.lane.b32.xlu0 %v263, 112
      %v706 = vpop.permute.xlu0 %705
      %707 = vrot.lane.b32.xlu0 %v264, 112
      %v708 = vpop.permute.xlu0 %707
      %709 = vrot.lane.b32.xlu0 %v265, 112
      %v710 = vpop.permute.xlu0 %709
      %711 = vrot.lane.b32.xlu0 %v266, 112
      %v712 = vpop.permute.xlu0 %711
      %713 = vrot.lane.b32.xlu0 %v267, 112
      %v714 = vpop.permute.xlu0 %713
      %v715 = vsel %vm382, %v704, 0
      %v717 = vsel %vm382, %v706, 0
      %v719 = vsel %vm382, %v708, 0
      %v721 = vsel %vm382, %v710, 0
      %v723 = vsel %vm382, %v712, 0
      %v725 = vsel %vm382, %v714, 0
      %727 = vmatprep.subr.mxu0 0.0
      %728 = vmatpush1.msra.mxu0 0.0
      %729 = vmatprep.subr.mxu0 0.0
      %730 = vmatpush1.msra.mxu0 0.0
      %731 = vmatprep.subr.mxu0 0.0
      %732 = vmatpush1.msra.mxu0 0.0
      %733 = vmatprep.subr.mxu0 0.0
      %734 = vmatpush1.msra.mxu0 0.0
      %735 = vmatprep.subr.mxu0 0.0
      %736 = vmatpush1.msra.mxu0 0.0
      %737 = vmatprep.subr.mxu0 0.0
      %738 = vmatpush1.msra.mxu0 0.0
      %739 = vmatprep.subr.mxu0 0.0
      %740 = vmatpush1.msra.mxu0 0.0
      %741 = vmatprep.subr.mxu0 0.0
      %742 = vmatpush1.msra.mxu0 0.0
      %743 = vmatprep.subr.mxu0 0.0
      %744 = vmatpush1.msra.mxu0 0.0
      %745 = vmatprep.subr.mxu0 0.0
      %746 = vmatpush1.msra.mxu0 0.0
      %747 = vmatprep.subr.mxu0 0.0
      %748 = vmatpush1.msra.mxu0 0.0
      %749 = vmatprep.subr.mxu0 0.0
      %750 = vmatpush1.msra.mxu0 0.0
      %751 = vmatprep.subr.mxu0 0.0
      %752 = vmatpush1.msra.mxu0 0.0
      %753 = vmatprep.subr.mxu0 0.0
      %754 = vmatpush1.msra.mxu0 0.0
      %755 = vmatprep.subr.mxu0 %v678
      %756 = vmatpush1.msra.mxu0 %v677
      %757 = vmatprep.subr.mxu0 %v676
      %758 = vmatpush1.msra.mxu0 %v675
      %759 = vmatprep.subr.mxu0 0.0
      %760 = vmatpush2.msra.mxu0 0.0
      %761 = vmatprep.subr.mxu0 0.0
      %762 = vmatpush2.msra.mxu0 0.0
      %763 = vmatprep.subr.mxu0 0.0
      %764 = vmatpush2.msra.mxu0 0.0
      %765 = vmatprep.subr.mxu0 0.0
      %766 = vmatpush2.msra.mxu0 0.0
      %767 = vmatprep.subr.mxu0 0.0
      %768 = vmatpush2.msra.mxu0 0.0
      %769 = vmatprep.subr.mxu0 0.0
      %770 = vmatpush2.msra.mxu0 0.0
      %771 = vmatprep.subr.mxu0 0.0
      %772 = vmatpush2.msra.mxu0 0.0
      %773 = vmatprep.subr.mxu0 0.0
      %774 = vmatpush2.msra.mxu0 0.0
      %775 = vmatprep.subr.mxu0 0.0
      %776 = vmatpush2.msra.mxu0 0.0
      %777 = vmatprep.subr.mxu0 0.0
      %778 = vmatpush2.msra.mxu0 0.0
      %779 = vmatprep.subr.mxu0 0.0
      %780 = vmatpush2.msra.mxu0 0.0
      %781 = vmatprep.subr.mxu0 0.0
      %782 = vmatpush2.msra.mxu0 0.0
      %783 = vmatprep.subr.mxu0 0.0
      %784 = vmatpush2.msra.mxu0 0.0
      %785 = vmatprep.subr.mxu0 0.0
      %786 = vmatpush2.msra.mxu0 0.0
      %787 = vmatprep.subr.mxu0 0.0
      %788 = vmatpush2.msra.mxu0 0.0
      %789 = vmatprep.subr.mxu0 0.0
      %790 = vmatpush2.msra.mxu0 0.0
      %791 = vmatprep.mubr.f32.mxu0 0.0
      %792 = vmatmul.mubr.f32.gmra.mxu0 %v715
      %v793 = vpop.f32.mrf.mxu0
      %v794 = vadd.f32 0.0, %v793
      %v795 = vpop.f32.mrf.mxu0
      %v796 = vadd.f32 0.0, %v795
      %797 = vmatprep.mubr.f32.mxu0 0.0
      %798 = vmatmul.mubr.f32.gmra.mxu0 %v717
      %v799 = vpop.f32.mrf.mxu0
      %v800 = vadd.f32 0.0, %v799
      %v801 = vpop.f32.mrf.mxu0
      %v802 = vadd.f32 0.0, %v801
      %803 = vmatprep.mubr.f32.mxu0 0.0
      %804 = vmatmul.mubr.f32.gmra.mxu0 %v719
      %v805 = vpop.f32.mrf.mxu0
      %v806 = vadd.f32 0.0, %v805
      %v807 = vpop.f32.mrf.mxu0
      %v808 = vadd.f32 0.0, %v807
      %809 = vmatprep.mubr.f32.mxu0 0.0
      %810 = vmatmul.mubr.f32.gmra.mxu0 %v721
      %v811 = vpop.f32.mrf.mxu0
      %v812 = vadd.f32 0.0, %v811
      %v813 = vpop.f32.mrf.mxu0
      %v814 = vadd.f32 0.0, %v813
      %815 = vmatprep.mubr.f32.mxu0 0.0
      %816 = vmatmul.mubr.f32.gmra.mxu0 %v723
      %v817 = vpop.f32.mrf.mxu0
      %v818 = vadd.f32 0.0, %v817
      %v819 = vpop.f32.mrf.mxu0
      %v820 = vadd.f32 0.0, %v819
      %821 = vmatprep.mubr.f32.mxu0 0.0
      %822 = vmatmul.mubr.f32.gmra.mxu0 %v725
      %v823 = vpop.f32.mrf.mxu0
      %v824 = vadd.f32 0.0, %v823
      %v825 = vpop.f32.mrf.mxu0
      %v826 = vadd.f32 0.0, %v825
      %827 = vdwg.mxu0
      %v828 = vmul.f32 %v794, %v699
      %v829 = vmul.f32 %v796, %v700
      %v830 = vmul.f32 %v800, %v701
      %v831 = vmul.f32 %v802, %v702
      %v832 = vadd.f32 %v828, %v830
      %v833 = vrot.slane %v832, 4
      %v834 = vadd.f32 %v832, %v833
      %v835 = vrot.slane %v834, 2
      %v836 = vadd.f32 %v834, %v835
      %v837 = vrot.slane %v836, 1
      %v838 = vadd.f32 %v836, %v837
      %v839 = vadd.f32 %v829, %v831
      %v840 = vrot.slane %v839, 4
      %v841 = vadd.f32 %v839, %v840
      %v842 = vrot.slane %v841, 2
      %v843 = vadd.f32 %v841, %v842
      %v844 = vrot.slane %v843, 1
      %v845 = vadd.f32 %v843, %v844
      %v846 = vmul.f32 %v806, %v699
      %v847 = vmul.f32 %v808, %v700
      %v848 = vmul.f32 %v812, %v701
      %v849 = vmul.f32 %v814, %v702
      %v850 = vadd.f32 %v846, %v848
      %v851 = vrot.slane %v850, 4
      %v852 = vadd.f32 %v850, %v851
      %v853 = vrot.slane %v852, 2
      %v854 = vadd.f32 %v852, %v853
      %v855 = vrot.slane %v854, 1
      %v856 = vadd.f32 %v854, %v855
      %v857 = vadd.f32 %v847, %v849
      %v858 = vrot.slane %v857, 4
      %v859 = vadd.f32 %v857, %v858
      %v860 = vrot.slane %v859, 2
      %v861 = vadd.f32 %v859, %v860
      %v862 = vrot.slane %v861, 1
      %v863 = vadd.f32 %v861, %v862
      %v864 = vmul.f32 %v818, %v699
      %v865 = vmul.f32 %v820, %v700
      %v866 = vmul.f32 %v824, %v701
      %v867 = vmul.f32 %v826, %v702
      %v868 = vadd.f32 %v864, %v866
      %v869 = vrot.slane %v868, 4
      %v870 = vadd.f32 %v868, %v869
      %v871 = vrot.slane %v870, 2
      %v872 = vadd.f32 %v870, %v871
      %v873 = vrot.slane %v872, 1
      %v874 = vadd.f32 %v872, %v873
      %v875 = vadd.f32 %v865, %v867
      %v876 = vrot.slane %v875, 4
      %v877 = vadd.f32 %v875, %v876
      %v878 = vrot.slane %v877, 2
      %v879 = vadd.f32 %v877, %v878
      %v880 = vrot.slane %v879, 1
      %v881 = vadd.f32 %v879, %v880
      %v882 = vsub.f32 %v838, %v560
      %v883 = vsub.f32 %v845, %v564
      %v884 = vand.u32 2147483647, %v882
      %v885 = vand.u32 2147483647, %v883
      %v886 = vmul.f32 %v884, 0.299
      %v887 = vmul.f32 %v885, 0.299
      %v888 = vsub.f32 %v856, %v576
      %v889 = vsub.f32 %v863, %v580
      %v890 = vand.u32 2147483647, %v888
      %v891 = vand.u32 2147483647, %v889
      %v892 = vmul.f32 %v890, 0.587
      %v893 = vmul.f32 %v891, 0.587
      %v894 = vadd.f32 %v886, %v892
      %v895 = vadd.f32 %v887, %v893
      %v896 = vsub.f32 %v874, %v594
      %v897 = vsub.f32 %v881, %v598
      %v898 = vand.u32 2147483647, %v896
      %v899 = vand.u32 2147483647, %v897
      %v900 = vmul.f32 %v898, 0.114
      %v901 = vmul.f32 %v899, 0.114
      %v902 = vadd.f32 %v894, %v900
      %v903 = vadd.f32 %v895, %v901
      %s904 = sadd.s32 %s609, 2
      %s905 = smul.u32 %s904, 2
      %s906 = sld [smem:[#allocation3 + %s905]]
      %s907 = scvt.s32.f32 %s906
      %s908 = sadd.s32 %s905, 1
      %s909 = sld [smem:[#allocation3 + %s908]]
      %s910 = scvt.s32.f32 %s909
      %v911 = vstv %s910
      %v912 = vmul.f32 %v261, %v911
      %v914 = vlaneseq
      %v915 = vshrl.u32 %v914, 7
      %v916 = vsub.s32 0, %v915
      %v917 = vrot.slane %v912, %v916
      %v918 = vlaneseq
      %v919 = vshrl.u32 %v918, 7
      %v920 = vsub.s32 1, %v919
      %v921 = vrot.slane %v912, %v920
      %v924 = vsub.f32 %v283, %v917
      %v925 = vsub.f32 %v284, %v921
      %v926 = vmax.f32 %v924, 0.0
      %v927 = vmax.f32 %v925, 0.0
      %v928 = vmin.f32 %v926, 15.0
      %v929 = vmin.f32 %v927, 15.0
      %v930 = vstv %s907
      %v931 = vmul.f32 %v261, %v930
      %v933 = vlaneseq
      %v934 = vshrl.u32 %v933, 7
      %v935 = vsub.s32 0, %v934
      %v936 = vrot.slane %v931, %v935
      %v937 = vlaneseq
      %v938 = vshrl.u32 %v937, 7
      %v939 = vsub.s32 1, %v938
      %v940 = vrot.slane %v931, %v939
      %v943 = vsub.f32 %v279, %v936
      %v944 = vsub.f32 %v280, %v940
      %v945 = vmax.f32 %v943, 0.0
      %v946 = vmax.f32 %v944, 0.0
      %v947 = vmin.f32 %v945, 15.0
      %v948 = vmin.f32 %v946, 15.0
      %v949 = vlaneseq
      %v950 = vshrl.u32 %v949, 7
      %v951 = vsub.s32 0, %v950
      %v952 = vrot.slane %v928, %v951
      %v953 = vlaneseq
      %v954 = vshrl.u32 %v953, 7
      %v955 = vsub.s32 0, %v954
      %v956 = vrot.slane %v929, %v955
      %v957 = vsub.f32 %v952, %v288
      %v958 = vsub.f32 %v956, %v288
      %v959 = vsub.f32 %v952, %v289
      %v960 = vsub.f32 %v956, %v289
      %v961 = vand.u32 2147483647, %v957
      %v962 = vand.u32 2147483647, %v958
      %v963 = vand.u32 2147483647, %v959
      %v964 = vand.u32 2147483647, %v960
      %v965 = vsub.f32 1.0, %v961
      %v966 = vsub.f32 1.0, %v962
      %v967 = vsub.f32 1.0, %v963
      %v968 = vsub.f32 1.0, %v964
      %v969 = vmax.f32 %v965, 0.0
      %v970 = vmax.f32 %v966, 0.0
      %v971 = vmax.f32 %v967, 0.0
      %v972 = vmax.f32 %v968, 0.0
      %v973 = vlaneseq
      %v974 = vshrl.u32 %v973, 7
      %v975 = vsub.s32 0, %v974
      %v976 = vrot.slane %v947, %v975
      %v977 = vlaneseq
      %v978 = vshrl.u32 %v977, 7
      %v979 = vsub.s32 0, %v978
      %v980 = vrot.slane %v948, %v979
      %v981 = vsub.f32 %v976, %v288
      %v982 = vsub.f32 %v980, %v288
      %v983 = vsub.f32 %v976, %v289
      %v984 = vsub.f32 %v980, %v289
      %v985 = vand.u32 2147483647, %v981
      %v986 = vand.u32 2147483647, %v982
      %v987 = vand.u32 2147483647, %v983
      %v988 = vand.u32 2147483647, %v984
      %v989 = vsub.f32 1.0, %v985
      %v990 = vsub.f32 1.0, %v986
      %v991 = vsub.f32 1.0, %v987
      %v992 = vsub.f32 1.0, %v988
      %v993 = vmax.f32 %v989, 0.0
      %v994 = vmax.f32 %v990, 0.0
      %v995 = vmax.f32 %v991, 0.0
      %v996 = vmax.f32 %v992, 0.0
      %997 = vrot.lane.b32.xlu0 %v262, 96
      %v998 = vpop.permute.xlu0 %997
      %999 = vrot.lane.b32.xlu0 %v263, 96
      %v1000 = vpop.permute.xlu0 %999
      %1001 = vrot.lane.b32.xlu0 %v264, 96
      %v1002 = vpop.permute.xlu0 %1001
      %1003 = vrot.lane.b32.xlu0 %v265, 96
      %v1004 = vpop.permute.xlu0 %1003
      %1005 = vrot.lane.b32.xlu0 %v266, 96
      %v1006 = vpop.permute.xlu0 %1005
      %1007 = vrot.lane.b32.xlu0 %v267, 96
      %v1008 = vpop.permute.xlu0 %1007
      %v1009 = vsel %vm382, %v998, 0
      %v1011 = vsel %vm382, %v1000, 0
      %v1013 = vsel %vm382, %v1002, 0
      %v1015 = vsel %vm382, %v1004, 0
      %v1017 = vsel %vm382, %v1006, 0
      %v1019 = vsel %vm382, %v1008, 0
      %1021 = vmatprep.subr.mxu0 0.0
      %1022 = vmatpush1.msra.mxu0 0.0
      %1023 = vmatprep.subr.mxu0 0.0
      %1024 = vmatpush1.msra.mxu0 0.0
      %1025 = vmatprep.subr.mxu0 0.0
      %1026 = vmatpush1.msra.mxu0 0.0
      %1027 = vmatprep.subr.mxu0 0.0
      %1028 = vmatpush1.msra.mxu0 0.0
      %1029 = vmatprep.subr.mxu0 0.0
      %1030 = vmatpush1.msra.mxu0 0.0
      %1031 = vmatprep.subr.mxu0 0.0
      %1032 = vmatpush1.msra.mxu0 0.0
      %1033 = vmatprep.subr.mxu0 0.0
      %1034 = vmatpush1.msra.mxu0 0.0
      %1035 = vmatprep.subr.mxu0 0.0
      %1036 = vmatpush1.msra.mxu0 0.0
      %1037 = vmatprep.subr.mxu0 0.0
      %1038 = vmatpush1.msra.mxu0 0.0
      %1039 = vmatprep.subr.mxu0 0.0
      %1040 = vmatpush1.msra.mxu0 0.0
      %1041 = vmatprep.subr.mxu0 0.0
      %1042 = vmatpush1.msra.mxu0 0.0
      %1043 = vmatprep.subr.mxu0 0.0
      %1044 = vmatpush1.msra.mxu0 0.0
      %1045 = vmatprep.subr.mxu0 0.0
      %1046 = vmatpush1.msra.mxu0 0.0
      %1047 = vmatprep.subr.mxu0 0.0
      %1048 = vmatpush1.msra.mxu0 0.0
      %1049 = vmatprep.subr.mxu0 %v972
      %1050 = vmatpush1.msra.mxu0 %v971
      %1051 = vmatprep.subr.mxu0 %v970
      %1052 = vmatpush1.msra.mxu0 %v969
      %1053 = vmatprep.subr.mxu0 0.0
      %1054 = vmatpush2.msra.mxu0 0.0
      %1055 = vmatprep.subr.mxu0 0.0
      %1056 = vmatpush2.msra.mxu0 0.0
      %1057 = vmatprep.subr.mxu0 0.0
      %1058 = vmatpush2.msra.mxu0 0.0
      %1059 = vmatprep.subr.mxu0 0.0
      %1060 = vmatpush2.msra.mxu0 0.0
      %1061 = vmatprep.subr.mxu0 0.0
      %1062 = vmatpush2.msra.mxu0 0.0
      %1063 = vmatprep.subr.mxu0 0.0
      %1064 = vmatpush2.msra.mxu0 0.0
      %1065 = vmatprep.subr.mxu0 0.0
      %1066 = vmatpush2.msra.mxu0 0.0
      %1067 = vmatprep.subr.mxu0 0.0
      %1068 = vmatpush2.msra.mxu0 0.0
      %1069 = vmatprep.subr.mxu0 0.0
      %1070 = vmatpush2.msra.mxu0 0.0
      %1071 = vmatprep.subr.mxu0 0.0
      %1072 = vmatpush2.msra.mxu0 0.0
      %1073 = vmatprep.subr.mxu0 0.0
      %1074 = vmatpush2.msra.mxu0 0.0
      %1075 = vmatprep.subr.mxu0 0.0
      %1076 = vmatpush2.msra.mxu0 0.0
      %1077 = vmatprep.subr.mxu0 0.0
      %1078 = vmatpush2.msra.mxu0 0.0
      %1079 = vmatprep.subr.mxu0 0.0
      %1080 = vmatpush2.msra.mxu0 0.0
      %1081 = vmatprep.subr.mxu0 0.0
      %1082 = vmatpush2.msra.mxu0 0.0
      %1083 = vmatprep.subr.mxu0 0.0
      %1084 = vmatpush2.msra.mxu0 0.0
      %1085 = vmatprep.mubr.f32.mxu0 0.0
      %1086 = vmatmul.mubr.f32.gmra.mxu0 %v1009
      %v1087 = vpop.f32.mrf.mxu0
      %v1088 = vadd.f32 0.0, %v1087
      %v1089 = vpop.f32.mrf.mxu0
      %v1090 = vadd.f32 0.0, %v1089
      %1091 = vmatprep.mubr.f32.mxu0 0.0
      %1092 = vmatmul.mubr.f32.gmra.mxu0 %v1011
      %v1093 = vpop.f32.mrf.mxu0
      %v1094 = vadd.f32 0.0, %v1093
      %v1095 = vpop.f32.mrf.mxu0
      %v1096 = vadd.f32 0.0, %v1095
      %1097 = vmatprep.mubr.f32.mxu0 0.0
      %1098 = vmatmul.mubr.f32.gmra.mxu0 %v1013
      %v1099 = vpop.f32.mrf.mxu0
      %v1100 = vadd.f32 0.0, %v1099
      %v1101 = vpop.f32.mrf.mxu0
      %v1102 = vadd.f32 0.0, %v1101
      %1103 = vmatprep.mubr.f32.mxu0 0.0
      %1104 = vmatmul.mubr.f32.gmra.mxu0 %v1015
      %v1105 = vpop.f32.mrf.mxu0
      %v1106 = vadd.f32 0.0, %v1105
      %v1107 = vpop.f32.mrf.mxu0
      %v1108 = vadd.f32 0.0, %v1107
      %1109 = vmatprep.mubr.f32.mxu0 0.0
      %1110 = vmatmul.mubr.f32.gmra.mxu0 %v1017
      %v1111 = vpop.f32.mrf.mxu0
      %v1112 = vadd.f32 0.0, %v1111
      %v1113 = vpop.f32.mrf.mxu0
      %v1114 = vadd.f32 0.0, %v1113
      %1115 = vmatprep.mubr.f32.mxu0 0.0
      %1116 = vmatmul.mubr.f32.gmra.mxu0 %v1019
      %v1117 = vpop.f32.mrf.mxu0
      %v1118 = vadd.f32 0.0, %v1117
      %v1119 = vpop.f32.mrf.mxu0
      %v1120 = vadd.f32 0.0, %v1119
      %1121 = vdwg.mxu0
      %v1122 = vmul.f32 %v1088, %v993
      %v1123 = vmul.f32 %v1090, %v994
      %v1124 = vmul.f32 %v1094, %v995
      %v1125 = vmul.f32 %v1096, %v996
      %v1126 = vadd.f32 %v1122, %v1124
      %v1127 = vrot.slane %v1126, 4
      %v1128 = vadd.f32 %v1126, %v1127
      %v1129 = vrot.slane %v1128, 2
      %v1130 = vadd.f32 %v1128, %v1129
      %v1131 = vrot.slane %v1130, 1
      %v1132 = vadd.f32 %v1130, %v1131
      %v1133 = vadd.f32 %v1123, %v1125
      %v1134 = vrot.slane %v1133, 4
      %v1135 = vadd.f32 %v1133, %v1134
      %v1136 = vrot.slane %v1135, 2
      %v1137 = vadd.f32 %v1135, %v1136
      %v1138 = vrot.slane %v1137, 1
      %v1139 = vadd.f32 %v1137, %v1138
      %v1140 = vmul.f32 %v1100, %v993
      %v1141 = vmul.f32 %v1102, %v994
      %v1142 = vmul.f32 %v1106, %v995
      %v1143 = vmul.f32 %v1108, %v996
      %v1144 = vadd.f32 %v1140, %v1142
      %v1145 = vrot.slane %v1144, 4
      %v1146 = vadd.f32 %v1144, %v1145
      %v1147 = vrot.slane %v1146, 2
      %v1148 = vadd.f32 %v1146, %v1147
      %v1149 = vrot.slane %v1148, 1
      %v1150 = vadd.f32 %v1148, %v1149
      %v1151 = vadd.f32 %v1141, %v1143
      %v1152 = vrot.slane %v1151, 4
      %v1153 = vadd.f32 %v1151, %v1152
      %v1154 = vrot.slane %v1153, 2
      %v1155 = vadd.f32 %v1153, %v1154
      %v1156 = vrot.slane %v1155, 1
      %v1157 = vadd.f32 %v1155, %v1156
      %v1158 = vmul.f32 %v1112, %v993
      %v1159 = vmul.f32 %v1114, %v994
      %v1160 = vmul.f32 %v1118, %v995
      %v1161 = vmul.f32 %v1120, %v996
      %v1162 = vadd.f32 %v1158, %v1160
      %v1163 = vrot.slane %v1162, 4
      %v1164 = vadd.f32 %v1162, %v1163
      %v1165 = vrot.slane %v1164, 2
      %v1166 = vadd.f32 %v1164, %v1165
      %v1167 = vrot.slane %v1166, 1
      %v1168 = vadd.f32 %v1166, %v1167
      %v1169 = vadd.f32 %v1159, %v1161
      %v1170 = vrot.slane %v1169, 4
      %v1171 = vadd.f32 %v1169, %v1170
      %v1172 = vrot.slane %v1171, 2
      %v1173 = vadd.f32 %v1171, %v1172
      %v1174 = vrot.slane %v1173, 1
      %v1175 = vadd.f32 %v1173, %v1174
      %v1176 = vsub.f32 %v1132, %v560
      %v1177 = vsub.f32 %v1139, %v564
      %v1178 = vand.u32 2147483647, %v1176
      %v1179 = vand.u32 2147483647, %v1177
      %v1180 = vmul.f32 %v1178, 0.299
      %v1181 = vmul.f32 %v1179, 0.299
      %v1182 = vsub.f32 %v1150, %v576
      %v1183 = vsub.f32 %v1157, %v580
      %v1184 = vand.u32 2147483647, %v1182
      %v1185 = vand.u32 2147483647, %v1183
      %v1186 = vmul.f32 %v1184, 0.587
      %v1187 = vmul.f32 %v1185, 0.587
      %v1188 = vadd.f32 %v1180, %v1186
      %v1189 = vadd.f32 %v1181, %v1187
      %v1190 = vsub.f32 %v1168, %v594
      %v1191 = vsub.f32 %v1175, %v598
      %v1192 = vand.u32 2147483647, %v1190
      %v1193 = vand.u32 2147483647, %v1191
      %v1194 = vmul.f32 %v1192, 0.114
      %v1195 = vmul.f32 %v1193, 0.114
      %v1196 = vadd.f32 %v1188, %v1194
      %v1197 = vadd.f32 %v1189, %v1195
      %s1198 = sadd.s32 %s609, 3
      %s1199 = smul.u32 %s1198, 2
      %s1200 = sld [smem:[#allocation3 + %s1199]]
      %s1201 = scvt.s32.f32 %s1200
      %s1202 = sadd.s32 %s1199, 1
      %s1203 = sld [smem:[#allocation3 + %s1202]]
      %s1204 = scvt.s32.f32 %s1203
      %v1205 = vstv %s1204
      %v1206 = vmul.f32 %v261, %v1205
      %v1208 = vlaneseq
      %v1209 = vshrl.u32 %v1208, 7
      %v1210 = vsub.s32 0, %v1209
      %v1211 = vrot.slane %v1206, %v1210
      %v1212 = vlaneseq
      %v1213 = vshrl.u32 %v1212, 7
      %v1214 = vsub.s32 1, %v1213
      %v1215 = vrot.slane %v1206, %v1214
      %v1218 = vsub.f32 %v283, %v1211
      %v1219 = vsub.f32 %v284, %v1215
      %v1220 = vmax.f32 %v1218, 0.0
      %v1221 = vmax.f32 %v1219, 0.0
      %v1222 = vmin.f32 %v1220, 15.0
      %v1223 = vmin.f32 %v1221, 15.0
      %v1224 = vstv %s1201
      %v1225 = vmul.f32 %v261, %v1224
      %v1227 = vlaneseq
      %v1228 = vshrl.u32 %v1227, 7
      %v1229 = vsub.s32 0, %v1228
      %v1230 = vrot.slane %v1225, %v1229
      %v1231 = vlaneseq
      %v1232 = vshrl.u32 %v1231, 7
      %v1233 = vsub.s32 1, %v1232
      %v1234 = vrot.slane %v1225, %v1233
      %v1237 = vsub.f32 %v279, %v1230
      %v1238 = vsub.f32 %v280, %v1234
      %v1239 = vmax.f32 %v1237, 0.0
      %v1240 = vmax.f32 %v1238, 0.0
      %v1241 = vmin.f32 %v1239, 15.0
      %v1242 = vmin.f32 %v1240, 15.0
      %v1243 = vlaneseq
      %v1244 = vshrl.u32 %v1243, 7
      %v1245 = vsub.s32 0, %v1244
      %v1246 = vrot.slane %v1222, %v1245
      %v1247 = vlaneseq
      %v1248 = vshrl.u32 %v1247, 7
      %v1249 = vsub.s32 0, %v1248
      %v1250 = vrot.slane %v1223, %v1249
      %v1251 = vsub.f32 %v1246, %v288
      %v1252 = vsub.f32 %v1250, %v288
      %v1253 = vsub.f32 %v1246, %v289
      %v1254 = vsub.f32 %v1250, %v289
      %v1255 = vand.u32 2147483647, %v1251
      %v1256 = vand.u32 2147483647, %v1252
      %v1257 = vand.u32 2147483647, %v1253
      %v1258 = vand.u32 2147483647, %v1254
      %v1259 = vsub.f32 1.0, %v1255
      %v1260 = vsub.f32 1.0, %v1256
      %v1261 = vsub.f32 1.0, %v1257
      %v1262 = vsub.f32 1.0, %v1258
      %v1263 = vmax.f32 %v1259, 0.0
      %v1264 = vmax.f32 %v1260, 0.0
      %v1265 = vmax.f32 %v1261, 0.0
      %v1266 = vmax.f32 %v1262, 0.0
      %v1267 = vlaneseq
      %v1268 = vshrl.u32 %v1267, 7
      %v1269 = vsub.s32 0, %v1268
      %v1270 = vrot.slane %v1241, %v1269
      %v1271 = vlaneseq
      %v1272 = vshrl.u32 %v1271, 7
      %v1273 = vsub.s32 0, %v1272
      %v1274 = vrot.slane %v1242, %v1273
      %v1275 = vsub.f32 %v1270, %v288
      %v1276 = vsub.f32 %v1274, %v288
      %v1277 = vsub.f32 %v1270, %v289
      %v1278 = vsub.f32 %v1274, %v289
      %v1279 = vand.u32 2147483647, %v1275
      %v1280 = vand.u32 2147483647, %v1276
      %v1281 = vand.u32 2147483647, %v1277
      %v1282 = vand.u32 2147483647, %v1278
      %v1283 = vsub.f32 1.0, %v1279
      %v1284 = vsub.f32 1.0, %v1280
      %v1285 = vsub.f32 1.0, %v1281
      %v1286 = vsub.f32 1.0, %v1282
      %v1287 = vmax.f32 %v1283, 0.0
      %v1288 = vmax.f32 %v1284, 0.0
      %v1289 = vmax.f32 %v1285, 0.0
      %v1290 = vmax.f32 %v1286, 0.0
      %1291 = vrot.lane.b32.xlu0 %v262, 80
      %v1292 = vpop.permute.xlu0 %1291
      %1293 = vrot.lane.b32.xlu0 %v263, 80
      %v1294 = vpop.permute.xlu0 %1293
      %1295 = vrot.lane.b32.xlu0 %v264, 80
      %v1296 = vpop.permute.xlu0 %1295
      %1297 = vrot.lane.b32.xlu0 %v265, 80
      %v1298 = vpop.permute.xlu0 %1297
      %1299 = vrot.lane.b32.xlu0 %v266, 80
      %v1300 = vpop.permute.xlu0 %1299
      %1301 = vrot.lane.b32.xlu0 %v267, 80
      %v1302 = vpop.permute.xlu0 %1301
      %v1303 = vsel %vm382, %v1292, 0
      %v1305 = vsel %vm382, %v1294, 0
      %v1307 = vsel %vm382, %v1296, 0
      %v1309 = vsel %vm382, %v1298, 0
      %v1311 = vsel %vm382, %v1300, 0
      %v1313 = vsel %vm382, %v1302, 0
      %1315 = vmatprep.subr.mxu0 0.0
      %1316 = vmatpush1.msra.mxu0 0.0
      %1317 = vmatprep.subr.mxu0 0.0
      %1318 = vmatpush1.msra.mxu0 0.0
      %1319 = vmatprep.subr.mxu0 0.0
      %1320 = vmatpush1.msra.mxu0 0.0
      %1321 = vmatprep.subr.mxu0 0.0
      %1322 = vmatpush1.msra.mxu0 0.0
      %1323 = vmatprep.subr.mxu0 0.0
      %1324 = vmatpush1.msra.mxu0 0.0
      %1325 = vmatprep.subr.mxu0 0.0
      %1326 = vmatpush1.msra.mxu0 0.0
      %1327 = vmatprep.subr.mxu0 0.0
      %1328 = vmatpush1.msra.mxu0 0.0
      %1329 = vmatprep.subr.mxu0 0.0
      %1330 = vmatpush1.msra.mxu0 0.0
      %1331 = vmatprep.subr.mxu0 0.0
      %1332 = vmatpush1.msra.mxu0 0.0
      %1333 = vmatprep.subr.mxu0 0.0
      %1334 = vmatpush1.msra.mxu0 0.0
      %1335 = vmatprep.subr.mxu0 0.0
      %1336 = vmatpush1.msra.mxu0 0.0
      %1337 = vmatprep.subr.mxu0 0.0
      %1338 = vmatpush1.msra.mxu0 0.0
      %1339 = vmatprep.subr.mxu0 0.0
      %1340 = vmatpush1.msra.mxu0 0.0
      %1341 = vmatprep.subr.mxu0 0.0
      %1342 = vmatpush1.msra.mxu0 0.0
      %1343 = vmatprep.subr.mxu0 %v1266
      %1344 = vmatpush1.msra.mxu0 %v1265
      %1345 = vmatprep.subr.mxu0 %v1264
      %1346 = vmatpush1.msra.mxu0 %v1263
      %1347 = vmatprep.subr.mxu0 0.0
      %1348 = vmatpush2.msra.mxu0 0.0
      %1349 = vmatprep.subr.mxu0 0.0
      %1350 = vmatpush2.msra.mxu0 0.0
      %1351 = vmatprep.subr.mxu0 0.0
      %1352 = vmatpush2.msra.mxu0 0.0
      %1353 = vmatprep.subr.mxu0 0.0
      %1354 = vmatpush2.msra.mxu0 0.0
      %1355 = vmatprep.subr.mxu0 0.0
      %1356 = vmatpush2.msra.mxu0 0.0
      %1357 = vmatprep.subr.mxu0 0.0
      %1358 = vmatpush2.msra.mxu0 0.0
      %1359 = vmatprep.subr.mxu0 0.0
      %1360 = vmatpush2.msra.mxu0 0.0
      %1361 = vmatprep.subr.mxu0 0.0
      %1362 = vmatpush2.msra.mxu0 0.0
      %1363 = vmatprep.subr.mxu0 0.0
      %1364 = vmatpush2.msra.mxu0 0.0
      %1365 = vmatprep.subr.mxu0 0.0
      %1366 = vmatpush2.msra.mxu0 0.0
      %1367 = vmatprep.subr.mxu0 0.0
      %1368 = vmatpush2.msra.mxu0 0.0
      %1369 = vmatprep.subr.mxu0 0.0
      %1370 = vmatpush2.msra.mxu0 0.0
      %1371 = vmatprep.subr.mxu0 0.0
      %1372 = vmatpush2.msra.mxu0 0.0
      %1373 = vmatprep.subr.mxu0 0.0
      %1374 = vmatpush2.msra.mxu0 0.0
      %1375 = vmatprep.subr.mxu0 0.0
      %1376 = vmatpush2.msra.mxu0 0.0
      %1377 = vmatprep.subr.mxu0 0.0
      %1378 = vmatpush2.msra.mxu0 0.0
      %1379 = vmatprep.mubr.f32.mxu0 0.0
      %1380 = vmatmul.mubr.f32.gmra.mxu0 %v1303
      %v1381 = vpop.f32.mrf.mxu0
      %v1382 = vadd.f32 0.0, %v1381
      %v1383 = vpop.f32.mrf.mxu0
      %v1384 = vadd.f32 0.0, %v1383
      %1385 = vmatprep.mubr.f32.mxu0 0.0
      %1386 = vmatmul.mubr.f32.gmra.mxu0 %v1305
      %v1387 = vpop.f32.mrf.mxu0
      %v1388 = vadd.f32 0.0, %v1387
      %v1389 = vpop.f32.mrf.mxu0
      %v1390 = vadd.f32 0.0, %v1389
      %1391 = vmatprep.mubr.f32.mxu0 0.0
      %1392 = vmatmul.mubr.f32.gmra.mxu0 %v1307
      %v1393 = vpop.f32.mrf.mxu0
      %v1394 = vadd.f32 0.0, %v1393
      %v1395 = vpop.f32.mrf.mxu0
      %v1396 = vadd.f32 0.0, %v1395
      %1397 = vmatprep.mubr.f32.mxu0 0.0
      %1398 = vmatmul.mubr.f32.gmra.mxu0 %v1309
      %v1399 = vpop.f32.mrf.mxu0
      %v1400 = vadd.f32 0.0, %v1399
      %v1401 = vpop.f32.mrf.mxu0
      %v1402 = vadd.f32 0.0, %v1401
      %1403 = vmatprep.mubr.f32.mxu0 0.0
      %1404 = vmatmul.mubr.f32.gmra.mxu0 %v1311
      %v1405 = vpop.f32.mrf.mxu0
      %v1406 = vadd.f32 0.0, %v1405
      %v1407 = vpop.f32.mrf.mxu0
      %v1408 = vadd.f32 0.0, %v1407
      %1409 = vmatprep.mubr.f32.mxu0 0.0
      %1410 = vmatmul.mubr.f32.gmra.mxu0 %v1313
      %v1411 = vpop.f32.mrf.mxu0
      %v1412 = vadd.f32 0.0, %v1411
      %v1413 = vpop.f32.mrf.mxu0
      %v1414 = vadd.f32 0.0, %v1413
      %1415 = vdwg.mxu0
      %v1416 = vmul.f32 %v1382, %v1287
      %v1417 = vmul.f32 %v1384, %v1288
      %v1418 = vmul.f32 %v1388, %v1289
      %v1419 = vmul.f32 %v1390, %v1290
      %v1420 = vadd.f32 %v1416, %v1418
      %v1421 = vrot.slane %v1420, 4
      %v1422 = vadd.f32 %v1420, %v1421
      %v1423 = vrot.slane %v1422, 2
      %v1424 = vadd.f32 %v1422, %v1423
      %v1425 = vrot.slane %v1424, 1
      %v1426 = vadd.f32 %v1424, %v1425
      %v1427 = vadd.f32 %v1417, %v1419
      %v1428 = vrot.slane %v1427, 4
      %v1429 = vadd.f32 %v1427, %v1428
      %v1430 = vrot.slane %v1429, 2
      %v1431 = vadd.f32 %v1429, %v1430
      %v1432 = vrot.slane %v1431, 1
      %v1433 = vadd.f32 %v1431, %v1432
      %v1434 = vmul.f32 %v1394, %v1287
      %v1435 = vmul.f32 %v1396, %v1288
      %v1436 = vmul.f32 %v1400, %v1289
      %v1437 = vmul.f32 %v1402, %v1290
      %v1438 = vadd.f32 %v1434, %v1436
      %v1439 = vrot.slane %v1438, 4
      %v1440 = vadd.f32 %v1438, %v1439
      %v1441 = vrot.slane %v1440, 2
      %v1442 = vadd.f32 %v1440, %v1441
      %v1443 = vrot.slane %v1442, 1
      %v1444 = vadd.f32 %v1442, %v1443
      %v1445 = vadd.f32 %v1435, %v1437
      %v1446 = vrot.slane %v1445, 4
      %v1447 = vadd.f32 %v1445, %v1446
      %v1448 = vrot.slane %v1447, 2
      %v1449 = vadd.f32 %v1447, %v1448
      %v1450 = vrot.slane %v1449, 1
      %v1451 = vadd.f32 %v1449, %v1450
      %v1452 = vmul.f32 %v1406, %v1287
      %v1453 = vmul.f32 %v1408, %v1288
      %v1454 = vmul.f32 %v1412, %v1289
      %v1455 = vmul.f32 %v1414, %v1290
      %v1456 = vadd.f32 %v1452, %v1454
      %v1457 = vrot.slane %v1456, 4
      %v1458 = vadd.f32 %v1456, %v1457
      %v1459 = vrot.slane %v1458, 2
      %v1460 = vadd.f32 %v1458, %v1459
      %v1461 = vrot.slane %v1460, 1
      %v1462 = vadd.f32 %v1460, %v1461
      %v1463 = vadd.f32 %v1453, %v1455
      %v1464 = vrot.slane %v1463, 4
      %v1465 = vadd.f32 %v1463, %v1464
      %v1466 = vrot.slane %v1465, 2
      %v1467 = vadd.f32 %v1465, %v1466
      %v1468 = vrot.slane %v1467, 1
      %v1469 = vadd.f32 %v1467, %v1468
      %v1470 = vsub.f32 %v1426, %v560
      %v1471 = vsub.f32 %v1433, %v564
      %v1472 = vand.u32 2147483647, %v1470
      %v1473 = vand.u32 2147483647, %v1471
      %v1474 = vmul.f32 %v1472, 0.299
      %v1475 = vmul.f32 %v1473, 0.299
      %v1476 = vsub.f32 %v1444, %v576
      %v1477 = vsub.f32 %v1451, %v580
      %v1478 = vand.u32 2147483647, %v1476
      %v1479 = vand.u32 2147483647, %v1477
      %v1480 = vmul.f32 %v1478, 0.587
      %v1481 = vmul.f32 %v1479, 0.587
      %v1482 = vadd.f32 %v1474, %v1480
      %v1483 = vadd.f32 %v1475, %v1481
      %v1484 = vsub.f32 %v1462, %v594
      %v1485 = vsub.f32 %v1469, %v598
      %v1486 = vand.u32 2147483647, %v1484
      %v1487 = vand.u32 2147483647, %v1485
      %v1488 = vmul.f32 %v1486, 0.114
      %v1489 = vmul.f32 %v1487, 0.114
      %v1490 = vadd.f32 %v1482, %v1488
      %v1491 = vadd.f32 %v1483, %v1489
      %s1492 = sadd.s32 %s609, 4
      %s1493 = smul.u32 %s1492, 2
      %s1494 = sld [smem:[#allocation3 + %s1493]]
      %s1495 = scvt.s32.f32 %s1494
      %s1496 = sadd.s32 %s1493, 1
      %s1497 = sld [smem:[#allocation3 + %s1496]]
      %s1498 = scvt.s32.f32 %s1497
      %v1499 = vstv %s1498
      %v1500 = vmul.f32 %v261, %v1499
      %v1502 = vlaneseq
      %v1503 = vshrl.u32 %v1502, 7
      %v1504 = vsub.s32 0, %v1503
      %v1505 = vrot.slane %v1500, %v1504
      %v1506 = vlaneseq
      %v1507 = vshrl.u32 %v1506, 7
      %v1508 = vsub.s32 1, %v1507
      %v1509 = vrot.slane %v1500, %v1508
      %v1512 = vsub.f32 %v283, %v1505
      %v1513 = vsub.f32 %v284, %v1509
      %v1514 = vmax.f32 %v1512, 0.0
      %v1515 = vmax.f32 %v1513, 0.0
      %v1516 = vmin.f32 %v1514, 15.0
      %v1517 = vmin.f32 %v1515, 15.0
      %v1518 = vstv %s1495
      %v1519 = vmul.f32 %v261, %v1518
      %v1521 = vlaneseq
      %v1522 = vshrl.u32 %v1521, 7
      %v1523 = vsub.s32 0, %v1522
      %v1524 = vrot.slane %v1519, %v1523
      %v1525 = vlaneseq
      %v1526 = vshrl.u32 %v1525, 7
      %v1527 = vsub.s32 1, %v1526
      %v1528 = vrot.slane %v1519, %v1527
      %v1531 = vsub.f32 %v279, %v1524
      %v1532 = vsub.f32 %v280, %v1528
      %v1533 = vmax.f32 %v1531, 0.0
      %v1534 = vmax.f32 %v1532, 0.0
      %v1535 = vmin.f32 %v1533, 15.0
      %v1536 = vmin.f32 %v1534, 15.0
      %v1537 = vlaneseq
      %v1538 = vshrl.u32 %v1537, 7
      %v1539 = vsub.s32 0, %v1538
      %v1540 = vrot.slane %v1516, %v1539
      %v1541 = vlaneseq
      %v1542 = vshrl.u32 %v1541, 7
      %v1543 = vsub.s32 0, %v1542
      %v1544 = vrot.slane %v1517, %v1543
      %v1545 = vsub.f32 %v1540, %v288
      %v1546 = vsub.f32 %v1544, %v288
      %v1547 = vsub.f32 %v1540, %v289
      %v1548 = vsub.f32 %v1544, %v289
      %v1549 = vand.u32 2147483647, %v1545
      %v1550 = vand.u32 2147483647, %v1546
      %v1551 = vand.u32 2147483647, %v1547
      %v1552 = vand.u32 2147483647, %v1548
      %v1553 = vsub.f32 1.0, %v1549
      %v1554 = vsub.f32 1.0, %v1550
      %v1555 = vsub.f32 1.0, %v1551
      %v1556 = vsub.f32 1.0, %v1552
      %v1557 = vmax.f32 %v1553, 0.0
      %v1558 = vmax.f32 %v1554, 0.0
      %v1559 = vmax.f32 %v1555, 0.0
      %v1560 = vmax.f32 %v1556, 0.0
      %v1561 = vlaneseq
      %v1562 = vshrl.u32 %v1561, 7
      %v1563 = vsub.s32 0, %v1562
      %v1564 = vrot.slane %v1535, %v1563
      %v1565 = vlaneseq
      %v1566 = vshrl.u32 %v1565, 7
      %v1567 = vsub.s32 0, %v1566
      %v1568 = vrot.slane %v1536, %v1567
      %v1569 = vsub.f32 %v1564, %v288
      %v1570 = vsub.f32 %v1568, %v288
      %v1571 = vsub.f32 %v1564, %v289
      %v1572 = vsub.f32 %v1568, %v289
      %v1573 = vand.u32 2147483647, %v1569
      %v1574 = vand.u32 2147483647, %v1570
      %v1575 = vand.u32 2147483647, %v1571
      %v1576 = vand.u32 2147483647, %v1572
      %v1577 = vsub.f32 1.0, %v1573
      %v1578 = vsub.f32 1.0, %v1574
      %v1579 = vsub.f32 1.0, %v1575
      %v1580 = vsub.f32 1.0, %v1576
      %v1581 = vmax.f32 %v1577, 0.0
      %v1582 = vmax.f32 %v1578, 0.0
      %v1583 = vmax.f32 %v1579, 0.0
      %v1584 = vmax.f32 %v1580, 0.0
      %1585 = vrot.lane.b32.xlu0 %v262, 64
      %v1586 = vpop.permute.xlu0 %1585
      %1587 = vrot.lane.b32.xlu0 %v263, 64
      %v1588 = vpop.permute.xlu0 %1587
      %1589 = vrot.lane.b32.xlu0 %v264, 64
      %v1590 = vpop.permute.xlu0 %1589
      %1591 = vrot.lane.b32.xlu0 %v265, 64
      %v1592 = vpop.permute.xlu0 %1591
      %1593 = vrot.lane.b32.xlu0 %v266, 64
      %v1594 = vpop.permute.xlu0 %1593
      %1595 = vrot.lane.b32.xlu0 %v267, 64
      %v1596 = vpop.permute.xlu0 %1595
      %v1597 = vsel %vm382, %v1586, 0
      %v1599 = vsel %vm382, %v1588, 0
      %v1601 = vsel %vm382, %v1590, 0
      %v1603 = vsel %vm382, %v1592, 0
      %v1605 = vsel %vm382, %v1594, 0
      %v1607 = vsel %vm382, %v1596, 0
      %1609 = vmatprep.subr.mxu0 0.0
      %1610 = vmatpush1.msra.mxu0 0.0
      %1611 = vmatprep.subr.mxu0 0.0
      %1612 = vmatpush1.msra.mxu0 0.0
      %1613 = vmatprep.subr.mxu0 0.0
      %1614 = vmatpush1.msra.mxu0 0.0
      %1615 = vmatprep.subr.mxu0 0.0
      %1616 = vmatpush1.msra.mxu0 0.0
      %1617 = vmatprep.subr.mxu0 0.0
      %1618 = vmatpush1.msra.mxu0 0.0
      %1619 = vmatprep.subr.mxu0 0.0
      %1620 = vmatpush1.msra.mxu0 0.0
      %1621 = vmatprep.subr.mxu0 0.0
      %1622 = vmatpush1.msra.mxu0 0.0
      %1623 = vmatprep.subr.mxu0 0.0
      %1624 = vmatpush1.msra.mxu0 0.0
      %1625 = vmatprep.subr.mxu0 0.0
      %1626 = vmatpush1.msra.mxu0 0.0
      %1627 = vmatprep.subr.mxu0 0.0
      %1628 = vmatpush1.msra.mxu0 0.0
      %1629 = vmatprep.subr.mxu0 0.0
      %1630 = vmatpush1.msra.mxu0 0.0
      %1631 = vmatprep.subr.mxu0 0.0
      %1632 = vmatpush1.msra.mxu0 0.0
      %1633 = vmatprep.subr.mxu0 0.0
      %1634 = vmatpush1.msra.mxu0 0.0
      %1635 = vmatprep.subr.mxu0 0.0
      %1636 = vmatpush1.msra.mxu0 0.0
      %1637 = vmatprep.subr.mxu0 %v1560
      %1638 = vmatpush1.msra.mxu0 %v1559
      %1639 = vmatprep.subr.mxu0 %v1558
      %1640 = vmatpush1.msra.mxu0 %v1557
      %1641 = vmatprep.subr.mxu0 0.0
      %1642 = vmatpush2.msra.mxu0 0.0
      %1643 = vmatprep.subr.mxu0 0.0
      %1644 = vmatpush2.msra.mxu0 0.0
      %1645 = vmatprep.subr.mxu0 0.0
      %1646 = vmatpush2.msra.mxu0 0.0
      %1647 = vmatprep.subr.mxu0 0.0
      %1648 = vmatpush2.msra.mxu0 0.0
      %1649 = vmatprep.subr.mxu0 0.0
      %1650 = vmatpush2.msra.mxu0 0.0
      %1651 = vmatprep.subr.mxu0 0.0
      %1652 = vmatpush2.msra.mxu0 0.0
      %1653 = vmatprep.subr.mxu0 0.0
      %1654 = vmatpush2.msra.mxu0 0.0
      %1655 = vmatprep.subr.mxu0 0.0
      %1656 = vmatpush2.msra.mxu0 0.0
      %1657 = vmatprep.subr.mxu0 0.0
      %1658 = vmatpush2.msra.mxu0 0.0
      %1659 = vmatprep.subr.mxu0 0.0
      %1660 = vmatpush2.msra.mxu0 0.0
      %1661 = vmatprep.subr.mxu0 0.0
      %1662 = vmatpush2.msra.mxu0 0.0
      %1663 = vmatprep.subr.mxu0 0.0
      %1664 = vmatpush2.msra.mxu0 0.0
      %1665 = vmatprep.subr.mxu0 0.0
      %1666 = vmatpush2.msra.mxu0 0.0
      %1667 = vmatprep.subr.mxu0 0.0
      %1668 = vmatpush2.msra.mxu0 0.0
      %1669 = vmatprep.subr.mxu0 0.0
      %1670 = vmatpush2.msra.mxu0 0.0
      %1671 = vmatprep.subr.mxu0 0.0
      %1672 = vmatpush2.msra.mxu0 0.0
      %1673 = vmatprep.mubr.f32.mxu0 0.0
      %1674 = vmatmul.mubr.f32.gmra.mxu0 %v1597
      %v1675 = vpop.f32.mrf.mxu0
      %v1676 = vadd.f32 0.0, %v1675
      %v1677 = vpop.f32.mrf.mxu0
      %v1678 = vadd.f32 0.0, %v1677
      %1679 = vmatprep.mubr.f32.mxu0 0.0
      %1680 = vmatmul.mubr.f32.gmra.mxu0 %v1599
      %v1681 = vpop.f32.mrf.mxu0
      %v1682 = vadd.f32 0.0, %v1681
      %v1683 = vpop.f32.mrf.mxu0
      %v1684 = vadd.f32 0.0, %v1683
      %1685 = vmatprep.mubr.f32.mxu0 0.0
      %1686 = vmatmul.mubr.f32.gmra.mxu0 %v1601
      %v1687 = vpop.f32.mrf.mxu0
      %v1688 = vadd.f32 0.0, %v1687
      %v1689 = vpop.f32.mrf.mxu0
      %v1690 = vadd.f32 0.0, %v1689
      %1691 = vmatprep.mubr.f32.mxu0 0.0
      %1692 = vmatmul.mubr.f32.gmra.mxu0 %v1603
      %v1693 = vpop.f32.mrf.mxu0
      %v1694 = vadd.f32 0.0, %v1693
      %v1695 = vpop.f32.mrf.mxu0
      %v1696 = vadd.f32 0.0, %v1695
      %1697 = vmatprep.mubr.f32.mxu0 0.0
      %1698 = vmatmul.mubr.f32.gmra.mxu0 %v1605
      %v1699 = vpop.f32.mrf.mxu0
      %v1700 = vadd.f32 0.0, %v1699
      %v1701 = vpop.f32.mrf.mxu0
      %v1702 = vadd.f32 0.0, %v1701
      %1703 = vmatprep.mubr.f32.mxu0 0.0
      %1704 = vmatmul.mubr.f32.gmra.mxu0 %v1607
      %v1705 = vpop.f32.mrf.mxu0
      %v1706 = vadd.f32 0.0, %v1705
      %v1707 = vpop.f32.mrf.mxu0
      %v1708 = vadd.f32 0.0, %v1707
      %1709 = vdwg.mxu0
      %v1710 = vmul.f32 %v1676, %v1581
      %v1711 = vmul.f32 %v1678, %v1582
      %v1712 = vmul.f32 %v1682, %v1583
      %v1713 = vmul.f32 %v1684, %v1584
      %v1714 = vadd.f32 %v1710, %v1712
      %v1715 = vrot.slane %v1714, 4
      %v1716 = vadd.f32 %v1714, %v1715
      %v1717 = vrot.slane %v1716, 2
      %v1718 = vadd.f32 %v1716, %v1717
      %v1719 = vrot.slane %v1718, 1
      %v1720 = vadd.f32 %v1718, %v1719
      %v1721 = vadd.f32 %v1711, %v1713
      %v1722 = vrot.slane %v1721, 4
      %v1723 = vadd.f32 %v1721, %v1722
      %v1724 = vrot.slane %v1723, 2
      %v1725 = vadd.f32 %v1723, %v1724
      %v1726 = vrot.slane %v1725, 1
      %v1727 = vadd.f32 %v1725, %v1726
      %v1728 = vmul.f32 %v1688, %v1581
      %v1729 = vmul.f32 %v1690, %v1582
      %v1730 = vmul.f32 %v1694, %v1583
      %v1731 = vmul.f32 %v1696, %v1584
      %v1732 = vadd.f32 %v1728, %v1730
      %v1733 = vrot.slane %v1732, 4
      %v1734 = vadd.f32 %v1732, %v1733
      %v1735 = vrot.slane %v1734, 2
      %v1736 = vadd.f32 %v1734, %v1735
      %v1737 = vrot.slane %v1736, 1
      %v1738 = vadd.f32 %v1736, %v1737
      %v1739 = vadd.f32 %v1729, %v1731
      %v1740 = vrot.slane %v1739, 4
      %v1741 = vadd.f32 %v1739, %v1740
      %v1742 = vrot.slane %v1741, 2
      %v1743 = vadd.f32 %v1741, %v1742
      %v1744 = vrot.slane %v1743, 1
      %v1745 = vadd.f32 %v1743, %v1744
      %v1746 = vmul.f32 %v1700, %v1581
      %v1747 = vmul.f32 %v1702, %v1582
      %v1748 = vmul.f32 %v1706, %v1583
      %v1749 = vmul.f32 %v1708, %v1584
      %v1750 = vadd.f32 %v1746, %v1748
      %v1751 = vrot.slane %v1750, 4
      %v1752 = vadd.f32 %v1750, %v1751
      %v1753 = vrot.slane %v1752, 2
      %v1754 = vadd.f32 %v1752, %v1753
      %v1755 = vrot.slane %v1754, 1
      %v1756 = vadd.f32 %v1754, %v1755
      %v1757 = vadd.f32 %v1747, %v1749
      %v1758 = vrot.slane %v1757, 4
      %v1759 = vadd.f32 %v1757, %v1758
      %v1760 = vrot.slane %v1759, 2
      %v1761 = vadd.f32 %v1759, %v1760
      %v1762 = vrot.slane %v1761, 1
      %v1763 = vadd.f32 %v1761, %v1762
      %v1764 = vsub.f32 %v1720, %v560
      %v1765 = vsub.f32 %v1727, %v564
      %v1766 = vand.u32 2147483647, %v1764
      %v1767 = vand.u32 2147483647, %v1765
      %v1768 = vmul.f32 %v1766, 0.299
      %v1769 = vmul.f32 %v1767, 0.299
      %v1770 = vsub.f32 %v1738, %v576
      %v1771 = vsub.f32 %v1745, %v580
      %v1772 = vand.u32 2147483647, %v1770
      %v1773 = vand.u32 2147483647, %v1771
      %v1774 = vmul.f32 %v1772, 0.587
      %v1775 = vmul.f32 %v1773, 0.587
      %v1776 = vadd.f32 %v1768, %v1774
      %v1777 = vadd.f32 %v1769, %v1775
      %v1778 = vsub.f32 %v1756, %v594
      %v1779 = vsub.f32 %v1763, %v598
      %v1780 = vand.u32 2147483647, %v1778
      %v1781 = vand.u32 2147483647, %v1779
      %v1782 = vmul.f32 %v1780, 0.114
      %v1783 = vmul.f32 %v1781, 0.114
      %v1784 = vadd.f32 %v1776, %v1782
      %v1785 = vadd.f32 %v1777, %v1783
      %s1786 = sadd.s32 %s609, 5
      %s1787 = smul.u32 %s1786, 2
      %s1788 = sld [smem:[#allocation3 + %s1787]]
      %s1789 = scvt.s32.f32 %s1788
      %s1790 = sadd.s32 %s1787, 1
      %s1791 = sld [smem:[#allocation3 + %s1790]]
      %s1792 = scvt.s32.f32 %s1791
      %v1793 = vstv %s1792
      %v1794 = vmul.f32 %v261, %v1793
      %v1796 = vlaneseq
      %v1797 = vshrl.u32 %v1796, 7
      %v1798 = vsub.s32 0, %v1797
      %v1799 = vrot.slane %v1794, %v1798
      %v1800 = vlaneseq
      %v1801 = vshrl.u32 %v1800, 7
      %v1802 = vsub.s32 1, %v1801
      %v1803 = vrot.slane %v1794, %v1802
      %v1806 = vsub.f32 %v283, %v1799
      %v1807 = vsub.f32 %v284, %v1803
      %v1808 = vmax.f32 %v1806, 0.0
      %v1809 = vmax.f32 %v1807, 0.0
      %v1810 = vmin.f32 %v1808, 15.0
      %v1811 = vmin.f32 %v1809, 15.0
      %v1812 = vstv %s1789
      %v1813 = vmul.f32 %v261, %v1812
      %v1815 = vlaneseq
      %v1816 = vshrl.u32 %v1815, 7
      %v1817 = vsub.s32 0, %v1816
      %v1818 = vrot.slane %v1813, %v1817
      %v1819 = vlaneseq
      %v1820 = vshrl.u32 %v1819, 7
      %v1821 = vsub.s32 1, %v1820
      %v1822 = vrot.slane %v1813, %v1821
      %v1825 = vsub.f32 %v279, %v1818
      %v1826 = vsub.f32 %v280, %v1822
      %v1827 = vmax.f32 %v1825, 0.0
      %v1828 = vmax.f32 %v1826, 0.0
      %v1829 = vmin.f32 %v1827, 15.0
      %v1830 = vmin.f32 %v1828, 15.0
      %v1831 = vlaneseq
      %v1832 = vshrl.u32 %v1831, 7
      %v1833 = vsub.s32 0, %v1832
      %v1834 = vrot.slane %v1810, %v1833
      %v1835 = vlaneseq
      %v1836 = vshrl.u32 %v1835, 7
      %v1837 = vsub.s32 0, %v1836
      %v1838 = vrot.slane %v1811, %v1837
      %v1839 = vsub.f32 %v1834, %v288
      %v1840 = vsub.f32 %v1838, %v288
      %v1841 = vsub.f32 %v1834, %v289
      %v1842 = vsub.f32 %v1838, %v289
      %v1843 = vand.u32 2147483647, %v1839
      %v1844 = vand.u32 2147483647, %v1840
      %v1845 = vand.u32 2147483647, %v1841
      %v1846 = vand.u32 2147483647, %v1842
      %v1847 = vsub.f32 1.0, %v1843
      %v1848 = vsub.f32 1.0, %v1844
      %v1849 = vsub.f32 1.0, %v1845
      %v1850 = vsub.f32 1.0, %v1846
      %v1851 = vmax.f32 %v1847, 0.0
      %v1852 = vmax.f32 %v1848, 0.0
      %v1853 = vmax.f32 %v1849, 0.0
      %v1854 = vmax.f32 %v1850, 0.0
      %v1855 = vlaneseq
      %v1856 = vshrl.u32 %v1855, 7
      %v1857 = vsub.s32 0, %v1856
      %v1858 = vrot.slane %v1829, %v1857
      %v1859 = vlaneseq
      %v1860 = vshrl.u32 %v1859, 7
      %v1861 = vsub.s32 0, %v1860
      %v1862 = vrot.slane %v1830, %v1861
      %v1863 = vsub.f32 %v1858, %v288
      %v1864 = vsub.f32 %v1862, %v288
      %v1865 = vsub.f32 %v1858, %v289
      %v1866 = vsub.f32 %v1862, %v289
      %v1867 = vand.u32 2147483647, %v1863
      %v1868 = vand.u32 2147483647, %v1864
      %v1869 = vand.u32 2147483647, %v1865
      %v1870 = vand.u32 2147483647, %v1866
      %v1871 = vsub.f32 1.0, %v1867
      %v1872 = vsub.f32 1.0, %v1868
      %v1873 = vsub.f32 1.0, %v1869
      %v1874 = vsub.f32 1.0, %v1870
      %v1875 = vmax.f32 %v1871, 0.0
      %v1876 = vmax.f32 %v1872, 0.0
      %v1877 = vmax.f32 %v1873, 0.0
      %v1878 = vmax.f32 %v1874, 0.0
      %1879 = vrot.lane.b32.xlu0 %v262, 48
      %v1880 = vpop.permute.xlu0 %1879
      %1881 = vrot.lane.b32.xlu0 %v263, 48
      %v1882 = vpop.permute.xlu0 %1881
      %1883 = vrot.lane.b32.xlu0 %v264, 48
      %v1884 = vpop.permute.xlu0 %1883
      %1885 = vrot.lane.b32.xlu0 %v265, 48
      %v1886 = vpop.permute.xlu0 %1885
      %1887 = vrot.lane.b32.xlu0 %v266, 48
      %v1888 = vpop.permute.xlu0 %1887
      %1889 = vrot.lane.b32.xlu0 %v267, 48
      %v1890 = vpop.permute.xlu0 %1889
      %v1891 = vsel %vm382, %v1880, 0
      %v1893 = vsel %vm382, %v1882, 0
      %v1895 = vsel %vm382, %v1884, 0
      %v1897 = vsel %vm382, %v1886, 0
      %v1899 = vsel %vm382, %v1888, 0
      %v1901 = vsel %vm382, %v1890, 0
      %1903 = vmatprep.subr.mxu0 0.0
      %1904 = vmatpush1.msra.mxu0 0.0
      %1905 = vmatprep.subr.mxu0 0.0
      %1906 = vmatpush1.msra.mxu0 0.0
      %1907 = vmatprep.subr.mxu0 0.0
      %1908 = vmatpush1.msra.mxu0 0.0
      %1909 = vmatprep.subr.mxu0 0.0
      %1910 = vmatpush1.msra.mxu0 0.0
      %1911 = vmatprep.subr.mxu0 0.0
      %1912 = vmatpush1.msra.mxu0 0.0
      %1913 = vmatprep.subr.mxu0 0.0
      %1914 = vmatpush1.msra.mxu0 0.0
      %1915 = vmatprep.subr.mxu0 0.0
      %1916 = vmatpush1.msra.mxu0 0.0
      %1917 = vmatprep.subr.mxu0 0.0
      %1918 = vmatpush1.msra.mxu0 0.0
      %1919 = vmatprep.subr.mxu0 0.0
      %1920 = vmatpush1.msra.mxu0 0.0
      %1921 = vmatprep.subr.mxu0 0.0
      %1922 = vmatpush1.msra.mxu0 0.0
      %1923 = vmatprep.subr.mxu0 0.0
      %1924 = vmatpush1.msra.mxu0 0.0
      %1925 = vmatprep.subr.mxu0 0.0
      %1926 = vmatpush1.msra.mxu0 0.0
      %1927 = vmatprep.subr.mxu0 0.0
      %1928 = vmatpush1.msra.mxu0 0.0
      %1929 = vmatprep.subr.mxu0 0.0
      %1930 = vmatpush1.msra.mxu0 0.0
      %1931 = vmatprep.subr.mxu0 %v1854
      %1932 = vmatpush1.msra.mxu0 %v1853
      %1933 = vmatprep.subr.mxu0 %v1852
      %1934 = vmatpush1.msra.mxu0 %v1851
      %1935 = vmatprep.subr.mxu0 0.0
      %1936 = vmatpush2.msra.mxu0 0.0
      %1937 = vmatprep.subr.mxu0 0.0
      %1938 = vmatpush2.msra.mxu0 0.0
      %1939 = vmatprep.subr.mxu0 0.0
      %1940 = vmatpush2.msra.mxu0 0.0
      %1941 = vmatprep.subr.mxu0 0.0
      %1942 = vmatpush2.msra.mxu0 0.0
      %1943 = vmatprep.subr.mxu0 0.0
      %1944 = vmatpush2.msra.mxu0 0.0
      %1945 = vmatprep.subr.mxu0 0.0
      %1946 = vmatpush2.msra.mxu0 0.0
      %1947 = vmatprep.subr.mxu0 0.0
      %1948 = vmatpush2.msra.mxu0 0.0
      %1949 = vmatprep.subr.mxu0 0.0
      %1950 = vmatpush2.msra.mxu0 0.0
      %1951 = vmatprep.subr.mxu0 0.0
      %1952 = vmatpush2.msra.mxu0 0.0
      %1953 = vmatprep.subr.mxu0 0.0
      %1954 = vmatpush2.msra.mxu0 0.0
      %1955 = vmatprep.subr.mxu0 0.0
      %1956 = vmatpush2.msra.mxu0 0.0
      %1957 = vmatprep.subr.mxu0 0.0
      %1958 = vmatpush2.msra.mxu0 0.0
      %1959 = vmatprep.subr.mxu0 0.0
      %1960 = vmatpush2.msra.mxu0 0.0
      %1961 = vmatprep.subr.mxu0 0.0
      %1962 = vmatpush2.msra.mxu0 0.0
      %1963 = vmatprep.subr.mxu0 0.0
      %1964 = vmatpush2.msra.mxu0 0.0
      %1965 = vmatprep.subr.mxu0 0.0
      %1966 = vmatpush2.msra.mxu0 0.0
      %1967 = vmatprep.mubr.f32.mxu0 0.0
      %1968 = vmatmul.mubr.f32.gmra.mxu0 %v1891
      %v1969 = vpop.f32.mrf.mxu0
      %v1970 = vadd.f32 0.0, %v1969
      %v1971 = vpop.f32.mrf.mxu0
      %v1972 = vadd.f32 0.0, %v1971
      %1973 = vmatprep.mubr.f32.mxu0 0.0
      %1974 = vmatmul.mubr.f32.gmra.mxu0 %v1893
      %v1975 = vpop.f32.mrf.mxu0
      %v1976 = vadd.f32 0.0, %v1975
      %v1977 = vpop.f32.mrf.mxu0
      %v1978 = vadd.f32 0.0, %v1977
      %1979 = vmatprep.mubr.f32.mxu0 0.0
      %1980 = vmatmul.mubr.f32.gmra.mxu0 %v1895
      %v1981 = vpop.f32.mrf.mxu0
      %v1982 = vadd.f32 0.0, %v1981
      %v1983 = vpop.f32.mrf.mxu0
      %v1984 = vadd.f32 0.0, %v1983
      %1985 = vmatprep.mubr.f32.mxu0 0.0
      %1986 = vmatmul.mubr.f32.gmra.mxu0 %v1897
      %v1987 = vpop.f32.mrf.mxu0
      %v1988 = vadd.f32 0.0, %v1987
      %v1989 = vpop.f32.mrf.mxu0
      %v1990 = vadd.f32 0.0, %v1989
      %1991 = vmatprep.mubr.f32.mxu0 0.0
      %1992 = vmatmul.mubr.f32.gmra.mxu0 %v1899
      %v1993 = vpop.f32.mrf.mxu0
      %v1994 = vadd.f32 0.0, %v1993
      %v1995 = vpop.f32.mrf.mxu0
      %v1996 = vadd.f32 0.0, %v1995
      %1997 = vmatprep.mubr.f32.mxu0 0.0
      %1998 = vmatmul.mubr.f32.gmra.mxu0 %v1901
      %v1999 = vpop.f32.mrf.mxu0
      %v2000 = vadd.f32 0.0, %v1999
      %v2001 = vpop.f32.mrf.mxu0
      %v2002 = vadd.f32 0.0, %v2001
      %2003 = vdwg.mxu0
      %v2004 = vmul.f32 %v1970, %v1875
      %v2005 = vmul.f32 %v1972, %v1876
      %v2006 = vmul.f32 %v1976, %v1877
      %v2007 = vmul.f32 %v1978, %v1878
      %v2008 = vadd.f32 %v2004, %v2006
      %v2009 = vrot.slane %v2008, 4
      %v2010 = vadd.f32 %v2008, %v2009
      %v2011 = vrot.slane %v2010, 2
      %v2012 = vadd.f32 %v2010, %v2011
      %v2013 = vrot.slane %v2012, 1
      %v2014 = vadd.f32 %v2012, %v2013
      %v2015 = vadd.f32 %v2005, %v2007
      %v2016 = vrot.slane %v2015, 4
      %v2017 = vadd.f32 %v2015, %v2016
      %v2018 = vrot.slane %v2017, 2
      %v2019 = vadd.f32 %v2017, %v2018
      %v2020 = vrot.slane %v2019, 1
      %v2021 = vadd.f32 %v2019, %v2020
      %v2022 = vmul.f32 %v1982, %v1875
      %v2023 = vmul.f32 %v1984, %v1876
      %v2024 = vmul.f32 %v1988, %v1877
      %v2025 = vmul.f32 %v1990, %v1878
      %v2026 = vadd.f32 %v2022, %v2024
      %v2027 = vrot.slane %v2026, 4
      %v2028 = vadd.f32 %v2026, %v2027
      %v2029 = vrot.slane %v2028, 2
      %v2030 = vadd.f32 %v2028, %v2029
      %v2031 = vrot.slane %v2030, 1
      %v2032 = vadd.f32 %v2030, %v2031
      %v2033 = vadd.f32 %v2023, %v2025
      %v2034 = vrot.slane %v2033, 4
      %v2035 = vadd.f32 %v2033, %v2034
      %v2036 = vrot.slane %v2035, 2
      %v2037 = vadd.f32 %v2035, %v2036
      %v2038 = vrot.slane %v2037, 1
      %v2039 = vadd.f32 %v2037, %v2038
      %v2040 = vmul.f32 %v1994, %v1875
      %v2041 = vmul.f32 %v1996, %v1876
      %v2042 = vmul.f32 %v2000, %v1877
      %v2043 = vmul.f32 %v2002, %v1878
      %v2044 = vadd.f32 %v2040, %v2042
      %v2045 = vrot.slane %v2044, 4
      %v2046 = vadd.f32 %v2044, %v2045
      %v2047 = vrot.slane %v2046, 2
      %v2048 = vadd.f32 %v2046, %v2047
      %v2049 = vrot.slane %v2048, 1
      %v2050 = vadd.f32 %v2048, %v2049
      %v2051 = vadd.f32 %v2041, %v2043
      %v2052 = vrot.slane %v2051, 4
      %v2053 = vadd.f32 %v2051, %v2052
      %v2054 = vrot.slane %v2053, 2
      %v2055 = vadd.f32 %v2053, %v2054
      %v2056 = vrot.slane %v2055, 1
      %v2057 = vadd.f32 %v2055, %v2056
      %v2058 = vsub.f32 %v2014, %v560
      %v2059 = vsub.f32 %v2021, %v564
      %v2060 = vand.u32 2147483647, %v2058
      %v2061 = vand.u32 2147483647, %v2059
      %v2062 = vmul.f32 %v2060, 0.299
      %v2063 = vmul.f32 %v2061, 0.299
      %v2064 = vsub.f32 %v2032, %v576
      %v2065 = vsub.f32 %v2039, %v580
      %v2066 = vand.u32 2147483647, %v2064
      %v2067 = vand.u32 2147483647, %v2065
      %v2068 = vmul.f32 %v2066, 0.587
      %v2069 = vmul.f32 %v2067, 0.587
      %v2070 = vadd.f32 %v2062, %v2068
      %v2071 = vadd.f32 %v2063, %v2069
      %v2072 = vsub.f32 %v2050, %v594
      %v2073 = vsub.f32 %v2057, %v598
      %v2074 = vand.u32 2147483647, %v2072
      %v2075 = vand.u32 2147483647, %v2073
      %v2076 = vmul.f32 %v2074, 0.114
      %v2077 = vmul.f32 %v2075, 0.114
      %v2078 = vadd.f32 %v2070, %v2076
      %v2079 = vadd.f32 %v2071, %v2077
      %s2080 = sadd.s32 %s609, 6
      %s2081 = smul.u32 %s2080, 2
      %s2082 = sld [smem:[#allocation3 + %s2081]]
      %s2083 = scvt.s32.f32 %s2082
      %s2084 = sadd.s32 %s2081, 1
      %s2085 = sld [smem:[#allocation3 + %s2084]]
      %s2086 = scvt.s32.f32 %s2085
      %v2087 = vstv %s2086
      %v2088 = vmul.f32 %v261, %v2087
      %v2090 = vlaneseq
      %v2091 = vshrl.u32 %v2090, 7
      %v2092 = vsub.s32 0, %v2091
      %v2093 = vrot.slane %v2088, %v2092
      %v2094 = vlaneseq
      %v2095 = vshrl.u32 %v2094, 7
      %v2096 = vsub.s32 1, %v2095
      %v2097 = vrot.slane %v2088, %v2096
      %v2100 = vsub.f32 %v283, %v2093
      %v2101 = vsub.f32 %v284, %v2097
      %v2102 = vmax.f32 %v2100, 0.0
      %v2103 = vmax.f32 %v2101, 0.0
      %v2104 = vmin.f32 %v2102, 15.0
      %v2105 = vmin.f32 %v2103, 15.0
      %v2106 = vstv %s2083
      %v2107 = vmul.f32 %v261, %v2106
      %v2109 = vlaneseq
      %v2110 = vshrl.u32 %v2109, 7
      %v2111 = vsub.s32 0, %v2110
      %v2112 = vrot.slane %v2107, %v2111
      %v2113 = vlaneseq
      %v2114 = vshrl.u32 %v2113, 7
      %v2115 = vsub.s32 1, %v2114
      %v2116 = vrot.slane %v2107, %v2115
      %v2119 = vsub.f32 %v279, %v2112
      %v2120 = vsub.f32 %v280, %v2116
      %v2121 = vmax.f32 %v2119, 0.0
      %v2122 = vmax.f32 %v2120, 0.0
      %v2123 = vmin.f32 %v2121, 15.0
      %v2124 = vmin.f32 %v2122, 15.0
      %v2125 = vlaneseq
      %v2126 = vshrl.u32 %v2125, 7
      %v2127 = vsub.s32 0, %v2126
      %v2128 = vrot.slane %v2104, %v2127
      %v2129 = vlaneseq
      %v2130 = vshrl.u32 %v2129, 7
      %v2131 = vsub.s32 0, %v2130
      %v2132 = vrot.slane %v2105, %v2131
      %v2133 = vsub.f32 %v2128, %v288
      %v2134 = vsub.f32 %v2132, %v288
      %v2135 = vsub.f32 %v2128, %v289
      %v2136 = vsub.f32 %v2132, %v289
      %v2137 = vand.u32 2147483647, %v2133
      %v2138 = vand.u32 2147483647, %v2134
      %v2139 = vand.u32 2147483647, %v2135
      %v2140 = vand.u32 2147483647, %v2136
      %v2141 = vsub.f32 1.0, %v2137
      %v2142 = vsub.f32 1.0, %v2138
      %v2143 = vsub.f32 1.0, %v2139
      %v2144 = vsub.f32 1.0, %v2140
      %v2145 = vmax.f32 %v2141, 0.0
      %v2146 = vmax.f32 %v2142, 0.0
      %v2147 = vmax.f32 %v2143, 0.0
      %v2148 = vmax.f32 %v2144, 0.0
      %v2149 = vlaneseq
      %v2150 = vshrl.u32 %v2149, 7
      %v2151 = vsub.s32 0, %v2150
      %v2152 = vrot.slane %v2123, %v2151
      %v2153 = vlaneseq
      %v2154 = vshrl.u32 %v2153, 7
      %v2155 = vsub.s32 0, %v2154
      %v2156 = vrot.slane %v2124, %v2155
      %v2157 = vsub.f32 %v2152, %v288
      %v2158 = vsub.f32 %v2156, %v288
      %v2159 = vsub.f32 %v2152, %v289
      %v2160 = vsub.f32 %v2156, %v289
      %v2161 = vand.u32 2147483647, %v2157
      %v2162 = vand.u32 2147483647, %v2158
      %v2163 = vand.u32 2147483647, %v2159
      %v2164 = vand.u32 2147483647, %v2160
      %v2165 = vsub.f32 1.0, %v2161
      %v2166 = vsub.f32 1.0, %v2162
      %v2167 = vsub.f32 1.0, %v2163
      %v2168 = vsub.f32 1.0, %v2164
      %v2169 = vmax.f32 %v2165, 0.0
      %v2170 = vmax.f32 %v2166, 0.0
      %v2171 = vmax.f32 %v2167, 0.0
      %v2172 = vmax.f32 %v2168, 0.0
      %2173 = vrot.lane.b32.xlu0 %v262, 32
      %v2174 = vpop.permute.xlu0 %2173
      %2175 = vrot.lane.b32.xlu0 %v263, 32
      %v2176 = vpop.permute.xlu0 %2175
      %2177 = vrot.lane.b32.xlu0 %v264, 32
      %v2178 = vpop.permute.xlu0 %2177
      %2179 = vrot.lane.b32.xlu0 %v265, 32
      %v2180 = vpop.permute.xlu0 %2179
      %2181 = vrot.lane.b32.xlu0 %v266, 32
      %v2182 = vpop.permute.xlu0 %2181
      %2183 = vrot.lane.b32.xlu0 %v267, 32
      %v2184 = vpop.permute.xlu0 %2183
      %v2185 = vsel %vm382, %v2174, 0
      %v2187 = vsel %vm382, %v2176, 0
      %v2189 = vsel %vm382, %v2178, 0
      %v2191 = vsel %vm382, %v2180, 0
      %v2193 = vsel %vm382, %v2182, 0
      %v2195 = vsel %vm382, %v2184, 0
      %2197 = vmatprep.subr.mxu0 0.0
      %2198 = vmatpush1.msra.mxu0 0.0
      %2199 = vmatprep.subr.mxu0 0.0
      %2200 = vmatpush1.msra.mxu0 0.0
      %2201 = vmatprep.subr.mxu0 0.0
      %2202 = vmatpush1.msra.mxu0 0.0
      %2203 = vmatprep.subr.mxu0 0.0
      %2204 = vmatpush1.msra.mxu0 0.0
      %2205 = vmatprep.subr.mxu0 0.0
      %2206 = vmatpush1.msra.mxu0 0.0
      %2207 = vmatprep.subr.mxu0 0.0
      %2208 = vmatpush1.msra.mxu0 0.0
      %2209 = vmatprep.subr.mxu0 0.0
      %2210 = vmatpush1.msra.mxu0 0.0
      %2211 = vmatprep.subr.mxu0 0.0
      %2212 = vmatpush1.msra.mxu0 0.0
      %2213 = vmatprep.subr.mxu0 0.0
      %2214 = vmatpush1.msra.mxu0 0.0
      %2215 = vmatprep.subr.mxu0 0.0
      %2216 = vmatpush1.msra.mxu0 0.0
      %2217 = vmatprep.subr.mxu0 0.0
      %2218 = vmatpush1.msra.mxu0 0.0
      %2219 = vmatprep.subr.mxu0 0.0
      %2220 = vmatpush1.msra.mxu0 0.0
      %2221 = vmatprep.subr.mxu0 0.0
      %2222 = vmatpush1.msra.mxu0 0.0
      %2223 = vmatprep.subr.mxu0 0.0
      %2224 = vmatpush1.msra.mxu0 0.0
      %2225 = vmatprep.subr.mxu0 %v2148
      %2226 = vmatpush1.msra.mxu0 %v2147
      %2227 = vmatprep.subr.mxu0 %v2146
      %2228 = vmatpush1.msra.mxu0 %v2145
      %2229 = vmatprep.subr.mxu0 0.0
      %2230 = vmatpush2.msra.mxu0 0.0
      %2231 = vmatprep.subr.mxu0 0.0
      %2232 = vmatpush2.msra.mxu0 0.0
      %2233 = vmatprep.subr.mxu0 0.0
      %2234 = vmatpush2.msra.mxu0 0.0
      %2235 = vmatprep.subr.mxu0 0.0
      %2236 = vmatpush2.msra.mxu0 0.0
      %2237 = vmatprep.subr.mxu0 0.0
      %2238 = vmatpush2.msra.mxu0 0.0
      %2239 = vmatprep.subr.mxu0 0.0
      %2240 = vmatpush2.msra.mxu0 0.0
      %2241 = vmatprep.subr.mxu0 0.0
      %2242 = vmatpush2.msra.mxu0 0.0
      %2243 = vmatprep.subr.mxu0 0.0
      %2244 = vmatpush2.msra.mxu0 0.0
      %2245 = vmatprep.subr.mxu0 0.0
      %2246 = vmatpush2.msra.mxu0 0.0
      %2247 = vmatprep.subr.mxu0 0.0
      %2248 = vmatpush2.msra.mxu0 0.0
      %2249 = vmatprep.subr.mxu0 0.0
      %2250 = vmatpush2.msra.mxu0 0.0
      %2251 = vmatprep.subr.mxu0 0.0
      %2252 = vmatpush2.msra.mxu0 0.0
      %2253 = vmatprep.subr.mxu0 0.0
      %2254 = vmatpush2.msra.mxu0 0.0
      %2255 = vmatprep.subr.mxu0 0.0
      %2256 = vmatpush2.msra.mxu0 0.0
      %2257 = vmatprep.subr.mxu0 0.0
      %2258 = vmatpush2.msra.mxu0 0.0
      %2259 = vmatprep.subr.mxu0 0.0
      %2260 = vmatpush2.msra.mxu0 0.0
      %2261 = vmatprep.mubr.f32.mxu0 0.0
      %2262 = vmatmul.mubr.f32.gmra.mxu0 %v2185
      %v2263 = vpop.f32.mrf.mxu0
      %v2264 = vadd.f32 0.0, %v2263
      %v2265 = vpop.f32.mrf.mxu0
      %v2266 = vadd.f32 0.0, %v2265
      %2267 = vmatprep.mubr.f32.mxu0 0.0
      %2268 = vmatmul.mubr.f32.gmra.mxu0 %v2187
      %v2269 = vpop.f32.mrf.mxu0
      %v2270 = vadd.f32 0.0, %v2269
      %v2271 = vpop.f32.mrf.mxu0
      %v2272 = vadd.f32 0.0, %v2271
      %2273 = vmatprep.mubr.f32.mxu0 0.0
      %2274 = vmatmul.mubr.f32.gmra.mxu0 %v2189
      %v2275 = vpop.f32.mrf.mxu0
      %v2276 = vadd.f32 0.0, %v2275
      %v2277 = vpop.f32.mrf.mxu0
      %v2278 = vadd.f32 0.0, %v2277
      %2279 = vmatprep.mubr.f32.mxu0 0.0
      %2280 = vmatmul.mubr.f32.gmra.mxu0 %v2191
      %v2281 = vpop.f32.mrf.mxu0
      %v2282 = vadd.f32 0.0, %v2281
      %v2283 = vpop.f32.mrf.mxu0
      %v2284 = vadd.f32 0.0, %v2283
      %2285 = vmatprep.mubr.f32.mxu0 0.0
      %2286 = vmatmul.mubr.f32.gmra.mxu0 %v2193
      %v2287 = vpop.f32.mrf.mxu0
      %v2288 = vadd.f32 0.0, %v2287
      %v2289 = vpop.f32.mrf.mxu0
      %v2290 = vadd.f32 0.0, %v2289
      %2291 = vmatprep.mubr.f32.mxu0 0.0
      %2292 = vmatmul.mubr.f32.gmra.mxu0 %v2195
      %v2293 = vpop.f32.mrf.mxu0
      %v2294 = vadd.f32 0.0, %v2293
      %v2295 = vpop.f32.mrf.mxu0
      %v2296 = vadd.f32 0.0, %v2295
      %2297 = vdwg.mxu0
      %v2298 = vmul.f32 %v2264, %v2169
      %v2299 = vmul.f32 %v2266, %v2170
      %v2300 = vmul.f32 %v2270, %v2171
      %v2301 = vmul.f32 %v2272, %v2172
      %v2302 = vadd.f32 %v2298, %v2300
      %v2303 = vrot.slane %v2302, 4
      %v2304 = vadd.f32 %v2302, %v2303
      %v2305 = vrot.slane %v2304, 2
      %v2306 = vadd.f32 %v2304, %v2305
      %v2307 = vrot.slane %v2306, 1
      %v2308 = vadd.f32 %v2306, %v2307
      %v2309 = vadd.f32 %v2299, %v2301
      %v2310 = vrot.slane %v2309, 4
      %v2311 = vadd.f32 %v2309, %v2310
      %v2312 = vrot.slane %v2311, 2
      %v2313 = vadd.f32 %v2311, %v2312
      %v2314 = vrot.slane %v2313, 1
      %v2315 = vadd.f32 %v2313, %v2314
      %v2316 = vmul.f32 %v2276, %v2169
      %v2317 = vmul.f32 %v2278, %v2170
      %v2318 = vmul.f32 %v2282, %v2171
      %v2319 = vmul.f32 %v2284, %v2172
      %v2320 = vadd.f32 %v2316, %v2318
      %v2321 = vrot.slane %v2320, 4
      %v2322 = vadd.f32 %v2320, %v2321
      %v2323 = vrot.slane %v2322, 2
      %v2324 = vadd.f32 %v2322, %v2323
      %v2325 = vrot.slane %v2324, 1
      %v2326 = vadd.f32 %v2324, %v2325
      %v2327 = vadd.f32 %v2317, %v2319
      %v2328 = vrot.slane %v2327, 4
      %v2329 = vadd.f32 %v2327, %v2328
      %v2330 = vrot.slane %v2329, 2
      %v2331 = vadd.f32 %v2329, %v2330
      %v2332 = vrot.slane %v2331, 1
      %v2333 = vadd.f32 %v2331, %v2332
      %v2334 = vmul.f32 %v2288, %v2169
      %v2335 = vmul.f32 %v2290, %v2170
      %v2336 = vmul.f32 %v2294, %v2171
      %v2337 = vmul.f32 %v2296, %v2172
      %v2338 = vadd.f32 %v2334, %v2336
      %v2339 = vrot.slane %v2338, 4
      %v2340 = vadd.f32 %v2338, %v2339
      %v2341 = vrot.slane %v2340, 2
      %v2342 = vadd.f32 %v2340, %v2341
      %v2343 = vrot.slane %v2342, 1
      %v2344 = vadd.f32 %v2342, %v2343
      %v2345 = vadd.f32 %v2335, %v2337
      %v2346 = vrot.slane %v2345, 4
      %v2347 = vadd.f32 %v2345, %v2346
      %v2348 = vrot.slane %v2347, 2
      %v2349 = vadd.f32 %v2347, %v2348
      %v2350 = vrot.slane %v2349, 1
      %v2351 = vadd.f32 %v2349, %v2350
      %v2352 = vsub.f32 %v2308, %v560
      %v2353 = vsub.f32 %v2315, %v564
      %v2354 = vand.u32 2147483647, %v2352
      %v2355 = vand.u32 2147483647, %v2353
      %v2356 = vmul.f32 %v2354, 0.299
      %v2357 = vmul.f32 %v2355, 0.299
      %v2358 = vsub.f32 %v2326, %v576
      %v2359 = vsub.f32 %v2333, %v580
      %v2360 = vand.u32 2147483647, %v2358
      %v2361 = vand.u32 2147483647, %v2359
      %v2362 = vmul.f32 %v2360, 0.587
      %v2363 = vmul.f32 %v2361, 0.587
      %v2364 = vadd.f32 %v2356, %v2362
      %v2365 = vadd.f32 %v2357, %v2363
      %v2366 = vsub.f32 %v2344, %v594
      %v2367 = vsub.f32 %v2351, %v598
      %v2368 = vand.u32 2147483647, %v2366
      %v2369 = vand.u32 2147483647, %v2367
      %v2370 = vmul.f32 %v2368, 0.114
      %v2371 = vmul.f32 %v2369, 0.114
      %v2372 = vadd.f32 %v2364, %v2370
      %v2373 = vadd.f32 %v2365, %v2371
      %s2374 = sadd.s32 %s609, 7
      %s2375 = smul.u32 %s2374, 2
      %s2376 = sld [smem:[#allocation3 + %s2375]]
      %s2377 = scvt.s32.f32 %s2376
      %s2378 = sadd.s32 %s2375, 1
      %s2379 = sld [smem:[#allocation3 + %s2378]]
      %s2380 = scvt.s32.f32 %s2379
      %v2381 = vstv %s2380
      %v2382 = vmul.f32 %v261, %v2381
      %v2384 = vlaneseq
      %v2385 = vshrl.u32 %v2384, 7
      %v2386 = vsub.s32 0, %v2385
      %v2387 = vrot.slane %v2382, %v2386
      %v2388 = vlaneseq
      %v2389 = vshrl.u32 %v2388, 7
      %v2390 = vsub.s32 1, %v2389
      %v2391 = vrot.slane %v2382, %v2390
      %v2394 = vsub.f32 %v283, %v2387
      %v2395 = vsub.f32 %v284, %v2391
      %v2396 = vmax.f32 %v2394, 0.0
      %v2397 = vmax.f32 %v2395, 0.0
      %v2398 = vmin.f32 %v2396, 15.0
      %v2399 = vmin.f32 %v2397, 15.0
      %v2400 = vstv %s2377
      %v2401 = vmul.f32 %v261, %v2400
      %v2403 = vlaneseq
      %v2404 = vshrl.u32 %v2403, 7
      %v2405 = vsub.s32 0, %v2404
      %v2406 = vrot.slane %v2401, %v2405
      %v2407 = vlaneseq
      %v2408 = vshrl.u32 %v2407, 7
      %v2409 = vsub.s32 1, %v2408
      %v2410 = vrot.slane %v2401, %v2409
      %v2413 = vsub.f32 %v279, %v2406
      %v2414 = vsub.f32 %v280, %v2410
      %v2415 = vmax.f32 %v2413, 0.0
      %v2416 = vmax.f32 %v2414, 0.0
      %v2417 = vmin.f32 %v2415, 15.0
      %v2418 = vmin.f32 %v2416, 15.0
      %v2419 = vlaneseq
      %v2420 = vshrl.u32 %v2419, 7
      %v2421 = vsub.s32 0, %v2420
      %v2422 = vrot.slane %v2398, %v2421
      %v2423 = vlaneseq
      %v2424 = vshrl.u32 %v2423, 7
      %v2425 = vsub.s32 0, %v2424
      %v2426 = vrot.slane %v2399, %v2425
      %v2427 = vsub.f32 %v2422, %v288
      %v2428 = vsub.f32 %v2426, %v288
      %v2429 = vsub.f32 %v2422, %v289
      %v2430 = vsub.f32 %v2426, %v289
      %v2431 = vand.u32 2147483647, %v2427
      %v2432 = vand.u32 2147483647, %v2428
      %v2433 = vand.u32 2147483647, %v2429
      %v2434 = vand.u32 2147483647, %v2430
      %v2435 = vsub.f32 1.0, %v2431
      %v2436 = vsub.f32 1.0, %v2432
      %v2437 = vsub.f32 1.0, %v2433
      %v2438 = vsub.f32 1.0, %v2434
      %v2439 = vmax.f32 %v2435, 0.0
      %v2440 = vmax.f32 %v2436, 0.0
      %v2441 = vmax.f32 %v2437, 0.0
      %v2442 = vmax.f32 %v2438, 0.0
      %v2443 = vlaneseq
      %v2444 = vshrl.u32 %v2443, 7
      %v2445 = vsub.s32 0, %v2444
      %v2446 = vrot.slane %v2417, %v2445
      %v2447 = vlaneseq
      %v2448 = vshrl.u32 %v2447, 7
      %v2449 = vsub.s32 0, %v2448
      %v2450 = vrot.slane %v2418, %v2449
      %v2451 = vsub.f32 %v2446, %v288
      %v2452 = vsub.f32 %v2450, %v288
      %v2453 = vsub.f32 %v2446, %v289
      %v2454 = vsub.f32 %v2450, %v289
      %v2455 = vand.u32 2147483647, %v2451
      %v2456 = vand.u32 2147483647, %v2452
      %v2457 = vand.u32 2147483647, %v2453
      %v2458 = vand.u32 2147483647, %v2454
      %v2459 = vsub.f32 1.0, %v2455
      %v2460 = vsub.f32 1.0, %v2456
      %v2461 = vsub.f32 1.0, %v2457
      %v2462 = vsub.f32 1.0, %v2458
      %v2463 = vmax.f32 %v2459, 0.0
      %v2464 = vmax.f32 %v2460, 0.0
      %v2465 = vmax.f32 %v2461, 0.0
      %v2466 = vmax.f32 %v2462, 0.0
      %2467 = vrot.lane.b32.xlu0 %v262, 16
      %v2468 = vpop.permute.xlu0 %2467
      %2469 = vrot.lane.b32.xlu0 %v263, 16
      %v2470 = vpop.permute.xlu0 %2469
      %2471 = vrot.lane.b32.xlu0 %v264, 16
      %v2472 = vpop.permute.xlu0 %2471
      %2473 = vrot.lane.b32.xlu0 %v265, 16
      %v2474 = vpop.permute.xlu0 %2473
      %2475 = vrot.lane.b32.xlu0 %v266, 16
      %v2476 = vpop.permute.xlu0 %2475
      %2477 = vrot.lane.b32.xlu0 %v267, 16
      %v2478 = vpop.permute.xlu0 %2477
      %v2479 = vsel %vm382, %v2468, 0
      %v2481 = vsel %vm382, %v2470, 0
      %v2483 = vsel %vm382, %v2472, 0
      %v2485 = vsel %vm382, %v2474, 0
      %v2487 = vsel %vm382, %v2476, 0
      %v2489 = vsel %vm382, %v2478, 0
      %2491 = vmatprep.subr.mxu0 0.0
      %2492 = vmatpush1.msra.mxu0 0.0
      %2493 = vmatprep.subr.mxu0 0.0
      %2494 = vmatpush1.msra.mxu0 0.0
      %2495 = vmatprep.subr.mxu0 0.0
      %2496 = vmatpush1.msra.mxu0 0.0
      %2497 = vmatprep.subr.mxu0 0.0
      %2498 = vmatpush1.msra.mxu0 0.0
      %2499 = vmatprep.subr.mxu0 0.0
      %2500 = vmatpush1.msra.mxu0 0.0
      %2501 = vmatprep.subr.mxu0 0.0
      %2502 = vmatpush1.msra.mxu0 0.0
      %2503 = vmatprep.subr.mxu0 0.0
      %2504 = vmatpush1.msra.mxu0 0.0
      %2505 = vmatprep.subr.mxu0 0.0
      %2506 = vmatpush1.msra.mxu0 0.0
      %2507 = vmatprep.subr.mxu0 0.0
      %2508 = vmatpush1.msra.mxu0 0.0
      %2509 = vmatprep.subr.mxu0 0.0
      %2510 = vmatpush1.msra.mxu0 0.0
      %2511 = vmatprep.subr.mxu0 0.0
      %2512 = vmatpush1.msra.mxu0 0.0
      %2513 = vmatprep.subr.mxu0 0.0
      %2514 = vmatpush1.msra.mxu0 0.0
      %2515 = vmatprep.subr.mxu0 0.0
      %2516 = vmatpush1.msra.mxu0 0.0
      %2517 = vmatprep.subr.mxu0 0.0
      %2518 = vmatpush1.msra.mxu0 0.0
      %2519 = vmatprep.subr.mxu0 %v2442
      %2520 = vmatpush1.msra.mxu0 %v2441
      %2521 = vmatprep.subr.mxu0 %v2440
      %2522 = vmatpush1.msra.mxu0 %v2439
      %2523 = vmatprep.subr.mxu0 0.0
      %2524 = vmatpush2.msra.mxu0 0.0
      %2525 = vmatprep.subr.mxu0 0.0
      %2526 = vmatpush2.msra.mxu0 0.0
      %2527 = vmatprep.subr.mxu0 0.0
      %2528 = vmatpush2.msra.mxu0 0.0
      %2529 = vmatprep.subr.mxu0 0.0
      %2530 = vmatpush2.msra.mxu0 0.0
      %2531 = vmatprep.subr.mxu0 0.0
      %2532 = vmatpush2.msra.mxu0 0.0
      %2533 = vmatprep.subr.mxu0 0.0
      %2534 = vmatpush2.msra.mxu0 0.0
      %2535 = vmatprep.subr.mxu0 0.0
      %2536 = vmatpush2.msra.mxu0 0.0
      %2537 = vmatprep.subr.mxu0 0.0
      %2538 = vmatpush2.msra.mxu0 0.0
      %2539 = vmatprep.subr.mxu0 0.0
      %2540 = vmatpush2.msra.mxu0 0.0
      %2541 = vmatprep.subr.mxu0 0.0
      %2542 = vmatpush2.msra.mxu0 0.0
      %2543 = vmatprep.subr.mxu0 0.0
      %2544 = vmatpush2.msra.mxu0 0.0
      %2545 = vmatprep.subr.mxu0 0.0
      %2546 = vmatpush2.msra.mxu0 0.0
      %2547 = vmatprep.subr.mxu0 0.0
      %2548 = vmatpush2.msra.mxu0 0.0
      %2549 = vmatprep.subr.mxu0 0.0
      %2550 = vmatpush2.msra.mxu0 0.0
      %2551 = vmatprep.subr.mxu0 0.0
      %2552 = vmatpush2.msra.mxu0 0.0
      %2553 = vmatprep.subr.mxu0 0.0
      %2554 = vmatpush2.msra.mxu0 0.0
      %2555 = vmatprep.mubr.f32.mxu0 0.0
      %2556 = vmatmul.mubr.f32.gmra.mxu0 %v2479
      %v2557 = vpop.f32.mrf.mxu0
      %v2558 = vadd.f32 0.0, %v2557
      %v2559 = vpop.f32.mrf.mxu0
      %v2560 = vadd.f32 0.0, %v2559
      %2561 = vmatprep.mubr.f32.mxu0 0.0
      %2562 = vmatmul.mubr.f32.gmra.mxu0 %v2481
      %v2563 = vpop.f32.mrf.mxu0
      %v2564 = vadd.f32 0.0, %v2563
      %v2565 = vpop.f32.mrf.mxu0
      %v2566 = vadd.f32 0.0, %v2565
      %2567 = vmatprep.mubr.f32.mxu0 0.0
      %2568 = vmatmul.mubr.f32.gmra.mxu0 %v2483
      %v2569 = vpop.f32.mrf.mxu0
      %v2570 = vadd.f32 0.0, %v2569
      %v2571 = vpop.f32.mrf.mxu0
      %v2572 = vadd.f32 0.0, %v2571
      %2573 = vmatprep.mubr.f32.mxu0 0.0
      %2574 = vmatmul.mubr.f32.gmra.mxu0 %v2485
      %v2575 = vpop.f32.mrf.mxu0
      %v2576 = vadd.f32 0.0, %v2575
      %v2577 = vpop.f32.mrf.mxu0
      %v2578 = vadd.f32 0.0, %v2577
      %2579 = vmatprep.mubr.f32.mxu0 0.0
      %2580 = vmatmul.mubr.f32.gmra.mxu0 %v2487
      %v2581 = vpop.f32.mrf.mxu0
      %v2582 = vadd.f32 0.0, %v2581
      %v2583 = vpop.f32.mrf.mxu0
      %v2584 = vadd.f32 0.0, %v2583
      %2585 = vmatprep.mubr.f32.mxu0 0.0
      %2586 = vmatmul.mubr.f32.gmra.mxu0 %v2489
      %v2587 = vpop.f32.mrf.mxu0
      %v2588 = vadd.f32 0.0, %v2587
      %v2589 = vpop.f32.mrf.mxu0
      %v2590 = vadd.f32 0.0, %v2589
      %2591 = vdwg.mxu0
      %v2592 = vmul.f32 %v2558, %v2463
      %v2593 = vmul.f32 %v2560, %v2464
      %v2594 = vmul.f32 %v2564, %v2465
      %v2595 = vmul.f32 %v2566, %v2466
      %v2596 = vadd.f32 %v2592, %v2594
      %v2597 = vrot.slane %v2596, 4
      %v2598 = vadd.f32 %v2596, %v2597
      %v2599 = vrot.slane %v2598, 2
      %v2600 = vadd.f32 %v2598, %v2599
      %v2601 = vrot.slane %v2600, 1
      %v2602 = vadd.f32 %v2600, %v2601
      %v2603 = vadd.f32 %v2593, %v2595
      %v2604 = vrot.slane %v2603, 4
      %v2605 = vadd.f32 %v2603, %v2604
      %v2606 = vrot.slane %v2605, 2
      %v2607 = vadd.f32 %v2605, %v2606
      %v2608 = vrot.slane %v2607, 1
      %v2609 = vadd.f32 %v2607, %v2608
      %v2610 = vmul.f32 %v2570, %v2463
      %v2611 = vmul.f32 %v2572, %v2464
      %v2612 = vmul.f32 %v2576, %v2465
      %v2613 = vmul.f32 %v2578, %v2466
      %v2614 = vadd.f32 %v2610, %v2612
      %v2615 = vrot.slane %v2614, 4
      %v2616 = vadd.f32 %v2614, %v2615
      %v2617 = vrot.slane %v2616, 2
      %v2618 = vadd.f32 %v2616, %v2617
      %v2619 = vrot.slane %v2618, 1
      %v2620 = vadd.f32 %v2618, %v2619
      %v2621 = vadd.f32 %v2611, %v2613
      %v2622 = vrot.slane %v2621, 4
      %v2623 = vadd.f32 %v2621, %v2622
      %v2624 = vrot.slane %v2623, 2
      %v2625 = vadd.f32 %v2623, %v2624
      %v2626 = vrot.slane %v2625, 1
      %v2627 = vadd.f32 %v2625, %v2626
      %v2628 = vmul.f32 %v2582, %v2463
      %v2629 = vmul.f32 %v2584, %v2464
      %v2630 = vmul.f32 %v2588, %v2465
      %v2631 = vmul.f32 %v2590, %v2466
      %v2632 = vadd.f32 %v2628, %v2630
      %v2633 = vrot.slane %v2632, 4
      %v2634 = vadd.f32 %v2632, %v2633
      %v2635 = vrot.slane %v2634, 2
      %v2636 = vadd.f32 %v2634, %v2635
      %v2637 = vrot.slane %v2636, 1
      %v2638 = vadd.f32 %v2636, %v2637
      %v2639 = vadd.f32 %v2629, %v2631
      %v2640 = vrot.slane %v2639, 4
      %v2641 = vadd.f32 %v2639, %v2640
      %v2642 = vrot.slane %v2641, 2
      %v2643 = vadd.f32 %v2641, %v2642
      %v2644 = vrot.slane %v2643, 1
      %v2645 = vadd.f32 %v2643, %v2644
      %v2646 = vsub.f32 %v2602, %v560
      %v2647 = vsub.f32 %v2609, %v564
      %v2648 = vand.u32 2147483647, %v2646
      %v2649 = vand.u32 2147483647, %v2647
      %v2650 = vmul.f32 %v2648, 0.299
      %v2651 = vmul.f32 %v2649, 0.299
      %v2652 = vsub.f32 %v2620, %v576
      %v2653 = vsub.f32 %v2627, %v580
      %v2654 = vand.u32 2147483647, %v2652
      %v2655 = vand.u32 2147483647, %v2653
      %v2656 = vmul.f32 %v2654, 0.587
      %v2657 = vmul.f32 %v2655, 0.587
      %v2658 = vadd.f32 %v2650, %v2656
      %v2659 = vadd.f32 %v2651, %v2657
      %v2660 = vsub.f32 %v2638, %v594
      %v2661 = vsub.f32 %v2645, %v598
      %v2662 = vand.u32 2147483647, %v2660
      %v2663 = vand.u32 2147483647, %v2661
      %v2664 = vmul.f32 %v2662, 0.114
      %v2665 = vmul.f32 %v2663, 0.114
      %v2666 = vadd.f32 %v2658, %v2664
      %v2667 = vadd.f32 %v2659, %v2665
      %v2668 = vadd.f32 %v1784, %v2078
      %v2669 = vadd.f32 %v1785, %v2079
      %v2670 = vadd.f32 %v2668, %v2372
      %v2671 = vadd.f32 %v2669, %v2373
      %v2672 = vadd.f32 %v2670, %v2666
      %v2673 = vadd.f32 %v2671, %v2667
      %v2674 = vadd.f32 %v2672, %v1490
      %v2675 = vadd.f32 %v2673, %v1491
      %v2676 = vadd.f32 %v2674, %v1196
      %v2677 = vadd.f32 %v2675, %v1197
      %v2678 = vadd.f32 %v2676, %v902
      %v2679 = vadd.f32 %v2677, %v903
      %v2680 = vadd.f32 %v2678, %v607
      %v2681 = vadd.f32 %v2679, %v608
      %v2682 = vadd.f32 %v607, %v902
      %v2683 = vadd.f32 %v608, %v903
      %v2684 = vadd.f32 %v2682, %v1196
      %v2685 = vadd.f32 %v2683, %v1197
      %v2686 = vadd.f32 %v2684, %v1490
      %v2687 = vadd.f32 %v2685, %v1491
      %v2688 = vadd.f32 %v2686, %v1784
      %v2689 = vadd.f32 %v2687, %v1785
      %v2690 = vadd.f32 %v2688, %v2078
      %v2691 = vadd.f32 %v2689, %v2079
      %v2692 = vadd.f32 %v2690, %v2372
      %v2693 = vadd.f32 %v2691, %v2373
      %v2694 = vmul.f32 %v2680, 0.11111111
      %v2695 = vmul.f32 %v2681, 0.11111111
      %v2696 = vmul.f32 %v2678, 0.125
      %v2697 = vmul.f32 %v2679, 0.125
      %v2698 = vmul.f32 %v2676, 0.14285715
      %v2699 = vmul.f32 %v2677, 0.14285715
      %v2700 = vmul.f32 %v2674, 0.16666667
      %v2701 = vmul.f32 %v2675, 0.16666667
      %v2702 = vmul.f32 %v2672, 0.2
      %v2703 = vmul.f32 %v2673, 0.2
      %v2704 = vmul.f32 %v2692, 0.125
      %v2705 = vmul.f32 %v2693, 0.125
      %v2706 = vmul.f32 %v2690, 0.14285715
      %v2707 = vmul.f32 %v2691, 0.14285715
      %v2708 = vmul.f32 %v2688, 0.16666667
      %v2709 = vmul.f32 %v2689, 0.16666667
      %v2710 = vmul.f32 %v2686, 0.2
      %v2711 = vmul.f32 %v2687, 0.2
      %v2712 = vsub.f32 %v2710, %v2702
      %v2713 = vsub.f32 %v2711, %v2703
      %v2714 = vand.u32 2147483647, %v2712
      %v2715 = vand.u32 2147483647, %v2713
      %vm2716 = vcmp.lt.f32.partialorder %v2714, 0.01
      %vm2717 = vcmp.lt.f32.partialorder %v2715, 0.01
      %v2718 = vsel %vm2716, 1.0, 0.0
      %v2719 = vsel %vm2717, 1.0, 0.0
      %v2720 = vmin.f32 %v2694, %v2696
      %v2721 = vmin.f32 %v2695, %v2697
      %v2722 = vmin.f32 %v2720, %v2698
      %v2723 = vmin.f32 %v2721, %v2699
      %v2724 = vmin.f32 %v2722, %v2700
      %v2725 = vmin.f32 %v2723, %v2701
      %v2726 = vmin.f32 %v2724, %v2702
      %v2727 = vmin.f32 %v2725, %v2703
      %v2728 = vmin.f32 %v2726, %v2704
      %v2729 = vmin.f32 %v2727, %v2705
      %v2730 = vmin.f32 %v2728, %v2706
      %v2731 = vmin.f32 %v2729, %v2707
      %v2732 = vmin.f32 %v2730, %v2708
      %v2733 = vmin.f32 %v2731, %v2709
      %v2734 = vmin.f32 %v2732, %v2710
      %v2735 = vmin.f32 %v2733, %v2711
      %v2736 = vsub.f32 1.0, %v2718
      %v2737 = vsub.f32 1.0, %v2719
      %v2738 = vmul.f32 %v2734, %v2736
      %v2739 = vmul.f32 %v2735, %v2737
      %v2740 = vmul.f32 %v2694, %v2718
      %v2741 = vmul.f32 %v2695, %v2719
      %v2742 = vadd.f32 %v2738, %v2740
      %v2743 = vadd.f32 %v2739, %v2741
      %vm2744 = vcmask 1040384
      %v2745 = vsel %vm2744, %v2742, 0.0
      %v2746 = vsel %vm2744, %v2743, 0.0
      %v2747 = vadd.f32 %v2745, %v2746
      %2748 = vadd.xlane.f32.xlu0 %v2747
      %v2749 = vpop.xlane.xlu0 %2748
      %v2750 = vrot.slane %v2749, 4
      %v2751 = vadd.f32 %v2749, %v2750
      %v2752 = vrot.slane %v2751, 2
      %v2753 = vadd.f32 %v2751, %v2752
      %v2754 = vrot.slane %v2753, 1
      %v2755 = vadd.f32 %v2753, %v2754
      %s2756 = vtos %v2755
      %s2757 = smul.f32 %s2756, 0.001953125
      %v2758 = vstv %s2757
      %vm2759 = vcmask 0
      %2760 = vst.msk [vmem:[%s260] sm:$0x1] %vm2759, %v2758
      %p2761 = scmp.lt.s32.totalorder %s25, 3
      %s2762 = scalar_select %p2761, %s25, 3
      %p2763 = scmp.lt.s32.totalorder %s26, 1
      %s2764 = scalar_select %p2763, %s26, 1
      %s2765 = smul.addr %s2762, 2
      %s2766 = sadd.s32 %s2764, %s2765
      %s2767 = scalar_lea.vmem %s4, %s2766
      // Predicated region
      $region33: #{lossv9_pallas.1} parent=31 // pred_check
        %p2768 = pneg %p135
      $region34: #{lossv9_pallas.1} parent=31 // pred_check_branch
        %2770 = sbr.rel (%p2768) target = $region36
      $region35: #{lossv9_pallas.1} parent=31 // pred_region
        _
      $region36: #{lossv9_pallas.1} parent=31 // pred_fallthru
        _
    $region32: #{lossv9_pallas.1} parent=5 // pred_fallthru
      _
    %p2771 = scmp.le.s32.totalorder 2, %s16
    // Predicated region
    $region37: #{lossv9_pallas.1} parent=5 // pred_check
      %p2772 = pneg %p2771
    $region38: #{lossv9_pallas.1} parent=5 // pred_check_branch
      %2774 = sbr.rel (%p2772) target = $region40
    $region39: #{lossv9_pallas.1} parent=5 // pred_region
      %s2775 = ssub.s32 %s16, 2
      // Predicated region
      $region41: #{lossv9_pallas.1} parent=39 // pred_check
        %p2776 = pneg %p141
      $region42: #{lossv9_pallas.1} parent=39 // pred_check_branch
        %2778 = sbr.rel (%p2776) target = $region44
      $region43: #{lossv9_pallas.1} parent=39 // pred_region
        %p2779 = scmp.lt.s32.totalorder %s27, 3
        %s2780 = scalar_select %p2779, %s27, 3
        %p2781 = scmp.lt.s32.totalorder %s28, 1
        %s2782 = scalar_select %p2781, %s28, 1
        %s2783 = smul.addr %s2780, 2
        %s2784 = sadd.s32 %s2782, %s2783
        %s2785 = scalar_lea.vmem %s4, %s2784
      $region44: #{lossv9_pallas.1} parent=39 // pred_fallthru
        _
    $region40: #{lossv9_pallas.1} parent=5 // pred_fallthru
      _
  $region6: #{lossv9_pallas.1} parent=0 // loop_footer
    %s20 = sadd.s32 1, %s16
  $region7: #{lossv9_pallas.1} parent=0 // loop_footer_branch
    %15 = sbr.rel target = $region3
  $region8: #{lossv9_pallas.1} parent=0 // loop_exit
    _

</llo_original>
